<compile_context>
chip_gen: v7x
topology: tpu7x:2x2x1
jax: 0.10.0
libtpu: 0.0.40
codegen_flags: <defaults>
</compile_context>

<pallas_src>
import functools

import jax
import jax.numpy as jnp
from jax.experimental import pallas as pl
from jax.experimental.pallas import tpu as pltpu  # noqa: F401  (TPU-specific tuning hooks)


def _lstm2_kernel(xproj_ref, whh1_ref, wih2_ref, whh2_ref, b2_ref,
                  gamma_ref, beta_ref, fcw_ref, fcb_ref,
                  out_ref, *, T, Bp, H, Hp, unroll):
    f32 = jnp.float32
    bf16 = jnp.bfloat16

    # Hoist the layer-2 bias broadcast out of the recurrence (single broadcast,
    # reused every step instead of T broadcast_in_dim emissions).
    b2b = jnp.broadcast_to(b2_ref[...], (Bp, 4 * Hp))

    def apply_gates(gates, c):
        # Gates repacked as (i, f, o, g): one sigmoid over the contiguous 3*Hp
        # slab + one tanh over the last slab (fewer EUP issues on the serial path).
        s = jax.nn.sigmoid(gates[:, :3 * Hp])
        g = jnp.tanh(gates[:, 3 * Hp:])
        i = s[:, :Hp]
        f = s[:, Hp:2 * Hp]
        o = s[:, 2 * Hp:]
        c_new = f * c + i * g
        h_new = o * jnp.tanh(c_new)
        return h_new, c_new

    def step(t, carry):
        h1, c1, h2, c2 = carry
        # Layer-2 recurrent half: depends only on the *previous* step's h2, so
        # this MXU push can overlap layer-1's serial matmul + gate chain.
        g2_hh = jnp.dot(h2.astype(bf16), whh2_ref[...],
                        preferred_element_type=f32) + b2b
        # Layer 1: input projection (+ bias) precomputed; only h1 @ W_hh1 is serial.
        g1 = xproj_ref[t] + jnp.dot(h1.astype(bf16), whh1_ref[...],
                                    preferred_element_type=f32)
        h1, c1 = apply_gates(g1, c1)
        # Layer 2: input half depends on this step's h1.
        g2 = jnp.dot(h1.astype(bf16), wih2_ref[...],
                     preferred_element_type=f32) + g2_hh
        h2, c2 = apply_gates(g2, c2)
        return h1, c1, h2, c2

    zeros = jnp.zeros((Bp, Hp), f32)
    _, _, h2, _ = jax.lax.fori_loop(0, T, step, (zeros, zeros, zeros, zeros),
                                    unroll=unroll)

    # Masked LayerNorm over the real H lanes (padded lanes of h2 are exactly 0),
    # ReLU, then the FC head (runs once; f32; lane-dense (Bp, Cp) store).
    lane = jax.lax.broadcasted_iota(jnp.int32, (1, Hp), 1)
    mask = (lane < H).astype(f32)
    inv_h = 1.0 / H
    mean = jnp.sum(h2, axis=-1, keepdims=True) * inv_h
    centered = (h2 - mean) * mask
    var = jnp.sum(centered * centered, axis=-1, keepdims=True) * inv_h
    y = centered * jax.lax.rsqrt(var + 1e-5) * gamma_ref[...] + beta_ref[...]
    y = jnp.maximum(y, 0.0)                                   # ReLU
    out_ref[...] = (jnp.dot(y, fcw_ref[...], preferred_element_type=f32)
                    + fcb_ref[...])                           # Linear head


def eye_state_double_lstm_150(x, params):
    """x: (B, T, input_size) float32 -> logits (B, num_classes)."""
    B, T, I = x.shape
    H = params["whh1"].shape[1]                 # hidden_size + 32
    C = params["fc_w"].shape[0]                 # num_classes
    Hp = ((H + 127) // 128) * 128               # lane-aligned hidden width
    Cp = ((C + 127) // 128) * 128               # lane-dense output width
    Bp = max(8, ((B + 7) // 8) * 8)             # full-sublane batch

    def perm_gates(w4):
        # (rows, 4, H) in PyTorch gate order (i, f, g, o) -> (i, f, o, g)
        return jnp.concatenate([w4[:, 0:2, :], w4[:, 3:4, :], w4[:, 2:3, :]],
                               axis=1)

    def pad_gate_cols(w_t, rows_real, rows_pad, dtype):
        # w_t: (rows_real, 4H) gate-major -> (rows_pad, 4Hp), gates reordered.
        w4 = perm_gates(w_t.reshape(rows_real, 4, H))
        w4 = jnp.pad(w4, ((0, rows_pad - rows_real), (0, 0), (0, Hp - H)))
        return w4.reshape(rows_pad, 4 * Hp).astype(dtype)

    def pad_gate_bias(b):
        b4 = perm_gates(b.reshape(1, 4, H))
        return jnp.pad(b4, ((0, 0), (0, 0), (0, Hp - H))).reshape(1, 4 * Hp)

    # Layer-1 input weights stay f32 (used once in the hoisted XLA projection);
    # recurrent weights are bf16 (MXU operands, f32 accumulation in-kernel).
    wih1_p = pad_gate_cols(params["wih1"].T, I, I, jnp.float32)      # (I, 4Hp)
    whh1_p = pad_gate_cols(params["whh1"].T, H, Hp, jnp.bfloat16)    # (Hp, 4Hp)
    b1_p = pad_gate_bias(params["bih1"] + params["bhh1"])            # (1, 4Hp)
    wih2_p = pad_gate_cols(params["wih2"].T, H, Hp, jnp.bfloat16)    # (Hp, 4Hp)
    whh2_p = pad_gate_cols(params["whh2"].T, H, Hp, jnp.bfloat16)    # (Hp, 4Hp)
    b2_p = pad_gate_bias(params["bih2"] + params["bhh2"])            # (1, 4Hp)

    gamma_p = jnp.pad(params["ln_g"], (0, Hp - H))[None, :]          # (1, Hp)
    beta_p = jnp.pad(params["ln_b"], (0, Hp - H))[None, :]           # (1, Hp)
    fcw_p = jnp.pad(params["fc_w"].T, ((0, Hp - H), (0, Cp - C)))    # (Hp, Cp)
    fcb_p = jnp.pad(params["fc_b"], (0, Cp - C))[None, :]            # (1, Cp)

    # Pad batch to a full sublane group; padded rows are sliced off below.
    x_p = jnp.pad(x, ((0, Bp - B), (0, 0), (0, 0)))
    # Hoist the layer-1 input projection (+ its bias) off the serial path:
    # one XLA matmul over all timesteps instead of T tiny matmuls in the loop.
    xproj = jnp.einsum("bti,ig->tbg", x_p, wih1_p) + b1_p            # (T, Bp, 4Hp)

    kernel = functools.partial(_lstm2_kernel, T=T, Bp=Bp, H=H, Hp=Hp,
                               unroll=min(T, 8))
    out_p = pl.pallas_call(
        kernel,
        out_shape=jax.ShapeDtypeStruct((Bp, Cp), jnp.float32),
    )(xproj, whh1_p, wih2_p, whh2_p, b2_p, gamma_p, beta_p, fcw_p, fcb_p)
    return out_p[:B, :C]


def _reference_forward(x, params):
    """Plain-JAX f32 reference matching PyTorch semantics, for a sanity check."""
    B, T, I = x.shape
    H = params["whh1"].shape[1]

    def run_layer(inp, wih, whh, bih, bhh):
        h = jnp.zeros((B, H), jnp.float32)
        c = jnp.zeros((B, H), jnp.float32)
        outs = []
        for t in range(T):
            gates = inp[:, t, :] @ wih.T + bih + h @ whh.T + bhh
            i = jax.nn.sigmoid(gates[:, 0 * H:1 * H])
            f = jax.nn.sigmoid(gates[:, 1 * H:2 * H])
            g = jnp.tanh(gates[:, 2 * H:3 * H])
            o = jax.nn.sigmoid(gates[:, 3 * H:4 * H])
            c = f * c + i * g
            h = o * jnp.tanh(c)
            outs.append(h)
        return jnp.stack(outs, axis=1)

    out1 = run_layer(x, params["wih1"], params["whh1"], params["bih1"], params["bhh1"])
    out2 = run_layer(out1, params["wih2"], params["whh2"], params["bih2"], params["bhh2"])
    h_last = out2[:, -1, :]
    mean = jnp.mean(h_last, axis=-1, keepdims=True)
    var = jnp.mean((h_last - mean) ** 2, axis=-1, keepdims=True)
    y = (h_last - mean) * jax.lax.rsqrt(var + 1e-5)
    y = y * params["ln_g"] + params["ln_b"]
    y = jnp.maximum(y, 0.0)
    return y @ params["fc_w"].T + params["fc_b"]


def init_params(key, input_size, hidden_size, num_classes):
    H = hidden_size + 32
    k = 1.0 / jnp.sqrt(jnp.float32(H))
    keys = jax.random.split(key, 12)
    u = lambda kk, shape: jax.random.uniform(kk, shape, jnp.float32, -k, k)
    return {
        # layer 1: input_size -> H
        "wih1": u(keys[0], (4 * H, input_size)),
        "whh1": u(keys[1], (4 * H, H)),
        "bih1": u(keys[2], (4 * H,)),
        "bhh1": u(keys[3], (4 * H,)),
        # layer 2: H -> H
        "wih2": u(keys[4], (4 * H, H)),
        "whh2": u(keys[5], (4 * H, H)),
        "bih2": u(keys[6], (4 * H,)),
        "bhh2": u(keys[7], (4 * H,)),
        # layer norm
        "ln_g": jnp.ones((H,), jnp.float32),
        "ln_b": jnp.zeros((H,), jnp.float32),
        # fc head
        "fc_w": u(keys[8], (num_classes, H)),
        "fc_b": u(keys[9], (num_classes,)),
    }


if __name__ == "__main__":
    B, T, input_size = 2, 8, 4
    hidden_size, num_classes = 32, 2      # H = hidden_size + 32 = 64

    key = jax.random.PRNGKey(0)
    kx, kp = jax.random.split(key)
    x = jax.random.normal(kx, (B, T, input_size), jnp.float32)
    params = init_params(kp, input_size, hidden_size, num_classes)

    fwd = jax.jit(eye_state_double_lstm_150)
    out = jax.block_until_ready(fwd(x, params))
    ref = _reference_forward(x, params)
    assert out.shape == (B, num_classes)
    # bf16 recurrent matmuls (f32 accumulation) -> loosened tolerance vs f32 ref.
    assert jnp.allclose(out, ref, atol=5e-2, rtol=5e-2), (out, ref)
    print("KERNEL_OK")
</pallas_src>

<mosaic_0001>
module attributes {stable_mosaic.version = 11 : i64} {
  func.func @_lstm2_kernel(%arg0: memref<8x8x512xf32, #tpu.memory_space<vmem>>, %arg1: memref<128x512xbf16, #tpu.memory_space<vmem>>, %arg2: memref<128x512xbf16, #tpu.memory_space<vmem>>, %arg3: memref<128x512xbf16, #tpu.memory_space<vmem>>, %arg4: memref<1x512xf32, #tpu.memory_space<vmem>>, %arg5: memref<1x128xf32, #tpu.memory_space<vmem>>, %arg6: memref<1x128xf32, #tpu.memory_space<vmem>>, %arg7: memref<128x128xf32, #tpu.memory_space<vmem>>, %arg8: memref<1x128xf32, #tpu.memory_space<vmem>>, %arg9: memref<8x128xf32, #tpu.memory_space<vmem>>) attributes {dimension_semantics = [], scalar_prefetch = 0 : i64, scratch_operands = 0 : i64, tpu.core_type = #tpu.core_type<tc>} {
    %c0 = arith.constant 0 : index
    %c0_0 = arith.constant 0 : index
    %0 = vector.load %arg4[%c0, %c0_0] : memref<1x512xf32, #tpu.memory_space<vmem>>, vector<1x512xf32>
    %1 = vector.shape_cast %0 : vector<1x512xf32> to vector<1x512xf32>
    %2 = vector.broadcast %1 : vector<1x512xf32> to vector<8x512xf32>
    %cst = arith.constant 0.000000e+00 : f32
    %3 = vector.broadcast %cst : f32 to vector<8x128xf32>
    %c0_i32 = arith.constant 0 : i32
    %4 = arith.truncf %3 : vector<8x128xf32> to vector<8x128xbf16>
    %c0_1 = arith.constant 0 : index
    %c0_2 = arith.constant 0 : index
    %5 = vector.load %arg3[%c0_1, %c0_2] : memref<128x512xbf16, #tpu.memory_space<vmem>>, vector<128x512xbf16>
    %cst_3 = arith.constant dense<0.000000e+00> : vector<8x512xf32>
    %6 = tpu.matmul %4, %5, %cst_3 {dimension_numbers = #tpu.dot_dimension_numbers<[1], [0], [0], [1], [0, 0, 1, 1], [], []>} : vector<8x128xbf16>, vector<128x512xbf16>, vector<8x512xf32> -> vector<8x512xf32>
    %7 = arith.addf %6, %2 : vector<8x512xf32>
    %8 = arith.index_cast %c0_i32 : i32 to index
    %c0_4 = arith.constant 0 : index
    %c0_5 = arith.constant 0 : index
    %9 = vector.load %arg0[%8, %c0_4, %c0_5] : memref<8x8x512xf32, #tpu.memory_space<vmem>>, vector<1x8x512xf32>
    %10 = vector.shape_cast %9 : vector<1x8x512xf32> to vector<8x512xf32>
    %11 = arith.truncf %3 : vector<8x128xf32> to vector<8x128xbf16>
    %c0_6 = arith.constant 0 : index
    %c0_7 = arith.constant 0 : index
    %12 = vector.load %arg1[%c0_6, %c0_7] : memref<128x512xbf16, #tpu.memory_space<vmem>>, vector<128x512xbf16>
    %cst_8 = arith.constant dense<0.000000e+00> : vector<8x512xf32>
    %13 = tpu.matmul %11, %12, %cst_8 {dimension_numbers = #tpu.dot_dimension_numbers<[1], [0], [0], [1], [0, 0, 1, 1], [], []>} : vector<8x128xbf16>, vector<128x512xbf16>, vector<8x512xf32> -> vector<8x512xf32>
    %14 = arith.addf %10, %13 : vector<8x512xf32>
    %15 = vector.extract_strided_slice %14 {offsets = [0, 0], sizes = [8, 384], strides = [1, 1]} : vector<8x512xf32> to vector<8x384xf32>
    %16 = arith.negf %15 : vector<8x384xf32>
    %17 = math.exp %16 : vector<8x384xf32>
    %cst_9 = arith.constant 1.000000e+00 : f32
    %18 = vector.broadcast %cst_9 : f32 to vector<8x384xf32>
    %19 = arith.addf %18, %17 : vector<8x384xf32>
    %20 = arith.divf %18, %19 : vector<8x384xf32>
    %21 = vector.extract_strided_slice %14 {offsets = [0, 384], sizes = [8, 128], strides = [1, 1]} : vector<8x512xf32> to vector<8x128xf32>
    %22 = math.tanh %21 : vector<8x128xf32>
    %23 = vector.extract_strided_slice %20 {offsets = [0, 0], sizes = [8, 128], strides = [1, 1]} : vector<8x384xf32> to vector<8x128xf32>
    %24 = vector.extract_strided_slice %20 {offsets = [0, 128], sizes = [8, 128], strides = [1, 1]} : vector<8x384xf32> to vector<8x128xf32>
    %25 = vector.extract_strided_slice %20 {offsets = [0, 256], sizes = [8, 128], strides = [1, 1]} : vector<8x384xf32> to vector<8x128xf32>
    %26 = arith.mulf %24, %3 : vector<8x128xf32>
    %27 = arith.mulf %23, %22 : vector<8x128xf32>
    %28 = arith.addf %26, %27 : vector<8x128xf32>
    %29 = math.tanh %28 : vector<8x128xf32>
    %30 = arith.mulf %25, %29 : vector<8x128xf32>
    %31 = arith.truncf %30 : vector<8x128xf32> to vector<8x128xbf16>
    %c0_10 = arith.constant 0 : index
    %c0_11 = arith.constant 0 : index
    %32 = vector.load %arg2[%c0_10, %c0_11] : memref<128x512xbf16, #tpu.memory_space<vmem>>, vector<128x512xbf16>
    %cst_12 = arith.constant dense<0.000000e+00> : vector<8x512xf32>
    %33 = tpu.matmul %31, %32, %cst_12 {dimension_numbers = #tpu.dot_dimension_numbers<[1], [0], [0], [1], [0, 0, 1, 1], [], []>} : vector<8x128xbf16>, vector<128x512xbf16>, vector<8x512xf32> -> vector<8x512xf32>
    %34 = arith.addf %33, %7 : vector<8x512xf32>
    %35 = vector.extract_strided_slice %34 {offsets = [0, 0], sizes = [8, 384], strides = [1, 1]} : vector<8x512xf32> to vector<8x384xf32>
    %36 = arith.negf %35 : vector<8x384xf32>
    %37 = math.exp %36 : vector<8x384xf32>
    %cst_13 = arith.constant 1.000000e+00 : f32
    %38 = vector.broadcast %cst_13 : f32 to vector<8x384xf32>
    %39 = arith.addf %38, %37 : vector<8x384xf32>
    %40 = arith.divf %38, %39 : vector<8x384xf32>
    %41 = vector.extract_strided_slice %34 {offsets = [0, 384], sizes = [8, 128], strides = [1, 1]} : vector<8x512xf32> to vector<8x128xf32>
    %42 = math.tanh %41 : vector<8x128xf32>
    %43 = vector.extract_strided_slice %40 {offsets = [0, 0], sizes = [8, 128], strides = [1, 1]} : vector<8x384xf32> to vector<8x128xf32>
    %44 = vector.extract_strided_slice %40 {offsets = [0, 128], sizes = [8, 128], strides = [1, 1]} : vector<8x384xf32> to vector<8x128xf32>
    %45 = vector.extract_strided_slice %40 {offsets = [0, 256], sizes = [8, 128], strides = [1, 1]} : vector<8x384xf32> to vector<8x128xf32>
    %46 = arith.mulf %44, %3 : vector<8x128xf32>
    %47 = arith.mulf %43, %42 : vector<8x128xf32>
    %48 = arith.addf %46, %47 : vector<8x128xf32>
    %49 = math.tanh %48 : vector<8x128xf32>
    %50 = arith.mulf %45, %49 : vector<8x128xf32>
    %c1_i32 = arith.constant 1 : i32
    %51 = arith.truncf %50 : vector<8x128xf32> to vector<8x128xbf16>
    %c0_14 = arith.constant 0 : index
    %c0_15 = arith.constant 0 : index
    %52 = vector.load %arg3[%c0_14, %c0_15] : memref<128x512xbf16, #tpu.memory_space<vmem>>, vector<128x512xbf16>
    %cst_16 = arith.constant dense<0.000000e+00> : vector<8x512xf32>
    %53 = tpu.matmul %51, %52, %cst_16 {dimension_numbers = #tpu.dot_dimension_numbers<[1], [0], [0], [1], [0, 0, 1, 1], [], []>} : vector<8x128xbf16>, vector<128x512xbf16>, vector<8x512xf32> -> vector<8x512xf32>
    %54 = arith.addf %53, %2 : vector<8x512xf32>
    %55 = arith.index_cast %c1_i32 : i32 to index
    %c0_17 = arith.constant 0 : index
    %c0_18 = arith.constant 0 : index
    %56 = vector.load %arg0[%55, %c0_17, %c0_18] : memref<8x8x512xf32, #tpu.memory_space<vmem>>, vector<1x8x512xf32>
    %57 = vector.shape_cast %56 : vector<1x8x512xf32> to vector<8x512xf32>
    %58 = arith.truncf %30 : vector<8x128xf32> to vector<8x128xbf16>
    %c0_19 = arith.constant 0 : index
    %c0_20 = arith.constant 0 : index
    %59 = vector.load %arg1[%c0_19, %c0_20] : memref<128x512xbf16, #tpu.memory_space<vmem>>, vector<128x512xbf16>
    %cst_21 = arith.constant dense<0.000000e+00> : vector<8x512xf32>
    %60 = tpu.matmul %58, %59, %cst_21 {dimension_numbers = #tpu.dot_dimension_numbers<[1], [0], [0], [1], [0, 0, 1, 1], [], []>} : vector<8x128xbf16>, vector<128x512xbf16>, vector<8x512xf32> -> vector<8x512xf32>
    %61 = arith.addf %57, %60 : vector<8x512xf32>
    %62 = vector.extract_strided_slice %61 {offsets = [0, 0], sizes = [8, 384], strides = [1, 1]} : vector<8x512xf32> to vector<8x384xf32>
    %63 = arith.negf %62 : vector<8x384xf32>
    %64 = math.exp %63 : vector<8x384xf32>
    %cst_22 = arith.constant 1.000000e+00 : f32
    %65 = vector.broadcast %cst_22 : f32 to vector<8x384xf32>
    %66 = arith.addf %65, %64 : vector<8x384xf32>
    %67 = arith.divf %65, %66 : vector<8x384xf32>
    %68 = vector.extract_strided_slice %61 {offsets = [0, 384], sizes = [8, 128], strides = [1, 1]} : vector<8x512xf32> to vector<8x128xf32>
    %69 = math.tanh %68 : vector<8x128xf32>
    %70 = vector.extract_strided_slice %67 {offsets = [0, 0], sizes = [8, 128], strides = [1, 1]} : vector<8x384xf32> to vector<8x128xf32>
    %71 = vector.extract_strided_slice %67 {offsets = [0, 128], sizes = [8, 128], strides = [1, 1]} : vector<8x384xf32> to vector<8x128xf32>
    %72 = vector.extract_strided_slice %67 {offsets = [0, 256], sizes = [8, 128], strides = [1, 1]} : vector<8x384xf32> to vector<8x128xf32>
    %73 = arith.mulf %71, %28 : vector<8x128xf32>
    %74 = arith.mulf %70, %69 : vector<8x128xf32>
    %75 = arith.addf %73, %74 : vector<8x128xf32>
    %76 = math.tanh %75 : vector<8x128xf32>
    %77 = arith.mulf %72, %76 : vector<8x128xf32>
    %78 = arith.truncf %77 : vector<8x128xf32> to vector<8x128xbf16>
    %c0_23 = arith.constant 0 : index
    %c0_24 = arith.constant 0 : index
    %79 = vector.load %arg2[%c0_23, %c0_24] : memref<128x512xbf16, #tpu.memory_space<vmem>>, vector<128x512xbf16>
    %cst_25 = arith.constant dense<0.000000e+00> : vector<8x512xf32>
    %80 = tpu.matmul %78, %79, %cst_25 {dimension_numbers = #tpu.dot_dimension_numbers<[1], [0], [0], [1], [0, 0, 1, 1], [], []>} : vector<8x128xbf16>, vector<128x512xbf16>, vector<8x512xf32> -> vector<8x512xf32>
    %81 = arith.addf %80, %54 : vector<8x512xf32>
    %82 = vector.extract_strided_slice %81 {offsets = [0, 0], sizes = [8, 384], strides = [1, 1]} : vector<8x512xf32> to vector<8x384xf32>
    %83 = arith.negf %82 : vector<8x384xf32>
    %84 = math.exp %83 : vector<8x384xf32>
    %cst_26 = arith.constant 1.000000e+00 : f32
    %85 = vector.broadcast %cst_26 : f32 to vector<8x384xf32>
    %86 = arith.addf %85, %84 : vector<8x384xf32>
    %87 = arith.divf %85, %86 : vector<8x384xf32>
    %88 = vector.extract_strided_slice %81 {offsets = [0, 384], sizes = [8, 128], strides = [1, 1]} : vector<8x512xf32> to vector<8x128xf32>
    %89 = math.tanh %88 : vector<8x128xf32>
    %90 = vector.extract_strided_slice %87 {offsets = [0, 0], sizes = [8, 128], strides = [1, 1]} : vector<8x384xf32> to vector<8x128xf32>
    %91 = vector.extract_strided_slice %87 {offsets = [0, 128], sizes = [8, 128], strides = [1, 1]} : vector<8x384xf32> to vector<8x128xf32>
    %92 = vector.extract_strided_slice %87 {offsets = [0, 256], sizes = [8, 128], strides = [1, 1]} : vector<8x384xf32> to vector<8x128xf32>
    %93 = arith.mulf %91, %48 : vector<8x128xf32>
    %94 = arith.mulf %90, %89 : vector<8x128xf32>
    %95 = arith.addf %93, %94 : vector<8x128xf32>
    %96 = math.tanh %95 : vector<8x128xf32>
    %97 = arith.mulf %92, %96 : vector<8x128xf32>
    %c2_i32 = arith.constant 2 : i32
    %98 = arith.truncf %97 : vector<8x128xf32> to vector<8x128xbf16>
    %c0_27 = arith.constant 0 : index
    %c0_28 = arith.constant 0 : index
    %99 = vector.load %arg3[%c0_27, %c0_28] : memref<128x512xbf16, #tpu.memory_space<vmem>>, vector<128x512xbf16>
    %cst_29 = arith.constant dense<0.000000e+00> : vector<8x512xf32>
    %100 = tpu.matmul %98, %99, %cst_29 {dimension_numbers = #tpu.dot_dimension_numbers<[1], [0], [0], [1], [0, 0, 1, 1], [], []>} : vector<8x128xbf16>, vector<128x512xbf16>, vector<8x512xf32> -> vector<8x512xf32>
    %101 = arith.addf %100, %2 : vector<8x512xf32>
    %102 = arith.index_cast %c2_i32 : i32 to index
    %c0_30 = arith.constant 0 : index
    %c0_31 = arith.constant 0 : index
    %103 = vector.load %arg0[%102, %c0_30, %c0_31] : memref<8x8x512xf32, #tpu.memory_space<vmem>>, vector<1x8x512xf32>
    %104 = vector.shape_cast %103 : vector<1x8x512xf32> to vector<8x512xf32>
    %105 = arith.truncf %77 : vector<8x128xf32> to vector<8x128xbf16>
    %c0_32 = arith.constant 0 : index
    %c0_33 = arith.constant 0 : index
    %106 = vector.load %arg1[%c0_32, %c0_33] : memref<128x512xbf16, #tpu.memory_space<vmem>>, vector<128x512xbf16>
    %cst_34 = arith.constant dense<0.000000e+00> : vector<8x512xf32>
    %107 = tpu.matmul %105, %106, %cst_34 {dimension_numbers = #tpu.dot_dimension_numbers<[1], [0], [0], [1], [0, 0, 1, 1], [], []>} : vector<8x128xbf16>, vector<128x512xbf16>, vector<8x512xf32> -> vector<8x512xf32>
    %108 = arith.addf %104, %107 : vector<8x512xf32>
    %109 = vector.extract_strided_slice %108 {offsets = [0, 0], sizes = [8, 384], strides = [1, 1]} : vector<8x512xf32> to vector<8x384xf32>
    %110 = arith.negf %109 : vector<8x384xf32>
    %111 = math.exp %110 : vector<8x384xf32>
    %cst_35 = arith.constant 1.000000e+00 : f32
    %112 = vector.broadcast %cst_35 : f32 to vector<8x384xf32>
    %113 = arith.addf %112, %111 : vector<8x384xf32>
    %114 = arith.divf %112, %113 : vector<8x384xf32>
    %115 = vector.extract_strided_slice %108 {offsets = [0, 384], sizes = [8, 128], strides = [1, 1]} : vector<8x512xf32> to vector<8x128xf32>
    %116 = math.tanh %115 : vector<8x128xf32>
    %117 = vector.extract_strided_slice %114 {offsets = [0, 0], sizes = [8, 128], strides = [1, 1]} : vector<8x384xf32> to vector<8x128xf32>
    %118 = vector.extract_strided_slice %114 {offsets = [0, 128], sizes = [8, 128], strides = [1, 1]} : vector<8x384xf32> to vector<8x128xf32>
    %119 = vector.extract_strided_slice %114 {offsets = [0, 256], sizes = [8, 128], strides = [1, 1]} : vector<8x384xf32> to vector<8x128xf32>
    %120 = arith.mulf %118, %75 : vector<8x128xf32>
    %121 = arith.mulf %117, %116 : vector<8x128xf32>
    %122 = arith.addf %120, %121 : vector<8x128xf32>
    %123 = math.tanh %122 : vector<8x128xf32>
    %124 = arith.mulf %119, %123 : vector<8x128xf32>
    %125 = arith.truncf %124 : vector<8x128xf32> to vector<8x128xbf16>
    %c0_36 = arith.constant 0 : index
    %c0_37 = arith.constant 0 : index
    %126 = vector.load %arg2[%c0_36, %c0_37] : memref<128x512xbf16, #tpu.memory_space<vmem>>, vector<128x512xbf16>
    %cst_38 = arith.constant dense<0.000000e+00> : vector<8x512xf32>
    %127 = tpu.matmul %125, %126, %cst_38 {dimension_numbers = #tpu.dot_dimension_numbers<[1], [0], [0], [1], [0, 0, 1, 1], [], []>} : vector<8x128xbf16>, vector<128x512xbf16>, vector<8x512xf32> -> vector<8x512xf32>
    %128 = arith.addf %127, %101 : vector<8x512xf32>
    %129 = vector.extract_strided_slice %128 {offsets = [0, 0], sizes = [8, 384], strides = [1, 1]} : vector<8x512xf32> to vector<8x384xf32>
    %130 = arith.negf %129 : vector<8x384xf32>
    %131 = math.exp %130 : vector<8x384xf32>
    %cst_39 = arith.constant 1.000000e+00 : f32
    %132 = vector.broadcast %cst_39 : f32 to vector<8x384xf32>
    %133 = arith.addf %132, %131 : vector<8x384xf32>
    %134 = arith.divf %132, %133 : vector<8x384xf32>
    %135 = vector.extract_strided_slice %128 {offsets = [0, 384], sizes = [8, 128], strides = [1, 1]} : vector<8x512xf32> to vector<8x128xf32>
    %136 = math.tanh %135 : vector<8x128xf32>
    %137 = vector.extract_strided_slice %134 {offsets = [0, 0], sizes = [8, 128], strides = [1, 1]} : vector<8x384xf32> to vector<8x128xf32>
    %138 = vector.extract_strided_slice %134 {offsets = [0, 128], sizes = [8, 128], strides = [1, 1]} : vector<8x384xf32> to vector<8x128xf32>
    %139 = vector.extract_strided_slice %134 {offsets = [0, 256], sizes = [8, 128], strides = [1, 1]} : vector<8x384xf32> to vector<8x128xf32>
    %140 = arith.mulf %138, %95 : vector<8x128xf32>
    %141 = arith.mulf %137, %136 : vector<8x128xf32>
    %142 = arith.addf %140, %141 : vector<8x128xf32>
    %143 = math.tanh %142 : vector<8x128xf32>
    %144 = arith.mulf %139, %143 : vector<8x128xf32>
    %c3_i32 = arith.constant 3 : i32
    %145 = arith.truncf %144 : vector<8x128xf32> to vector<8x128xbf16>
    %c0_40 = arith.constant 0 : index
    %c0_41 = arith.constant 0 : index
    %146 = vector.load %arg3[%c0_40, %c0_41] : memref<128x512xbf16, #tpu.memory_space<vmem>>, vector<128x512xbf16>
    %cst_42 = arith.constant dense<0.000000e+00> : vector<8x512xf32>
    %147 = tpu.matmul %145, %146, %cst_42 {dimension_numbers = #tpu.dot_dimension_numbers<[1], [0], [0], [1], [0, 0, 1, 1], [], []>} : vector<8x128xbf16>, vector<128x512xbf16>, vector<8x512xf32> -> vector<8x512xf32>
    %148 = arith.addf %147, %2 : vector<8x512xf32>
    %149 = arith.index_cast %c3_i32 : i32 to index
    %c0_43 = arith.constant 0 : index
    %c0_44 = arith.constant 0 : index
    %150 = vector.load %arg0[%149, %c0_43, %c0_44] : memref<8x8x512xf32, #tpu.memory_space<vmem>>, vector<1x8x512xf32>
    %151 = vector.shape_cast %150 : vector<1x8x512xf32> to vector<8x512xf32>
    %152 = arith.truncf %124 : vector<8x128xf32> to vector<8x128xbf16>
    %c0_45 = arith.constant 0 : index
    %c0_46 = arith.constant 0 : index
    %153 = vector.load %arg1[%c0_45, %c0_46] : memref<128x512xbf16, #tpu.memory_space<vmem>>, vector<128x512xbf16>
    %cst_47 = arith.constant dense<0.000000e+00> : vector<8x512xf32>
    %154 = tpu.matmul %152, %153, %cst_47 {dimension_numbers = #tpu.dot_dimension_numbers<[1], [0], [0], [1], [0, 0, 1, 1], [], []>} : vector<8x128xbf16>, vector<128x512xbf16>, vector<8x512xf32> -> vector<8x512xf32>
    %155 = arith.addf %151, %154 : vector<8x512xf32>
    %156 = vector.extract_strided_slice %155 {offsets = [0, 0], sizes = [8, 384], strides = [1, 1]} : vector<8x512xf32> to vector<8x384xf32>
    %157 = arith.negf %156 : vector<8x384xf32>
    %158 = math.exp %157 : vector<8x384xf32>
    %cst_48 = arith.constant 1.000000e+00 : f32
    %159 = vector.broadcast %cst_48 : f32 to vector<8x384xf32>
    %160 = arith.addf %159, %158 : vector<8x384xf32>
    %161 = arith.divf %159, %160 : vector<8x384xf32>
    %162 = vector.extract_strided_slice %155 {offsets = [0, 384], sizes = [8, 128], strides = [1, 1]} : vector<8x512xf32> to vector<8x128xf32>
    %163 = math.tanh %162 : vector<8x128xf32>
    %164 = vector.extract_strided_slice %161 {offsets = [0, 0], sizes = [8, 128], strides = [1, 1]} : vector<8x384xf32> to vector<8x128xf32>
    %165 = vector.extract_strided_slice %161 {offsets = [0, 128], sizes = [8, 128], strides = [1, 1]} : vector<8x384xf32> to vector<8x128xf32>
    %166 = vector.extract_strided_slice %161 {offsets = [0, 256], sizes = [8, 128], strides = [1, 1]} : vector<8x384xf32> to vector<8x128xf32>
    %167 = arith.mulf %165, %122 : vector<8x128xf32>
    %168 = arith.mulf %164, %163 : vector<8x128xf32>
    %169 = arith.addf %167, %168 : vector<8x128xf32>
    %170 = math.tanh %169 : vector<8x128xf32>
    %171 = arith.mulf %166, %170 : vector<8x128xf32>
    %172 = arith.truncf %171 : vector<8x128xf32> to vector<8x128xbf16>
    %c0_49 = arith.constant 0 : index
    %c0_50 = arith.constant 0 : index
    %173 = vector.load %arg2[%c0_49, %c0_50] : memref<128x512xbf16, #tpu.memory_space<vmem>>, vector<128x512xbf16>
    %cst_51 = arith.constant dense<0.000000e+00> : vector<8x512xf32>
    %174 = tpu.matmul %172, %173, %cst_51 {dimension_numbers = #tpu.dot_dimension_numbers<[1], [0], [0], [1], [0, 0, 1, 1], [], []>} : vector<8x128xbf16>, vector<128x512xbf16>, vector<8x512xf32> -> vector<8x512xf32>
    %175 = arith.addf %174, %148 : vector<8x512xf32>
    %176 = vector.extract_strided_slice %175 {offsets = [0, 0], sizes = [8, 384], strides = [1, 1]} : vector<8x512xf32> to vector<8x384xf32>
    %177 = arith.negf %176 : vector<8x384xf32>
    %178 = math.exp %177 : vector<8x384xf32>
    %cst_52 = arith.constant 1.000000e+00 : f32
    %179 = vector.broadcast %cst_52 : f32 to vector<8x384xf32>
    %180 = arith.addf %179, %178 : vector<8x384xf32>
    %181 = arith.divf %179, %180 : vector<8x384xf32>
    %182 = vector.extract_strided_slice %175 {offsets = [0, 384], sizes = [8, 128], strides = [1, 1]} : vector<8x512xf32> to vector<8x128xf32>
    %183 = math.tanh %182 : vector<8x128xf32>
    %184 = vector.extract_strided_slice %181 {offsets = [0, 0], sizes = [8, 128], strides = [1, 1]} : vector<8x384xf32> to vector<8x128xf32>
    %185 = vector.extract_strided_slice %181 {offsets = [0, 128], sizes = [8, 128], strides = [1, 1]} : vector<8x384xf32> to vector<8x128xf32>
    %186 = vector.extract_strided_slice %181 {offsets = [0, 256], sizes = [8, 128], strides = [1, 1]} : vector<8x384xf32> to vector<8x128xf32>
    %187 = arith.mulf %185, %142 : vector<8x128xf32>
    %188 = arith.mulf %184, %183 : vector<8x128xf32>
    %189 = arith.addf %187, %188 : vector<8x128xf32>
    %190 = math.tanh %189 : vector<8x128xf32>
    %191 = arith.mulf %186, %190 : vector<8x128xf32>
    %c4_i32 = arith.constant 4 : i32
    %192 = arith.truncf %191 : vector<8x128xf32> to vector<8x128xbf16>
    %c0_53 = arith.constant 0 : index
    %c0_54 = arith.constant 0 : index
    %193 = vector.load %arg3[%c0_53, %c0_54] : memref<128x512xbf16, #tpu.memory_space<vmem>>, vector<128x512xbf16>
    %cst_55 = arith.constant dense<0.000000e+00> : vector<8x512xf32>
    %194 = tpu.matmul %192, %193, %cst_55 {dimension_numbers = #tpu.dot_dimension_numbers<[1], [0], [0], [1], [0, 0, 1, 1], [], []>} : vector<8x128xbf16>, vector<128x512xbf16>, vector<8x512xf32> -> vector<8x512xf32>
    %195 = arith.addf %194, %2 : vector<8x512xf32>
    %196 = arith.index_cast %c4_i32 : i32 to index
    %c0_56 = arith.constant 0 : index
    %c0_57 = arith.constant 0 : index
    %197 = vector.load %arg0[%196, %c0_56, %c0_57] : memref<8x8x512xf32, #tpu.memory_space<vmem>>, vector<1x8x512xf32>
    %198 = vector.shape_cast %197 : vector<1x8x512xf32> to vector<8x512xf32>
    %199 = arith.truncf %171 : vector<8x128xf32> to vector<8x128xbf16>
    %c0_58 = arith.constant 0 : index
    %c0_59 = arith.constant 0 : index
    %200 = vector.load %arg1[%c0_58, %c0_59] : memref<128x512xbf16, #tpu.memory_space<vmem>>, vector<128x512xbf16>
    %cst_60 = arith.constant dense<0.000000e+00> : vector<8x512xf32>
    %201 = tpu.matmul %199, %200, %cst_60 {dimension_numbers = #tpu.dot_dimension_numbers<[1], [0], [0], [1], [0, 0, 1, 1], [], []>} : vector<8x128xbf16>, vector<128x512xbf16>, vector<8x512xf32> -> vector<8x512xf32>
    %202 = arith.addf %198, %201 : vector<8x512xf32>
    %203 = vector.extract_strided_slice %202 {offsets = [0, 0], sizes = [8, 384], strides = [1, 1]} : vector<8x512xf32> to vector<8x384xf32>
    %204 = arith.negf %203 : vector<8x384xf32>
    %205 = math.exp %204 : vector<8x384xf32>
    %cst_61 = arith.constant 1.000000e+00 : f32
    %206 = vector.broadcast %cst_61 : f32 to vector<8x384xf32>
    %207 = arith.addf %206, %205 : vector<8x384xf32>
    %208 = arith.divf %206, %207 : vector<8x384xf32>
    %209 = vector.extract_strided_slice %202 {offsets = [0, 384], sizes = [8, 128], strides = [1, 1]} : vector<8x512xf32> to vector<8x128xf32>
    %210 = math.tanh %209 : vector<8x128xf32>
    %211 = vector.extract_strided_slice %208 {offsets = [0, 0], sizes = [8, 128], strides = [1, 1]} : vector<8x384xf32> to vector<8x128xf32>
    %212 = vector.extract_strided_slice %208 {offsets = [0, 128], sizes = [8, 128], strides = [1, 1]} : vector<8x384xf32> to vector<8x128xf32>
    %213 = vector.extract_strided_slice %208 {offsets = [0, 256], sizes = [8, 128], strides = [1, 1]} : vector<8x384xf32> to vector<8x128xf32>
    %214 = arith.mulf %212, %169 : vector<8x128xf32>
    %215 = arith.mulf %211, %210 : vector<8x128xf32>
    %216 = arith.addf %214, %215 : vector<8x128xf32>
    %217 = math.tanh %216 : vector<8x128xf32>
    %218 = arith.mulf %213, %217 : vector<8x128xf32>
    %219 = arith.truncf %218 : vector<8x128xf32> to vector<8x128xbf16>
    %c0_62 = arith.constant 0 : index
    %c0_63 = arith.constant 0 : index
    %220 = vector.load %arg2[%c0_62, %c0_63] : memref<128x512xbf16, #tpu.memory_space<vmem>>, vector<128x512xbf16>
    %cst_64 = arith.constant dense<0.000000e+00> : vector<8x512xf32>
    %221 = tpu.matmul %219, %220, %cst_64 {dimension_numbers = #tpu.dot_dimension_numbers<[1], [0], [0], [1], [0, 0, 1, 1], [], []>} : vector<8x128xbf16>, vector<128x512xbf16>, vector<8x512xf32> -> vector<8x512xf32>
    %222 = arith.addf %221, %195 : vector<8x512xf32>
    %223 = vector.extract_strided_slice %222 {offsets = [0, 0], sizes = [8, 384], strides = [1, 1]} : vector<8x512xf32> to vector<8x384xf32>
    %224 = arith.negf %223 : vector<8x384xf32>
    %225 = math.exp %224 : vector<8x384xf32>
    %cst_65 = arith.constant 1.000000e+00 : f32
    %226 = vector.broadcast %cst_65 : f32 to vector<8x384xf32>
    %227 = arith.addf %226, %225 : vector<8x384xf32>
    %228 = arith.divf %226, %227 : vector<8x384xf32>
    %229 = vector.extract_strided_slice %222 {offsets = [0, 384], sizes = [8, 128], strides = [1, 1]} : vector<8x512xf32> to vector<8x128xf32>
    %230 = math.tanh %229 : vector<8x128xf32>
    %231 = vector.extract_strided_slice %228 {offsets = [0, 0], sizes = [8, 128], strides = [1, 1]} : vector<8x384xf32> to vector<8x128xf32>
    %232 = vector.extract_strided_slice %228 {offsets = [0, 128], sizes = [8, 128], strides = [1, 1]} : vector<8x384xf32> to vector<8x128xf32>
    %233 = vector.extract_strided_slice %228 {offsets = [0, 256], sizes = [8, 128], strides = [1, 1]} : vector<8x384xf32> to vector<8x128xf32>
    %234 = arith.mulf %232, %189 : vector<8x128xf32>
    %235 = arith.mulf %231, %230 : vector<8x128xf32>
    %236 = arith.addf %234, %235 : vector<8x128xf32>
    %237 = math.tanh %236 : vector<8x128xf32>
    %238 = arith.mulf %233, %237 : vector<8x128xf32>
    %c5_i32 = arith.constant 5 : i32
    %239 = arith.truncf %238 : vector<8x128xf32> to vector<8x128xbf16>
    %c0_66 = arith.constant 0 : index
    %c0_67 = arith.constant 0 : index
    %240 = vector.load %arg3[%c0_66, %c0_67] : memref<128x512xbf16, #tpu.memory_space<vmem>>, vector<128x512xbf16>
    %cst_68 = arith.constant dense<0.000000e+00> : vector<8x512xf32>
    %241 = tpu.matmul %239, %240, %cst_68 {dimension_numbers = #tpu.dot_dimension_numbers<[1], [0], [0], [1], [0, 0, 1, 1], [], []>} : vector<8x128xbf16>, vector<128x512xbf16>, vector<8x512xf32> -> vector<8x512xf32>
    %242 = arith.addf %241, %2 : vector<8x512xf32>
    %243 = arith.index_cast %c5_i32 : i32 to index
    %c0_69 = arith.constant 0 : index
    %c0_70 = arith.constant 0 : index
    %244 = vector.load %arg0[%243, %c0_69, %c0_70] : memref<8x8x512xf32, #tpu.memory_space<vmem>>, vector<1x8x512xf32>
    %245 = vector.shape_cast %244 : vector<1x8x512xf32> to vector<8x512xf32>
    %246 = arith.truncf %218 : vector<8x128xf32> to vector<8x128xbf16>
    %c0_71 = arith.constant 0 : index
    %c0_72 = arith.constant 0 : index
    %247 = vector.load %arg1[%c0_71, %c0_72] : memref<128x512xbf16, #tpu.memory_space<vmem>>, vector<128x512xbf16>
    %cst_73 = arith.constant dense<0.000000e+00> : vector<8x512xf32>
    %248 = tpu.matmul %246, %247, %cst_73 {dimension_numbers = #tpu.dot_dimension_numbers<[1], [0], [0], [1], [0, 0, 1, 1], [], []>} : vector<8x128xbf16>, vector<128x512xbf16>, vector<8x512xf32> -> vector<8x512xf32>
    %249 = arith.addf %245, %248 : vector<8x512xf32>
    %250 = vector.extract_strided_slice %249 {offsets = [0, 0], sizes = [8, 384], strides = [1, 1]} : vector<8x512xf32> to vector<8x384xf32>
    %251 = arith.negf %250 : vector<8x384xf32>
    %252 = math.exp %251 : vector<8x384xf32>
    %cst_74 = arith.constant 1.000000e+00 : f32
    %253 = vector.broadcast %cst_74 : f32 to vector<8x384xf32>
    %254 = arith.addf %253, %252 : vector<8x384xf32>
    %255 = arith.divf %253, %254 : vector<8x384xf32>
    %256 = vector.extract_strided_slice %249 {offsets = [0, 384], sizes = [8, 128], strides = [1, 1]} : vector<8x512xf32> to vector<8x128xf32>
    %257 = math.tanh %256 : vector<8x128xf32>
    %258 = vector.extract_strided_slice %255 {offsets = [0, 0], sizes = [8, 128], strides = [1, 1]} : vector<8x384xf32> to vector<8x128xf32>
    %259 = vector.extract_strided_slice %255 {offsets = [0, 128], sizes = [8, 128], strides = [1, 1]} : vector<8x384xf32> to vector<8x128xf32>
    %260 = vector.extract_strided_slice %255 {offsets = [0, 256], sizes = [8, 128], strides = [1, 1]} : vector<8x384xf32> to vector<8x128xf32>
    %261 = arith.mulf %259, %216 : vector<8x128xf32>
    %262 = arith.mulf %258, %257 : vector<8x128xf32>
    %263 = arith.addf %261, %262 : vector<8x128xf32>
    %264 = math.tanh %263 : vector<8x128xf32>
    %265 = arith.mulf %260, %264 : vector<8x128xf32>
    %266 = arith.truncf %265 : vector<8x128xf32> to vector<8x128xbf16>
    %c0_75 = arith.constant 0 : index
    %c0_76 = arith.constant 0 : index
    %267 = vector.load %arg2[%c0_75, %c0_76] : memref<128x512xbf16, #tpu.memory_space<vmem>>, vector<128x512xbf16>
    %cst_77 = arith.constant dense<0.000000e+00> : vector<8x512xf32>
    %268 = tpu.matmul %266, %267, %cst_77 {dimension_numbers = #tpu.dot_dimension_numbers<[1], [0], [0], [1], [0, 0, 1, 1], [], []>} : vector<8x128xbf16>, vector<128x512xbf16>, vector<8x512xf32> -> vector<8x512xf32>
    %269 = arith.addf %268, %242 : vector<8x512xf32>
    %270 = vector.extract_strided_slice %269 {offsets = [0, 0], sizes = [8, 384], strides = [1, 1]} : vector<8x512xf32> to vector<8x384xf32>
    %271 = arith.negf %270 : vector<8x384xf32>
    %272 = math.exp %271 : vector<8x384xf32>
    %cst_78 = arith.constant 1.000000e+00 : f32
    %273 = vector.broadcast %cst_78 : f32 to vector<8x384xf32>
    %274 = arith.addf %273, %272 : vector<8x384xf32>
    %275 = arith.divf %273, %274 : vector<8x384xf32>
    %276 = vector.extract_strided_slice %269 {offsets = [0, 384], sizes = [8, 128], strides = [1, 1]} : vector<8x512xf32> to vector<8x128xf32>
    %277 = math.tanh %276 : vector<8x128xf32>
    %278 = vector.extract_strided_slice %275 {offsets = [0, 0], sizes = [8, 128], strides = [1, 1]} : vector<8x384xf32> to vector<8x128xf32>
    %279 = vector.extract_strided_slice %275 {offsets = [0, 128], sizes = [8, 128], strides = [1, 1]} : vector<8x384xf32> to vector<8x128xf32>
    %280 = vector.extract_strided_slice %275 {offsets = [0, 256], sizes = [8, 128], strides = [1, 1]} : vector<8x384xf32> to vector<8x128xf32>
    %281 = arith.mulf %279, %236 : vector<8x128xf32>
    %282 = arith.mulf %278, %277 : vector<8x128xf32>
    %283 = arith.addf %281, %282 : vector<8x128xf32>
    %284 = math.tanh %283 : vector<8x128xf32>
    %285 = arith.mulf %280, %284 : vector<8x128xf32>
    %c6_i32 = arith.constant 6 : i32
    %286 = arith.truncf %285 : vector<8x128xf32> to vector<8x128xbf16>
    %c0_79 = arith.constant 0 : index
    %c0_80 = arith.constant 0 : index
    %287 = vector.load %arg3[%c0_79, %c0_80] : memref<128x512xbf16, #tpu.memory_space<vmem>>, vector<128x512xbf16>
    %cst_81 = arith.constant dense<0.000000e+00> : vector<8x512xf32>
    %288 = tpu.matmul %286, %287, %cst_81 {dimension_numbers = #tpu.dot_dimension_numbers<[1], [0], [0], [1], [0, 0, 1, 1], [], []>} : vector<8x128xbf16>, vector<128x512xbf16>, vector<8x512xf32> -> vector<8x512xf32>
    %289 = arith.addf %288, %2 : vector<8x512xf32>
    %290 = arith.index_cast %c6_i32 : i32 to index
    %c0_82 = arith.constant 0 : index
    %c0_83 = arith.constant 0 : index
    %291 = vector.load %arg0[%290, %c0_82, %c0_83] : memref<8x8x512xf32, #tpu.memory_space<vmem>>, vector<1x8x512xf32>
    %292 = vector.shape_cast %291 : vector<1x8x512xf32> to vector<8x512xf32>
    %293 = arith.truncf %265 : vector<8x128xf32> to vector<8x128xbf16>
    %c0_84 = arith.constant 0 : index
    %c0_85 = arith.constant 0 : index
    %294 = vector.load %arg1[%c0_84, %c0_85] : memref<128x512xbf16, #tpu.memory_space<vmem>>, vector<128x512xbf16>
    %cst_86 = arith.constant dense<0.000000e+00> : vector<8x512xf32>
    %295 = tpu.matmul %293, %294, %cst_86 {dimension_numbers = #tpu.dot_dimension_numbers<[1], [0], [0], [1], [0, 0, 1, 1], [], []>} : vector<8x128xbf16>, vector<128x512xbf16>, vector<8x512xf32> -> vector<8x512xf32>
    %296 = arith.addf %292, %295 : vector<8x512xf32>
    %297 = vector.extract_strided_slice %296 {offsets = [0, 0], sizes = [8, 384], strides = [1, 1]} : vector<8x512xf32> to vector<8x384xf32>
    %298 = arith.negf %297 : vector<8x384xf32>
    %299 = math.exp %298 : vector<8x384xf32>
    %cst_87 = arith.constant 1.000000e+00 : f32
    %300 = vector.broadcast %cst_87 : f32 to vector<8x384xf32>
    %301 = arith.addf %300, %299 : vector<8x384xf32>
    %302 = arith.divf %300, %301 : vector<8x384xf32>
    %303 = vector.extract_strided_slice %296 {offsets = [0, 384], sizes = [8, 128], strides = [1, 1]} : vector<8x512xf32> to vector<8x128xf32>
    %304 = math.tanh %303 : vector<8x128xf32>
    %305 = vector.extract_strided_slice %302 {offsets = [0, 0], sizes = [8, 128], strides = [1, 1]} : vector<8x384xf32> to vector<8x128xf32>
    %306 = vector.extract_strided_slice %302 {offsets = [0, 128], sizes = [8, 128], strides = [1, 1]} : vector<8x384xf32> to vector<8x128xf32>
    %307 = vector.extract_strided_slice %302 {offsets = [0, 256], sizes = [8, 128], strides = [1, 1]} : vector<8x384xf32> to vector<8x128xf32>
    %308 = arith.mulf %306, %263 : vector<8x128xf32>
    %309 = arith.mulf %305, %304 : vector<8x128xf32>
    %310 = arith.addf %308, %309 : vector<8x128xf32>
    %311 = math.tanh %310 : vector<8x128xf32>
    %312 = arith.mulf %307, %311 : vector<8x128xf32>
    %313 = arith.truncf %312 : vector<8x128xf32> to vector<8x128xbf16>
    %c0_88 = arith.constant 0 : index
    %c0_89 = arith.constant 0 : index
    %314 = vector.load %arg2[%c0_88, %c0_89] : memref<128x512xbf16, #tpu.memory_space<vmem>>, vector<128x512xbf16>
    %cst_90 = arith.constant dense<0.000000e+00> : vector<8x512xf32>
    %315 = tpu.matmul %313, %314, %cst_90 {dimension_numbers = #tpu.dot_dimension_numbers<[1], [0], [0], [1], [0, 0, 1, 1], [], []>} : vector<8x128xbf16>, vector<128x512xbf16>, vector<8x512xf32> -> vector<8x512xf32>
    %316 = arith.addf %315, %289 : vector<8x512xf32>
    %317 = vector.extract_strided_slice %316 {offsets = [0, 0], sizes = [8, 384], strides = [1, 1]} : vector<8x512xf32> to vector<8x384xf32>
    %318 = arith.negf %317 : vector<8x384xf32>
    %319 = math.exp %318 : vector<8x384xf32>
    %cst_91 = arith.constant 1.000000e+00 : f32
    %320 = vector.broadcast %cst_91 : f32 to vector<8x384xf32>
    %321 = arith.addf %320, %319 : vector<8x384xf32>
    %322 = arith.divf %320, %321 : vector<8x384xf32>
    %323 = vector.extract_strided_slice %316 {offsets = [0, 384], sizes = [8, 128], strides = [1, 1]} : vector<8x512xf32> to vector<8x128xf32>
    %324 = math.tanh %323 : vector<8x128xf32>
    %325 = vector.extract_strided_slice %322 {offsets = [0, 0], sizes = [8, 128], strides = [1, 1]} : vector<8x384xf32> to vector<8x128xf32>
    %326 = vector.extract_strided_slice %322 {offsets = [0, 128], sizes = [8, 128], strides = [1, 1]} : vector<8x384xf32> to vector<8x128xf32>
    %327 = vector.extract_strided_slice %322 {offsets = [0, 256], sizes = [8, 128], strides = [1, 1]} : vector<8x384xf32> to vector<8x128xf32>
    %328 = arith.mulf %326, %283 : vector<8x128xf32>
    %329 = arith.mulf %325, %324 : vector<8x128xf32>
    %330 = arith.addf %328, %329 : vector<8x128xf32>
    %331 = math.tanh %330 : vector<8x128xf32>
    %332 = arith.mulf %327, %331 : vector<8x128xf32>
    %c7_i32 = arith.constant 7 : i32
    %333 = arith.truncf %332 : vector<8x128xf32> to vector<8x128xbf16>
    %c0_92 = arith.constant 0 : index
    %c0_93 = arith.constant 0 : index
    %334 = vector.load %arg3[%c0_92, %c0_93] : memref<128x512xbf16, #tpu.memory_space<vmem>>, vector<128x512xbf16>
    %cst_94 = arith.constant dense<0.000000e+00> : vector<8x512xf32>
    %335 = tpu.matmul %333, %334, %cst_94 {dimension_numbers = #tpu.dot_dimension_numbers<[1], [0], [0], [1], [0, 0, 1, 1], [], []>} : vector<8x128xbf16>, vector<128x512xbf16>, vector<8x512xf32> -> vector<8x512xf32>
    %336 = arith.addf %335, %2 : vector<8x512xf32>
    %337 = arith.index_cast %c7_i32 : i32 to index
    %c0_95 = arith.constant 0 : index
    %c0_96 = arith.constant 0 : index
    %338 = vector.load %arg0[%337, %c0_95, %c0_96] : memref<8x8x512xf32, #tpu.memory_space<vmem>>, vector<1x8x512xf32>
    %339 = vector.shape_cast %338 : vector<1x8x512xf32> to vector<8x512xf32>
    %340 = arith.truncf %312 : vector<8x128xf32> to vector<8x128xbf16>
    %c0_97 = arith.constant 0 : index
    %c0_98 = arith.constant 0 : index
    %341 = vector.load %arg1[%c0_97, %c0_98] : memref<128x512xbf16, #tpu.memory_space<vmem>>, vector<128x512xbf16>
    %cst_99 = arith.constant dense<0.000000e+00> : vector<8x512xf32>
    %342 = tpu.matmul %340, %341, %cst_99 {dimension_numbers = #tpu.dot_dimension_numbers<[1], [0], [0], [1], [0, 0, 1, 1], [], []>} : vector<8x128xbf16>, vector<128x512xbf16>, vector<8x512xf32> -> vector<8x512xf32>
    %343 = arith.addf %339, %342 : vector<8x512xf32>
    %344 = vector.extract_strided_slice %343 {offsets = [0, 0], sizes = [8, 384], strides = [1, 1]} : vector<8x512xf32> to vector<8x384xf32>
    %345 = arith.negf %344 : vector<8x384xf32>
    %346 = math.exp %345 : vector<8x384xf32>
    %cst_100 = arith.constant 1.000000e+00 : f32
    %347 = vector.broadcast %cst_100 : f32 to vector<8x384xf32>
    %348 = arith.addf %347, %346 : vector<8x384xf32>
    %349 = arith.divf %347, %348 : vector<8x384xf32>
    %350 = vector.extract_strided_slice %343 {offsets = [0, 384], sizes = [8, 128], strides = [1, 1]} : vector<8x512xf32> to vector<8x128xf32>
    %351 = math.tanh %350 : vector<8x128xf32>
    %352 = vector.extract_strided_slice %349 {offsets = [0, 0], sizes = [8, 128], strides = [1, 1]} : vector<8x384xf32> to vector<8x128xf32>
    %353 = vector.extract_strided_slice %349 {offsets = [0, 128], sizes = [8, 128], strides = [1, 1]} : vector<8x384xf32> to vector<8x128xf32>
    %354 = vector.extract_strided_slice %349 {offsets = [0, 256], sizes = [8, 128], strides = [1, 1]} : vector<8x384xf32> to vector<8x128xf32>
    %355 = arith.mulf %353, %310 : vector<8x128xf32>
    %356 = arith.mulf %352, %351 : vector<8x128xf32>
    %357 = arith.addf %355, %356 : vector<8x128xf32>
    %358 = math.tanh %357 : vector<8x128xf32>
    %359 = arith.mulf %354, %358 : vector<8x128xf32>
    %360 = arith.truncf %359 : vector<8x128xf32> to vector<8x128xbf16>
    %c0_101 = arith.constant 0 : index
    %c0_102 = arith.constant 0 : index
    %361 = vector.load %arg2[%c0_101, %c0_102] : memref<128x512xbf16, #tpu.memory_space<vmem>>, vector<128x512xbf16>
    %cst_103 = arith.constant dense<0.000000e+00> : vector<8x512xf32>
    %362 = tpu.matmul %360, %361, %cst_103 {dimension_numbers = #tpu.dot_dimension_numbers<[1], [0], [0], [1], [0, 0, 1, 1], [], []>} : vector<8x128xbf16>, vector<128x512xbf16>, vector<8x512xf32> -> vector<8x512xf32>
    %363 = arith.addf %362, %336 : vector<8x512xf32>
    %364 = vector.extract_strided_slice %363 {offsets = [0, 0], sizes = [8, 384], strides = [1, 1]} : vector<8x512xf32> to vector<8x384xf32>
    %365 = arith.negf %364 : vector<8x384xf32>
    %366 = math.exp %365 : vector<8x384xf32>
    %cst_104 = arith.constant 1.000000e+00 : f32
    %367 = vector.broadcast %cst_104 : f32 to vector<8x384xf32>
    %368 = arith.addf %367, %366 : vector<8x384xf32>
    %369 = arith.divf %367, %368 : vector<8x384xf32>
    %370 = vector.extract_strided_slice %363 {offsets = [0, 384], sizes = [8, 128], strides = [1, 1]} : vector<8x512xf32> to vector<8x128xf32>
    %371 = math.tanh %370 : vector<8x128xf32>
    %372 = vector.extract_strided_slice %369 {offsets = [0, 0], sizes = [8, 128], strides = [1, 1]} : vector<8x384xf32> to vector<8x128xf32>
    %373 = vector.extract_strided_slice %369 {offsets = [0, 128], sizes = [8, 128], strides = [1, 1]} : vector<8x384xf32> to vector<8x128xf32>
    %374 = vector.extract_strided_slice %369 {offsets = [0, 256], sizes = [8, 128], strides = [1, 1]} : vector<8x384xf32> to vector<8x128xf32>
    %375 = arith.mulf %373, %330 : vector<8x128xf32>
    %376 = arith.mulf %372, %371 : vector<8x128xf32>
    %377 = arith.addf %375, %376 : vector<8x128xf32>
    %378 = math.tanh %377 : vector<8x128xf32>
    %379 = arith.mulf %374, %378 : vector<8x128xf32>
    %c8_i32 = arith.constant 8 : i32
    %380 = tpu.iota {dimensions = array<i32: 1>} : vector<1x128xi32>
    %c64_i32 = arith.constant 64 : i32
    %381 = vector.broadcast %c64_i32 : i32 to vector<1x128xi32>
    %382 = arith.cmpi slt, %380, %381 : vector<1x128xi32>
    %383 = arith.extui %382 : vector<1x128xi1> to vector<1x128xi32>
    %384 = arith.sitofp %383 : vector<1x128xi32> to vector<1x128xf32>
    %cst_105 = arith.constant dense<0.000000e+00> : vector<8xf32>
    %385 = vector.multi_reduction <add>, %379, %cst_105 [1] : vector<8x128xf32> to vector<8xf32>
    %386 = vector.shape_cast %385 : vector<8xf32> to vector<8x1xf32>
    %cst_106 = arith.constant 1.562500e-02 : f32
    %387 = vector.broadcast %cst_106 : f32 to vector<8x1xf32>
    %388 = arith.mulf %386, %387 : vector<8x1xf32>
    %389 = vector.broadcast %388 : vector<8x1xf32> to vector<8x128xf32>
    %390 = arith.subf %379, %389 : vector<8x128xf32>
    %391 = vector.broadcast %384 : vector<1x128xf32> to vector<8x128xf32>
    %392 = arith.mulf %390, %391 : vector<8x128xf32>
    %393 = arith.mulf %392, %392 : vector<8x128xf32>
    %cst_107 = arith.constant dense<0.000000e+00> : vector<8xf32>
    %394 = vector.multi_reduction <add>, %393, %cst_107 [1] : vector<8x128xf32> to vector<8xf32>
    %395 = vector.shape_cast %394 : vector<8xf32> to vector<8x1xf32>
    %cst_108 = arith.constant 1.562500e-02 : f32
    %396 = vector.broadcast %cst_108 : f32 to vector<8x1xf32>
    %397 = arith.mulf %395, %396 : vector<8x1xf32>
    %cst_109 = arith.constant 9.99999974E-6 : f32
    %398 = vector.broadcast %cst_109 : f32 to vector<8x1xf32>
    %399 = arith.addf %397, %398 : vector<8x1xf32>
    %400 = math.rsqrt %399 : vector<8x1xf32>
    %401 = vector.broadcast %400 : vector<8x1xf32> to vector<8x128xf32>
    %402 = arith.mulf %392, %401 : vector<8x128xf32>
    %c0_110 = arith.constant 0 : index
    %c0_111 = arith.constant 0 : index
    %403 = vector.load %arg5[%c0_110, %c0_111] : memref<1x128xf32, #tpu.memory_space<vmem>>, vector<1x128xf32>
    %404 = vector.broadcast %403 : vector<1x128xf32> to vector<8x128xf32>
    %405 = arith.mulf %402, %404 : vector<8x128xf32>
    %c0_112 = arith.constant 0 : index
    %c0_113 = arith.constant 0 : index
    %406 = vector.load %arg6[%c0_112, %c0_113] : memref<1x128xf32, #tpu.memory_space<vmem>>, vector<1x128xf32>
    %407 = vector.broadcast %406 : vector<1x128xf32> to vector<8x128xf32>
    %408 = arith.addf %405, %407 : vector<8x128xf32>
    %cst_114 = arith.constant 0.000000e+00 : f32
    %409 = vector.broadcast %cst_114 : f32 to vector<8x128xf32>
    %410 = arith.maximumf %408, %409 : vector<8x128xf32>
    %c0_115 = arith.constant 0 : index
    %c0_116 = arith.constant 0 : index
    %411 = vector.load %arg7[%c0_115, %c0_116] : memref<128x128xf32, #tpu.memory_space<vmem>>, vector<128x128xf32>
    %cst_117 = arith.constant dense<0.000000e+00> : vector<8x128xf32>
    %412 = tpu.matmul %410, %411, %cst_117 {dimension_numbers = #tpu.dot_dimension_numbers<[1], [0], [0], [1], [0, 0, 1, 1], [], []>} : vector<8x128xf32>, vector<128x128xf32>, vector<8x128xf32> -> vector<8x128xf32>
    %c0_118 = arith.constant 0 : index
    %c0_119 = arith.constant 0 : index
    %413 = vector.load %arg8[%c0_118, %c0_119] : memref<1x128xf32, #tpu.memory_space<vmem>>, vector<1x128xf32>
    %414 = vector.broadcast %413 : vector<1x128xf32> to vector<8x128xf32>
    %415 = arith.addf %412, %414 : vector<8x128xf32>
    %c0_120 = arith.constant 0 : index
    %c0_121 = arith.constant 0 : index
    %416 = vector.load %arg9[%c0_120, %c0_121] : memref<8x128xf32, #tpu.memory_space<vmem>>, vector<8x128xf32>
    tpu.vector_store %arg9[%c0_120, %c0_121], %415 {strides = array<i32>} : memref<8x128xf32, #tpu.memory_space<vmem>>, vector<8x128xf32>,
    return
  }
}

</mosaic_0001>

<llo_original>
// kernel: eye_state_double_lstm_150.1
$region0: #{eye_state_double_lstm_150.1}
  #allocation0 [shape = 'u32[]', space=smem, size = 0x4, offset = 0x4, fixed_abs, tag = 'smem constant byte address 0x4 - core index']
  #allocation1 [shape = 'u32[144,128]{1,0:T(1,128)}', space=vmem, size = 0x12000, scoped, tag = 'internal scratch']
  %s0 = inlined_call_operand.vmem [shape: f32[8,8,512], index: 0, kind: input, shape index: {}]
  %s1 = inlined_call_operand.vmem [shape: bf16[128,512], index: 1, kind: input, shape index: {}]
  %s2 = inlined_call_operand.vmem [shape: bf16[128,512], index: 2, kind: input, shape index: {}]
  %s3 = inlined_call_operand.vmem [shape: bf16[128,512], index: 3, kind: input, shape index: {}]
  %s4 = inlined_call_operand.vmem [shape: f32[1,512], index: 4, kind: input, shape index: {}]
  %s5 = inlined_call_operand.vmem [shape: f32[1,128], index: 5, kind: input, shape index: {}]
  %s6 = inlined_call_operand.vmem [shape: f32[1,128], index: 6, kind: input, shape index: {}]
  %s7 = inlined_call_operand.vmem [shape: f32[128,128], index: 7, kind: input, shape index: {}]
  %s8 = inlined_call_operand.vmem [shape: f32[1,128], index: 8, kind: input, shape index: {}]
  %s9 = inlined_call_operand.vmem [shape: f32[8,128], index: 9, kind: output, shape index: {}]
  %s10 = sld [smem:[#allocation0]]
  $region46: #{eye_state_double_lstm_150.1} parent=0
    _
  %s12 = ssub.s32 1, %s10
  %s13 = scalar_select 0, %s12, %s10
  // Predicated region
  $region2: #{eye_state_double_lstm_150.1} parent=0 // pred_check
    _
  $region3: #{eye_state_double_lstm_150.1} parent=0 // pred_check_branch
    %15 = sbr.rel (0) target = $region5
  $region4: #{eye_state_double_lstm_150.1} parent=0 // pred_region
    _
  $region5: #{eye_state_double_lstm_150.1} parent=0 // pred_fallthru
    _
  // Predicated region
  $region6: #{eye_state_double_lstm_150.1} parent=0 // pred_check
    _
  $region7: #{eye_state_double_lstm_150.1} parent=0 // pred_check_branch
    %17 = sbr.rel (0) target = $region9
  $region8: #{eye_state_double_lstm_150.1} parent=0 // pred_region
    _
  $region9: #{eye_state_double_lstm_150.1} parent=0 // pred_fallthru
    _
  // Predicated region
  $region10: #{eye_state_double_lstm_150.1} parent=0 // pred_check
    _
  $region11: #{eye_state_double_lstm_150.1} parent=0 // pred_check_branch
    %19 = sbr.rel (0) target = $region13
  $region12: #{eye_state_double_lstm_150.1} parent=0 // pred_region
    _
  $region13: #{eye_state_double_lstm_150.1} parent=0 // pred_fallthru
    _
  // Predicated region
  $region14: #{eye_state_double_lstm_150.1} parent=0 // pred_check
    _
  $region15: #{eye_state_double_lstm_150.1} parent=0 // pred_check_branch
    %21 = sbr.rel (0) target = $region17
  $region16: #{eye_state_double_lstm_150.1} parent=0 // pred_region
    _
  $region17: #{eye_state_double_lstm_150.1} parent=0 // pred_fallthru
    _
  // Predicated region
  $region18: #{eye_state_double_lstm_150.1} parent=0 // pred_check
    _
  $region19: #{eye_state_double_lstm_150.1} parent=0 // pred_check_branch
    %23 = sbr.rel (0) target = $region21
  $region20: #{eye_state_double_lstm_150.1} parent=0 // pred_region
    _
  $region21: #{eye_state_double_lstm_150.1} parent=0 // pred_fallthru
    _
  // Predicated region
  $region22: #{eye_state_double_lstm_150.1} parent=0 // pred_check
    _
  $region23: #{eye_state_double_lstm_150.1} parent=0 // pred_check_branch
    %25 = sbr.rel (0) target = $region25
  $region24: #{eye_state_double_lstm_150.1} parent=0 // pred_region
    _
  $region25: #{eye_state_double_lstm_150.1} parent=0 // pred_fallthru
    _
  // Predicated region
  $region26: #{eye_state_double_lstm_150.1} parent=0 // pred_check
    _
  $region27: #{eye_state_double_lstm_150.1} parent=0 // pred_check_branch
    %27 = sbr.rel (0) target = $region29
  $region28: #{eye_state_double_lstm_150.1} parent=0 // pred_region
    _
  $region29: #{eye_state_double_lstm_150.1} parent=0 // pred_fallthru
    _
  // Predicated region
  $region30: #{eye_state_double_lstm_150.1} parent=0 // pred_check
    _
  $region31: #{eye_state_double_lstm_150.1} parent=0 // pred_check_branch
    %29 = sbr.rel (0) target = $region33
  $region32: #{eye_state_double_lstm_150.1} parent=0 // pred_region
    _
  $region33: #{eye_state_double_lstm_150.1} parent=0 // pred_fallthru
    _
  // Predicated region
  $region34: #{eye_state_double_lstm_150.1} parent=0 // pred_check
    _
  $region35: #{eye_state_double_lstm_150.1} parent=0 // pred_check_branch
    %31 = sbr.rel (0) target = $region37
  $region36: #{eye_state_double_lstm_150.1} parent=0 // pred_region
    _
  $region37: #{eye_state_double_lstm_150.1} parent=0 // pred_fallthru
    _
  %v33 = vld [vmem:[%s4] sm:$0xf]
  %v35 = vlaneseq
  %v36 = vshrl.u32 %v35, 7
  %v37 = vsub.s32 0, %v36
  %v38 = vrot.slane %v33, %v37
  %v39 = vlaneseq
  %v40 = vshrl.u32 %v39, 7
  %v41 = vsub.s32 1, %v40
  %v42 = vrot.slane %v33, %v41
  %v43 = vlaneseq
  %v44 = vshrl.u32 %v43, 7
  %v45 = vsub.s32 2, %v44
  %v46 = vrot.slane %v33, %v45
  %v47 = vlaneseq
  %v48 = vshrl.u32 %v47, 7
  %v49 = vsub.s32 3, %v48
  %v50 = vrot.slane %v33, %v49
  %v55 = vld [vmem:[%s3] sm:$0xff]
  %v56 = vld [vmem:[%s3 + $0x8] sm:$0xff]
  %v57 = vld [vmem:[%s3 + $0x10] sm:$0xff]
  %v58 = vld [vmem:[%s3 + $0x18] sm:$0xff]
  %v59 = vld [vmem:[%s3 + $0x20] sm:$0xff]
  %v60 = vld [vmem:[%s3 + $0x28] sm:$0xff]
  %v61 = vld [vmem:[%s3 + $0x30] sm:$0xff]
  %v62 = vld [vmem:[%s3 + $0x38] sm:$0xff]
  %v63 = vld [vmem:[%s3 + $0x40] sm:$0xff]
  %v64 = vld [vmem:[%s3 + $0x48] sm:$0xff]
  %v65 = vld [vmem:[%s3 + $0x50] sm:$0xff]
  %v66 = vld [vmem:[%s3 + $0x58] sm:$0xff]
  %v67 = vld [vmem:[%s3 + $0x60] sm:$0xff]
  %v68 = vld [vmem:[%s3 + $0x68] sm:$0xff]
  %v69 = vld [vmem:[%s3 + $0x70] sm:$0xff]
  %v70 = vld [vmem:[%s3 + $0x78] sm:$0xff]
  %v71 = vld [vmem:[%s3 + $0x80] sm:$0xff]
  %v72 = vld [vmem:[%s3 + $0x88] sm:$0xff]
  %v73 = vld [vmem:[%s3 + $0x90] sm:$0xff]
  %v74 = vld [vmem:[%s3 + $0x98] sm:$0xff]
  %v75 = vld [vmem:[%s3 + $0xa0] sm:$0xff]
  %v76 = vld [vmem:[%s3 + $0xa8] sm:$0xff]
  %v77 = vld [vmem:[%s3 + $0xb0] sm:$0xff]
  %v78 = vld [vmem:[%s3 + $0xb8] sm:$0xff]
  %v79 = vld [vmem:[%s3 + $0xc0] sm:$0xff]
  %v80 = vld [vmem:[%s3 + $0xc8] sm:$0xff]
  %v81 = vld [vmem:[%s3 + $0xd0] sm:$0xff]
  %v82 = vld [vmem:[%s3 + $0xd8] sm:$0xff]
  %v83 = vld [vmem:[%s3 + $0xe0] sm:$0xff]
  %v84 = vld [vmem:[%s3 + $0xe8] sm:$0xff]
  %v85 = vld [vmem:[%s3 + $0xf0] sm:$0xff]
  %v86 = vld [vmem:[%s3 + $0xf8] sm:$0xff]
  %v119 = vunpack.c.l.b16 %v55
  %v120 = vunpack.c.h.b16 %v55
  %v121 = vunpack.c.l.b16 %v56
  %v122 = vunpack.c.h.b16 %v56
  %v123 = vunpack.c.l.b16 %v57
  %v124 = vunpack.c.h.b16 %v57
  %v125 = vunpack.c.l.b16 %v58
  %v126 = vunpack.c.h.b16 %v58
  %v127 = vunpack.c.l.b16 %v59
  %v128 = vunpack.c.h.b16 %v59
  %v129 = vunpack.c.l.b16 %v60
  %v130 = vunpack.c.h.b16 %v60
  %v131 = vunpack.c.l.b16 %v61
  %v132 = vunpack.c.h.b16 %v61
  %v133 = vunpack.c.l.b16 %v62
  %v134 = vunpack.c.h.b16 %v62
  %v135 = vunpack.c.l.b16 %v63
  %v136 = vunpack.c.h.b16 %v63
  %v137 = vunpack.c.l.b16 %v64
  %v138 = vunpack.c.h.b16 %v64
  %v139 = vunpack.c.l.b16 %v65
  %v140 = vunpack.c.h.b16 %v65
  %v141 = vunpack.c.l.b16 %v66
  %v142 = vunpack.c.h.b16 %v66
  %v143 = vunpack.c.l.b16 %v67
  %v144 = vunpack.c.h.b16 %v67
  %v145 = vunpack.c.l.b16 %v68
  %v146 = vunpack.c.h.b16 %v68
  %v147 = vunpack.c.l.b16 %v69
  %v148 = vunpack.c.h.b16 %v69
  %v149 = vunpack.c.l.b16 %v70
  %v150 = vunpack.c.h.b16 %v70
  %v151 = vunpack.c.l.b16 %v71
  %v152 = vunpack.c.h.b16 %v71
  %v153 = vunpack.c.l.b16 %v72
  %v154 = vunpack.c.h.b16 %v72
  %v155 = vunpack.c.l.b16 %v73
  %v156 = vunpack.c.h.b16 %v73
  %v157 = vunpack.c.l.b16 %v74
  %v158 = vunpack.c.h.b16 %v74
  %v159 = vunpack.c.l.b16 %v75
  %v160 = vunpack.c.h.b16 %v75
  %v161 = vunpack.c.l.b16 %v76
  %v162 = vunpack.c.h.b16 %v76
  %v163 = vunpack.c.l.b16 %v77
  %v164 = vunpack.c.h.b16 %v77
  %v165 = vunpack.c.l.b16 %v78
  %v166 = vunpack.c.h.b16 %v78
  %v167 = vunpack.c.l.b16 %v79
  %v168 = vunpack.c.h.b16 %v79
  %v169 = vunpack.c.l.b16 %v80
  %v170 = vunpack.c.h.b16 %v80
  %v171 = vunpack.c.l.b16 %v81
  %v172 = vunpack.c.h.b16 %v81
  %v173 = vunpack.c.l.b16 %v82
  %v174 = vunpack.c.h.b16 %v82
  %v175 = vunpack.c.l.b16 %v83
  %v176 = vunpack.c.h.b16 %v83
  %v177 = vunpack.c.l.b16 %v84
  %v178 = vunpack.c.h.b16 %v84
  %v179 = vunpack.c.l.b16 %v85
  %v180 = vunpack.c.h.b16 %v85
  %v181 = vunpack.c.l.b16 %v86
  %v182 = vunpack.c.h.b16 %v86
  %v183 = vpack.c.b16 %v123, %v119
  %v184 = vpack.c.b16 %v124, %v120
  %v185 = vpack.c.b16 %v125, %v121
  %v186 = vpack.c.b16 %v126, %v122
  %v187 = vpack.c.b16 %v131, %v127
  %v188 = vpack.c.b16 %v132, %v128
  %v189 = vpack.c.b16 %v133, %v129
  %v190 = vpack.c.b16 %v134, %v130
  %v191 = vpack.c.b16 %v139, %v135
  %v192 = vpack.c.b16 %v140, %v136
  %v193 = vpack.c.b16 %v141, %v137
  %v194 = vpack.c.b16 %v142, %v138
  %v195 = vpack.c.b16 %v147, %v143
  %v196 = vpack.c.b16 %v148, %v144
  %v197 = vpack.c.b16 %v149, %v145
  %v198 = vpack.c.b16 %v150, %v146
  %v199 = vpack.c.b16 %v155, %v151
  %v200 = vpack.c.b16 %v156, %v152
  %v201 = vpack.c.b16 %v157, %v153
  %v202 = vpack.c.b16 %v158, %v154
  %v203 = vpack.c.b16 %v163, %v159
  %v204 = vpack.c.b16 %v164, %v160
  %v205 = vpack.c.b16 %v165, %v161
  %v206 = vpack.c.b16 %v166, %v162
  %v207 = vpack.c.b16 %v171, %v167
  %v208 = vpack.c.b16 %v172, %v168
  %v209 = vpack.c.b16 %v173, %v169
  %v210 = vpack.c.b16 %v174, %v170
  %v211 = vpack.c.b16 %v179, %v175
  %v212 = vpack.c.b16 %v180, %v176
  %v213 = vpack.c.b16 %v181, %v177
  %v214 = vpack.c.b16 %v182, %v178
  %247 = vmatprep.subr.bf16.mxu0 %v184
  %248 = vmatpush1.bf16.msra.mxu0 %v183
  %249 = vmatprep.subr.bf16.mxu0 %v188
  %250 = vmatpush1.bf16.msra.mxu0 %v187
  %251 = vmatprep.subr.bf16.mxu0 %v192
  %252 = vmatpush1.bf16.msra.mxu0 %v191
  %253 = vmatprep.subr.bf16.mxu0 %v196
  %254 = vmatpush1.bf16.msra.mxu0 %v195
  %255 = vmatprep.subr.bf16.mxu0 %v200
  %256 = vmatpush1.bf16.msra.mxu0 %v199
  %257 = vmatprep.subr.bf16.mxu0 %v204
  %258 = vmatpush1.bf16.msra.mxu0 %v203
  %259 = vmatprep.subr.bf16.mxu0 %v208
  %260 = vmatpush1.bf16.msra.mxu0 %v207
  %261 = vmatprep.subr.bf16.mxu0 %v212
  %262 = vmatpush1.bf16.msra.mxu0 %v211
  %263 = vmatprep.subr.bf16.mxu0 0
  %264 = vmatpush1.bf16.msra.mxu0 0
  %265 = vmatprep.subr.bf16.mxu0 0
  %266 = vmatpush1.bf16.msra.mxu0 0
  %267 = vmatprep.subr.bf16.mxu0 0
  %268 = vmatpush1.bf16.msra.mxu0 0
  %269 = vmatprep.subr.bf16.mxu0 0
  %270 = vmatpush1.bf16.msra.mxu0 0
  %271 = vmatprep.subr.bf16.mxu0 0
  %272 = vmatpush1.bf16.msra.mxu0 0
  %273 = vmatprep.subr.bf16.mxu0 0
  %274 = vmatpush1.bf16.msra.mxu0 0
  %275 = vmatprep.subr.bf16.mxu0 0
  %276 = vmatpush1.bf16.msra.mxu0 0
  %277 = vmatprep.subr.bf16.mxu0 0
  %278 = vmatpush1.bf16.msra.mxu0 0
  %279 = vmatprep.mubr.bf16.mxu0 0
  %280 = vmatmul.mubr.bf16.gmra.mrb[0].mxu0 0
  %v281 = vpop.f32.mrb[0].mxu0
  %v282 = vadd.f32 %v38, %v281
  %v283 = vpop.f32.mrb[0].mxu0
  %v284 = vadd.f32 %v42, %v283
  %v285 = vpop.f32.mrb[0].mxu0
  %v286 = vpop.f32.mrb[0].mxu0
  %287 = vdwg.mxu0
  %288 = vmatprep.subr.bf16.mxu0 %v186
  %289 = vmatpush1.bf16.msra.mxu0 %v185
  %290 = vmatprep.subr.bf16.mxu0 %v190
  %291 = vmatpush1.bf16.msra.mxu0 %v189
  %292 = vmatprep.subr.bf16.mxu0 %v194
  %293 = vmatpush1.bf16.msra.mxu0 %v193
  %294 = vmatprep.subr.bf16.mxu0 %v198
  %295 = vmatpush1.bf16.msra.mxu0 %v197
  %296 = vmatprep.subr.bf16.mxu0 %v202
  %297 = vmatpush1.bf16.msra.mxu0 %v201
  %298 = vmatprep.subr.bf16.mxu0 %v206
  %299 = vmatpush1.bf16.msra.mxu0 %v205
  %300 = vmatprep.subr.bf16.mxu0 %v210
  %301 = vmatpush1.bf16.msra.mxu0 %v209
  %302 = vmatprep.subr.bf16.mxu0 %v214
  %303 = vmatpush1.bf16.msra.mxu0 %v213
  %304 = vmatprep.subr.bf16.mxu0 0
  %305 = vmatpush1.bf16.msra.mxu0 0
  %306 = vmatprep.subr.bf16.mxu0 0
  %307 = vmatpush1.bf16.msra.mxu0 0
  %308 = vmatprep.subr.bf16.mxu0 0
  %309 = vmatpush1.bf16.msra.mxu0 0
  %310 = vmatprep.subr.bf16.mxu0 0
  %311 = vmatpush1.bf16.msra.mxu0 0
  %312 = vmatprep.subr.bf16.mxu0 0
  %313 = vmatpush1.bf16.msra.mxu0 0
  %314 = vmatprep.subr.bf16.mxu0 0
  %315 = vmatpush1.bf16.msra.mxu0 0
  %316 = vmatprep.subr.bf16.mxu0 0
  %317 = vmatpush1.bf16.msra.mxu0 0
  %318 = vmatprep.subr.bf16.mxu0 0
  %319 = vmatpush1.bf16.msra.mxu0 0
  %320 = vmatprep.mubr.bf16.mxu0 0
  %321 = vmatmul.mubr.bf16.gmra.mrb[0].mxu0 0
  %v322 = vpop.f32.mrb[0].mxu0
  %v323 = vadd.f32 %v46, %v322
  %v324 = vpop.f32.mrb[0].mxu0
  %v325 = vadd.f32 %v50, %v324
  %v326 = vpop.f32.mrb[0].mxu0
  %v327 = vpop.f32.mrb[0].mxu0
  %328 = vdwg.mxu0
  %v329 = vld [vmem:[%s0] sm:$0xff]
  %v330 = vld [vmem:[%s0 + $0x8] sm:$0xff]
  %v331 = vld [vmem:[%s0 + $0x10] sm:$0xff]
  %v332 = vld [vmem:[%s0 + $0x18] sm:$0xff]
  %v333 = vld [vmem:[%s1] sm:$0xff]
  %v334 = vld [vmem:[%s1 + $0x8] sm:$0xff]
  %v335 = vld [vmem:[%s1 + $0x10] sm:$0xff]
  %v336 = vld [vmem:[%s1 + $0x18] sm:$0xff]
  %v337 = vld [vmem:[%s1 + $0x20] sm:$0xff]
  %v338 = vld [vmem:[%s1 + $0x28] sm:$0xff]
  %v339 = vld [vmem:[%s1 + $0x30] sm:$0xff]
  %v340 = vld [vmem:[%s1 + $0x38] sm:$0xff]
  %v341 = vld [vmem:[%s1 + $0x40] sm:$0xff]
  %v342 = vld [vmem:[%s1 + $0x48] sm:$0xff]
  %v343 = vld [vmem:[%s1 + $0x50] sm:$0xff]
  %v344 = vld [vmem:[%s1 + $0x58] sm:$0xff]
  %v345 = vld [vmem:[%s1 + $0x60] sm:$0xff]
  %v346 = vld [vmem:[%s1 + $0x68] sm:$0xff]
  %v347 = vld [vmem:[%s1 + $0x70] sm:$0xff]
  %v348 = vld [vmem:[%s1 + $0x78] sm:$0xff]
  %v349 = vld [vmem:[%s1 + $0x80] sm:$0xff]
  %v350 = vld [vmem:[%s1 + $0x88] sm:$0xff]
  %v351 = vld [vmem:[%s1 + $0x90] sm:$0xff]
  %v352 = vld [vmem:[%s1 + $0x98] sm:$0xff]
  %v353 = vld [vmem:[%s1 + $0xa0] sm:$0xff]
  %v354 = vld [vmem:[%s1 + $0xa8] sm:$0xff]
  %v355 = vld [vmem:[%s1 + $0xb0] sm:$0xff]
  %v356 = vld [vmem:[%s1 + $0xb8] sm:$0xff]
  %v357 = vld [vmem:[%s1 + $0xc0] sm:$0xff]
  %v358 = vld [vmem:[%s1 + $0xc8] sm:$0xff]
  %v359 = vld [vmem:[%s1 + $0xd0] sm:$0xff]
  %v360 = vld [vmem:[%s1 + $0xd8] sm:$0xff]
  %v361 = vld [vmem:[%s1 + $0xe0] sm:$0xff]
  %v362 = vld [vmem:[%s1 + $0xe8] sm:$0xff]
  %v363 = vld [vmem:[%s1 + $0xf0] sm:$0xff]
  %v364 = vld [vmem:[%s1 + $0xf8] sm:$0xff]
  %v397 = vunpack.c.l.b16 %v333
  %v398 = vunpack.c.h.b16 %v333
  %v399 = vunpack.c.l.b16 %v334
  %v400 = vunpack.c.h.b16 %v334
  %v401 = vunpack.c.l.b16 %v335
  %v402 = vunpack.c.h.b16 %v335
  %v403 = vunpack.c.l.b16 %v336
  %v404 = vunpack.c.h.b16 %v336
  %v405 = vunpack.c.l.b16 %v337
  %v406 = vunpack.c.h.b16 %v337
  %v407 = vunpack.c.l.b16 %v338
  %v408 = vunpack.c.h.b16 %v338
  %v409 = vunpack.c.l.b16 %v339
  %v410 = vunpack.c.h.b16 %v339
  %v411 = vunpack.c.l.b16 %v340
  %v412 = vunpack.c.h.b16 %v340
  %v413 = vunpack.c.l.b16 %v341
  %v414 = vunpack.c.h.b16 %v341
  %v415 = vunpack.c.l.b16 %v342
  %v416 = vunpack.c.h.b16 %v342
  %v417 = vunpack.c.l.b16 %v343
  %v418 = vunpack.c.h.b16 %v343
  %v419 = vunpack.c.l.b16 %v344
  %v420 = vunpack.c.h.b16 %v344
  %v421 = vunpack.c.l.b16 %v345
  %v422 = vunpack.c.h.b16 %v345
  %v423 = vunpack.c.l.b16 %v346
  %v424 = vunpack.c.h.b16 %v346
  %v425 = vunpack.c.l.b16 %v347
  %v426 = vunpack.c.h.b16 %v347
  %v427 = vunpack.c.l.b16 %v348
  %v428 = vunpack.c.h.b16 %v348
  %v429 = vunpack.c.l.b16 %v349
  %v430 = vunpack.c.h.b16 %v349
  %v431 = vunpack.c.l.b16 %v350
  %v432 = vunpack.c.h.b16 %v350
  %v433 = vunpack.c.l.b16 %v351
  %v434 = vunpack.c.h.b16 %v351
  %v435 = vunpack.c.l.b16 %v352
  %v436 = vunpack.c.h.b16 %v352
  %v437 = vunpack.c.l.b16 %v353
  %v438 = vunpack.c.h.b16 %v353
  %v439 = vunpack.c.l.b16 %v354
  %v440 = vunpack.c.h.b16 %v354
  %v441 = vunpack.c.l.b16 %v355
  %v442 = vunpack.c.h.b16 %v355
  %v443 = vunpack.c.l.b16 %v356
  %v444 = vunpack.c.h.b16 %v356
  %v445 = vunpack.c.l.b16 %v357
  %v446 = vunpack.c.h.b16 %v357
  %v447 = vunpack.c.l.b16 %v358
  %v448 = vunpack.c.h.b16 %v358
  %v449 = vunpack.c.l.b16 %v359
  %v450 = vunpack.c.h.b16 %v359
  %v451 = vunpack.c.l.b16 %v360
  %v452 = vunpack.c.h.b16 %v360
  %v453 = vunpack.c.l.b16 %v361
  %v454 = vunpack.c.h.b16 %v361
  %v455 = vunpack.c.l.b16 %v362
  %v456 = vunpack.c.h.b16 %v362
  %v457 = vunpack.c.l.b16 %v363
  %v458 = vunpack.c.h.b16 %v363
  %v459 = vunpack.c.l.b16 %v364
  %v460 = vunpack.c.h.b16 %v364
  %v461 = vpack.c.b16 %v401, %v397
  %v462 = vpack.c.b16 %v402, %v398
  %v463 = vpack.c.b16 %v403, %v399
  %v464 = vpack.c.b16 %v404, %v400
  %v465 = vpack.c.b16 %v409, %v405
  %v466 = vpack.c.b16 %v410, %v406
  %v467 = vpack.c.b16 %v411, %v407
  %v468 = vpack.c.b16 %v412, %v408
  %v469 = vpack.c.b16 %v417, %v413
  %v470 = vpack.c.b16 %v418, %v414
  %v471 = vpack.c.b16 %v419, %v415
  %v472 = vpack.c.b16 %v420, %v416
  %v473 = vpack.c.b16 %v425, %v421
  %v474 = vpack.c.b16 %v426, %v422
  %v475 = vpack.c.b16 %v427, %v423
  %v476 = vpack.c.b16 %v428, %v424
  %v477 = vpack.c.b16 %v433, %v429
  %v478 = vpack.c.b16 %v434, %v430
  %v479 = vpack.c.b16 %v435, %v431
  %v480 = vpack.c.b16 %v436, %v432
  %v481 = vpack.c.b16 %v441, %v437
  %v482 = vpack.c.b16 %v442, %v438
  %v483 = vpack.c.b16 %v443, %v439
  %v484 = vpack.c.b16 %v444, %v440
  %v485 = vpack.c.b16 %v449, %v445
  %v486 = vpack.c.b16 %v450, %v446
  %v487 = vpack.c.b16 %v451, %v447
  %v488 = vpack.c.b16 %v452, %v448
  %v489 = vpack.c.b16 %v457, %v453
  %v490 = vpack.c.b16 %v458, %v454
  %v491 = vpack.c.b16 %v459, %v455
  %v492 = vpack.c.b16 %v460, %v456
  %525 = vmatprep.subr.bf16.mxu0 %v462
  %526 = vmatpush1.bf16.msra.mxu0 %v461
  %527 = vmatprep.subr.bf16.mxu0 %v466
  %528 = vmatpush1.bf16.msra.mxu0 %v465
  %529 = vmatprep.subr.bf16.mxu0 %v470
  %530 = vmatpush1.bf16.msra.mxu0 %v469
  %531 = vmatprep.subr.bf16.mxu0 %v474
  %532 = vmatpush1.bf16.msra.mxu0 %v473
  %533 = vmatprep.subr.bf16.mxu0 %v478
  %534 = vmatpush1.bf16.msra.mxu0 %v477
  %535 = vmatprep.subr.bf16.mxu0 %v482
  %536 = vmatpush1.bf16.msra.mxu0 %v481
  %537 = vmatprep.subr.bf16.mxu0 %v486
  %538 = vmatpush1.bf16.msra.mxu0 %v485
  %539 = vmatprep.subr.bf16.mxu0 %v490
  %540 = vmatpush1.bf16.msra.mxu0 %v489
  %541 = vmatprep.subr.bf16.mxu0 0
  %542 = vmatpush1.bf16.msra.mxu0 0
  %543 = vmatprep.subr.bf16.mxu0 0
  %544 = vmatpush1.bf16.msra.mxu0 0
  %545 = vmatprep.subr.bf16.mxu0 0
  %546 = vmatpush1.bf16.msra.mxu0 0
  %547 = vmatprep.subr.bf16.mxu0 0
  %548 = vmatpush1.bf16.msra.mxu0 0
  %549 = vmatprep.subr.bf16.mxu0 0
  %550 = vmatpush1.bf16.msra.mxu0 0
  %551 = vmatprep.subr.bf16.mxu0 0
  %552 = vmatpush1.bf16.msra.mxu0 0
  %553 = vmatprep.subr.bf16.mxu0 0
  %554 = vmatpush1.bf16.msra.mxu0 0
  %555 = vmatprep.subr.bf16.mxu0 0
  %556 = vmatpush1.bf16.msra.mxu0 0
  %557 = vmatprep.mubr.bf16.mxu0 0
  %558 = vmatmul.mubr.bf16.gmra.mrb[0].mxu0 0
  %v559 = vpop.f32.mrb[0].mxu0
  %v560 = vadd.f32 0.0, %v559
  %v561 = vpop.f32.mrb[0].mxu0
  %v562 = vadd.f32 0.0, %v561
  %v563 = vpop.f32.mrb[0].mxu0
  %v564 = vpop.f32.mrb[0].mxu0
  %565 = vdwg.mxu0
  %566 = vmatprep.subr.bf16.mxu0 %v464
  %567 = vmatpush1.bf16.msra.mxu0 %v463
  %568 = vmatprep.subr.bf16.mxu0 %v468
  %569 = vmatpush1.bf16.msra.mxu0 %v467
  %570 = vmatprep.subr.bf16.mxu0 %v472
  %571 = vmatpush1.bf16.msra.mxu0 %v471
  %572 = vmatprep.subr.bf16.mxu0 %v476
  %573 = vmatpush1.bf16.msra.mxu0 %v475
  %574 = vmatprep.subr.bf16.mxu0 %v480
  %575 = vmatpush1.bf16.msra.mxu0 %v479
  %576 = vmatprep.subr.bf16.mxu0 %v484
  %577 = vmatpush1.bf16.msra.mxu0 %v483
  %578 = vmatprep.subr.bf16.mxu0 %v488
  %579 = vmatpush1.bf16.msra.mxu0 %v487
  %580 = vmatprep.subr.bf16.mxu0 %v492
  %581 = vmatpush1.bf16.msra.mxu0 %v491
  %582 = vmatprep.subr.bf16.mxu0 0
  %583 = vmatpush1.bf16.msra.mxu0 0
  %584 = vmatprep.subr.bf16.mxu0 0
  %585 = vmatpush1.bf16.msra.mxu0 0
  %586 = vmatprep.subr.bf16.mxu0 0
  %587 = vmatpush1.bf16.msra.mxu0 0
  %588 = vmatprep.subr.bf16.mxu0 0
  %589 = vmatpush1.bf16.msra.mxu0 0
  %590 = vmatprep.subr.bf16.mxu0 0
  %591 = vmatpush1.bf16.msra.mxu0 0
  %592 = vmatprep.subr.bf16.mxu0 0
  %593 = vmatpush1.bf16.msra.mxu0 0
  %594 = vmatprep.subr.bf16.mxu0 0
  %595 = vmatpush1.bf16.msra.mxu0 0
  %596 = vmatprep.subr.bf16.mxu0 0
  %597 = vmatpush1.bf16.msra.mxu0 0
  %598 = vmatprep.mubr.bf16.mxu0 0
  %599 = vmatmul.mubr.bf16.gmra.mrb[0].mxu0 0
  %v600 = vpop.f32.mrb[0].mxu0
  %v601 = vadd.f32 0.0, %v600
  %v602 = vpop.f32.mrb[0].mxu0
  %v603 = vadd.f32 0.0, %v602
  %v604 = vpop.f32.mrb[0].mxu0
  %v605 = vpop.f32.mrb[0].mxu0
  %606 = vdwg.mxu0
  %v607 = vadd.f32 %v329, %v560
  %v608 = vadd.f32 %v330, %v562
  %v609 = vadd.f32 %v331, %v601
  %v610 = vadd.f32 %v332, %v603
  %v611 = vxor.u32 %v607, 2147483648
  %v612 = vxor.u32 %v608, 2147483648
  %v613 = vxor.u32 %v609, 2147483648
  %v614 = vmul.f32 %v611, 1.442695
  %v615 = vpow.pop %v614
  %v616 = vmul.f32 %v612, 1.442695
  %v617 = vpow.pop %v616
  %v618 = vmul.f32 %v613, 1.442695
  %v619 = vpow.pop %v618
  %v620 = vadd.f32 %v615, 1.0
  %v621 = vadd.f32 %v617, 1.0
  %v622 = vadd.f32 %v619, 1.0
  %v623 = vrcp.pop %v620
  %v624 = vmul.f32 1.0, %v623
  %v625 = vrcp.pop %v621
  %v626 = vmul.f32 1.0, %v625
  %v627 = vrcp.pop %v622
  %v628 = vmul.f32 1.0, %v627
  %v629 = vtanh.pop %v610
  %v630 = vmul.f32 %v626, 0.0
  %v631 = vmul.f32 %v624, %v629
  %v632 = vadd.f32 %v630, %v631
  %v633 = vtanh.pop %v632
  %v634 = vmul.f32 %v628, %v633
  %v635 = vpack.c.bf16 %v634, %v634
  %v636 = vld [vmem:[%s2] sm:$0xff]
  %v637 = vld [vmem:[%s2 + $0x8] sm:$0xff]
  %v638 = vld [vmem:[%s2 + $0x10] sm:$0xff]
  %v639 = vld [vmem:[%s2 + $0x18] sm:$0xff]
  %v640 = vld [vmem:[%s2 + $0x20] sm:$0xff]
  %v641 = vld [vmem:[%s2 + $0x28] sm:$0xff]
  %v642 = vld [vmem:[%s2 + $0x30] sm:$0xff]
  %v643 = vld [vmem:[%s2 + $0x38] sm:$0xff]
  %v644 = vld [vmem:[%s2 + $0x40] sm:$0xff]
  %v645 = vld [vmem:[%s2 + $0x48] sm:$0xff]
  %v646 = vld [vmem:[%s2 + $0x50] sm:$0xff]
  %v647 = vld [vmem:[%s2 + $0x58] sm:$0xff]
  %v648 = vld [vmem:[%s2 + $0x60] sm:$0xff]
  %v649 = vld [vmem:[%s2 + $0x68] sm:$0xff]
  %v650 = vld [vmem:[%s2 + $0x70] sm:$0xff]
  %v651 = vld [vmem:[%s2 + $0x78] sm:$0xff]
  %v652 = vld [vmem:[%s2 + $0x80] sm:$0xff]
  %v653 = vld [vmem:[%s2 + $0x88] sm:$0xff]
  %v654 = vld [vmem:[%s2 + $0x90] sm:$0xff]
  %v655 = vld [vmem:[%s2 + $0x98] sm:$0xff]
  %v656 = vld [vmem:[%s2 + $0xa0] sm:$0xff]
  %v657 = vld [vmem:[%s2 + $0xa8] sm:$0xff]
  %v658 = vld [vmem:[%s2 + $0xb0] sm:$0xff]
  %v659 = vld [vmem:[%s2 + $0xb8] sm:$0xff]
  %v660 = vld [vmem:[%s2 + $0xc0] sm:$0xff]
  %v661 = vld [vmem:[%s2 + $0xc8] sm:$0xff]
  %v662 = vld [vmem:[%s2 + $0xd0] sm:$0xff]
  %v663 = vld [vmem:[%s2 + $0xd8] sm:$0xff]
  %v664 = vld [vmem:[%s2 + $0xe0] sm:$0xff]
  %v665 = vld [vmem:[%s2 + $0xe8] sm:$0xff]
  %v666 = vld [vmem:[%s2 + $0xf0] sm:$0xff]
  %v667 = vld [vmem:[%s2 + $0xf8] sm:$0xff]
  %v700 = vunpack.c.l.b16 %v636
  %v701 = vunpack.c.h.b16 %v636
  %v702 = vunpack.c.l.b16 %v637
  %v703 = vunpack.c.h.b16 %v637
  %v704 = vunpack.c.l.b16 %v638
  %v705 = vunpack.c.h.b16 %v638
  %v706 = vunpack.c.l.b16 %v639
  %v707 = vunpack.c.h.b16 %v639
  %v708 = vunpack.c.l.b16 %v640
  %v709 = vunpack.c.h.b16 %v640
  %v710 = vunpack.c.l.b16 %v641
  %v711 = vunpack.c.h.b16 %v641
  %v712 = vunpack.c.l.b16 %v642
  %v713 = vunpack.c.h.b16 %v642
  %v714 = vunpack.c.l.b16 %v643
  %v715 = vunpack.c.h.b16 %v643
  %v716 = vunpack.c.l.b16 %v644
  %v717 = vunpack.c.h.b16 %v644
  %v718 = vunpack.c.l.b16 %v645
  %v719 = vunpack.c.h.b16 %v645
  %v720 = vunpack.c.l.b16 %v646
  %v721 = vunpack.c.h.b16 %v646
  %v722 = vunpack.c.l.b16 %v647
  %v723 = vunpack.c.h.b16 %v647
  %v724 = vunpack.c.l.b16 %v648
  %v725 = vunpack.c.h.b16 %v648
  %v726 = vunpack.c.l.b16 %v649
  %v727 = vunpack.c.h.b16 %v649
  %v728 = vunpack.c.l.b16 %v650
  %v729 = vunpack.c.h.b16 %v650
  %v730 = vunpack.c.l.b16 %v651
  %v731 = vunpack.c.h.b16 %v651
  %v732 = vunpack.c.l.b16 %v652
  %v733 = vunpack.c.h.b16 %v652
  %v734 = vunpack.c.l.b16 %v653
  %v735 = vunpack.c.h.b16 %v653
  %v736 = vunpack.c.l.b16 %v654
  %v737 = vunpack.c.h.b16 %v654
  %v738 = vunpack.c.l.b16 %v655
  %v739 = vunpack.c.h.b16 %v655
  %v740 = vunpack.c.l.b16 %v656
  %v741 = vunpack.c.h.b16 %v656
  %v742 = vunpack.c.l.b16 %v657
  %v743 = vunpack.c.h.b16 %v657
  %v744 = vunpack.c.l.b16 %v658
  %v745 = vunpack.c.h.b16 %v658
  %v746 = vunpack.c.l.b16 %v659
  %v747 = vunpack.c.h.b16 %v659
  %v748 = vunpack.c.l.b16 %v660
  %v749 = vunpack.c.h.b16 %v660
  %v750 = vunpack.c.l.b16 %v661
  %v751 = vunpack.c.h.b16 %v661
  %v752 = vunpack.c.l.b16 %v662
  %v753 = vunpack.c.h.b16 %v662
  %v754 = vunpack.c.l.b16 %v663
  %v755 = vunpack.c.h.b16 %v663
  %v756 = vunpack.c.l.b16 %v664
  %v757 = vunpack.c.h.b16 %v664
  %v758 = vunpack.c.l.b16 %v665
  %v759 = vunpack.c.h.b16 %v665
  %v760 = vunpack.c.l.b16 %v666
  %v761 = vunpack.c.h.b16 %v666
  %v762 = vunpack.c.l.b16 %v667
  %v763 = vunpack.c.h.b16 %v667
  %v764 = vpack.c.b16 %v704, %v700
  %v765 = vpack.c.b16 %v705, %v701
  %v766 = vpack.c.b16 %v706, %v702
  %v767 = vpack.c.b16 %v707, %v703
  %v768 = vpack.c.b16 %v712, %v708
  %v769 = vpack.c.b16 %v713, %v709
  %v770 = vpack.c.b16 %v714, %v710
  %v771 = vpack.c.b16 %v715, %v711
  %v772 = vpack.c.b16 %v720, %v716
  %v773 = vpack.c.b16 %v721, %v717
  %v774 = vpack.c.b16 %v722, %v718
  %v775 = vpack.c.b16 %v723, %v719
  %v776 = vpack.c.b16 %v728, %v724
  %v777 = vpack.c.b16 %v729, %v725
  %v778 = vpack.c.b16 %v730, %v726
  %v779 = vpack.c.b16 %v731, %v727
  %v780 = vpack.c.b16 %v736, %v732
  %v781 = vpack.c.b16 %v737, %v733
  %v782 = vpack.c.b16 %v738, %v734
  %v783 = vpack.c.b16 %v739, %v735
  %v784 = vpack.c.b16 %v744, %v740
  %v785 = vpack.c.b16 %v745, %v741
  %v786 = vpack.c.b16 %v746, %v742
  %v787 = vpack.c.b16 %v747, %v743
  %v788 = vpack.c.b16 %v752, %v748
  %v789 = vpack.c.b16 %v753, %v749
  %v790 = vpack.c.b16 %v754, %v750
  %v791 = vpack.c.b16 %v755, %v751
  %v792 = vpack.c.b16 %v760, %v756
  %v793 = vpack.c.b16 %v761, %v757
  %v794 = vpack.c.b16 %v762, %v758
  %v795 = vpack.c.b16 %v763, %v759
  %828 = vmatprep.subr.bf16.mxu0 %v765
  %829 = vmatpush1.bf16.msra.mxu0 %v764
  %830 = vmatprep.subr.bf16.mxu0 %v769
  %831 = vmatpush1.bf16.msra.mxu0 %v768
  %832 = vmatprep.subr.bf16.mxu0 %v773
  %833 = vmatpush1.bf16.msra.mxu0 %v772
  %834 = vmatprep.subr.bf16.mxu0 %v777
  %835 = vmatpush1.bf16.msra.mxu0 %v776
  %836 = vmatprep.subr.bf16.mxu0 %v781
  %837 = vmatpush1.bf16.msra.mxu0 %v780
  %838 = vmatprep.subr.bf16.mxu0 %v785
  %839 = vmatpush1.bf16.msra.mxu0 %v784
  %840 = vmatprep.subr.bf16.mxu0 %v789
  %841 = vmatpush1.bf16.msra.mxu0 %v788
  %842 = vmatprep.subr.bf16.mxu0 %v793
  %843 = vmatpush1.bf16.msra.mxu0 %v792
  %844 = vmatprep.subr.bf16.mxu0 0
  %845 = vmatpush1.bf16.msra.mxu0 0
  %846 = vmatprep.subr.bf16.mxu0 0
  %847 = vmatpush1.bf16.msra.mxu0 0
  %848 = vmatprep.subr.bf16.mxu0 0
  %849 = vmatpush1.bf16.msra.mxu0 0
  %850 = vmatprep.subr.bf16.mxu0 0
  %851 = vmatpush1.bf16.msra.mxu0 0
  %852 = vmatprep.subr.bf16.mxu0 0
  %853 = vmatpush1.bf16.msra.mxu0 0
  %854 = vmatprep.subr.bf16.mxu0 0
  %855 = vmatpush1.bf16.msra.mxu0 0
  %856 = vmatprep.subr.bf16.mxu0 0
  %857 = vmatpush1.bf16.msra.mxu0 0
  %858 = vmatprep.subr.bf16.mxu0 0
  %859 = vmatpush1.bf16.msra.mxu0 0
  %860 = vmatprep.mubr.bf16.mxu0 0
  %861 = vmatmul.mubr.bf16.gmra.mrb[0].mxu0 %v635
  %v862 = vpop.f32.mrb[0].mxu0
  %v863 = vadd.f32 %v282, %v862
  %v864 = vpop.f32.mrb[0].mxu0
  %v865 = vadd.f32 %v284, %v864
  %v866 = vpop.f32.mrb[0].mxu0
  %v867 = vpop.f32.mrb[0].mxu0
  %868 = vdwg.mxu0
  %869 = vmatprep.subr.bf16.mxu0 %v767
  %870 = vmatpush1.bf16.msra.mxu0 %v766
  %871 = vmatprep.subr.bf16.mxu0 %v771
  %872 = vmatpush1.bf16.msra.mxu0 %v770
  %873 = vmatprep.subr.bf16.mxu0 %v775
  %874 = vmatpush1.bf16.msra.mxu0 %v774
  %875 = vmatprep.subr.bf16.mxu0 %v779
  %876 = vmatpush1.bf16.msra.mxu0 %v778
  %877 = vmatprep.subr.bf16.mxu0 %v783
  %878 = vmatpush1.bf16.msra.mxu0 %v782
  %879 = vmatprep.subr.bf16.mxu0 %v787
  %880 = vmatpush1.bf16.msra.mxu0 %v786
  %881 = vmatprep.subr.bf16.mxu0 %v791
  %882 = vmatpush1.bf16.msra.mxu0 %v790
  %883 = vmatprep.subr.bf16.mxu0 %v795
  %884 = vmatpush1.bf16.msra.mxu0 %v794
  %885 = vmatprep.subr.bf16.mxu0 0
  %886 = vmatpush1.bf16.msra.mxu0 0
  %887 = vmatprep.subr.bf16.mxu0 0
  %888 = vmatpush1.bf16.msra.mxu0 0
  %889 = vmatprep.subr.bf16.mxu0 0
  %890 = vmatpush1.bf16.msra.mxu0 0
  %891 = vmatprep.subr.bf16.mxu0 0
  %892 = vmatpush1.bf16.msra.mxu0 0
  %893 = vmatprep.subr.bf16.mxu0 0
  %894 = vmatpush1.bf16.msra.mxu0 0
  %895 = vmatprep.subr.bf16.mxu0 0
  %896 = vmatpush1.bf16.msra.mxu0 0
  %897 = vmatprep.subr.bf16.mxu0 0
  %898 = vmatpush1.bf16.msra.mxu0 0
  %899 = vmatprep.subr.bf16.mxu0 0
  %900 = vmatpush1.bf16.msra.mxu0 0
  %901 = vmatprep.mubr.bf16.mxu0 0
  %902 = vmatmul.mubr.bf16.gmra.mrb[0].mxu0 %v635
  %v903 = vpop.f32.mrb[0].mxu0
  %v904 = vadd.f32 %v323, %v903
  %v905 = vpop.f32.mrb[0].mxu0
  %v906 = vadd.f32 %v325, %v905
  %v907 = vpop.f32.mrb[0].mxu0
  %v908 = vpop.f32.mrb[0].mxu0
  %909 = vdwg.mxu0
  %v910 = vxor.u32 %v863, 2147483648
  %v911 = vxor.u32 %v865, 2147483648
  %v912 = vxor.u32 %v904, 2147483648
  %v913 = vmul.f32 %v910, 1.442695
  %v914 = vpow.pop %v913
  %v915 = vmul.f32 %v911, 1.442695
  %v916 = vpow.pop %v915
  %v917 = vmul.f32 %v912, 1.442695
  %v918 = vpow.pop %v917
  %v919 = vadd.f32 %v914, 1.0
  %v920 = vadd.f32 %v916, 1.0
  %v921 = vadd.f32 %v918, 1.0
  %v922 = vrcp.pop %v919
  %v923 = vmul.f32 1.0, %v922
  %v924 = vrcp.pop %v920
  %v925 = vmul.f32 1.0, %v924
  %v926 = vrcp.pop %v921
  %v927 = vmul.f32 1.0, %v926
  %v928 = vtanh.pop %v906
  %v929 = vmul.f32 %v925, 0.0
  %v930 = vmul.f32 %v923, %v928
  %v931 = vadd.f32 %v929, %v930
  %v932 = vtanh.pop %v931
  %v933 = vmul.f32 %v927, %v932
  %v934 = vpack.c.bf16 %v933, %v933
  %935 = vmatprep.subr.bf16.mxu0 %v184
  %936 = vmatpush1.bf16.msra.mxu0 %v183
  %937 = vmatprep.subr.bf16.mxu0 %v188
  %938 = vmatpush1.bf16.msra.mxu0 %v187
  %939 = vmatprep.subr.bf16.mxu0 %v192
  %940 = vmatpush1.bf16.msra.mxu0 %v191
  %941 = vmatprep.subr.bf16.mxu0 %v196
  %942 = vmatpush1.bf16.msra.mxu0 %v195
  %943 = vmatprep.subr.bf16.mxu0 %v200
  %944 = vmatpush1.bf16.msra.mxu0 %v199
  %945 = vmatprep.subr.bf16.mxu0 %v204
  %946 = vmatpush1.bf16.msra.mxu0 %v203
  %947 = vmatprep.subr.bf16.mxu0 %v208
  %948 = vmatpush1.bf16.msra.mxu0 %v207
  %949 = vmatprep.subr.bf16.mxu0 %v212
  %950 = vmatpush1.bf16.msra.mxu0 %v211
  %951 = vmatprep.subr.bf16.mxu0 0
  %952 = vmatpush1.bf16.msra.mxu0 0
  %953 = vmatprep.subr.bf16.mxu0 0
  %954 = vmatpush1.bf16.msra.mxu0 0
  %955 = vmatprep.subr.bf16.mxu0 0
  %956 = vmatpush1.bf16.msra.mxu0 0
  %957 = vmatprep.subr.bf16.mxu0 0
  %958 = vmatpush1.bf16.msra.mxu0 0
  %959 = vmatprep.subr.bf16.mxu0 0
  %960 = vmatpush1.bf16.msra.mxu0 0
  %961 = vmatprep.subr.bf16.mxu0 0
  %962 = vmatpush1.bf16.msra.mxu0 0
  %963 = vmatprep.subr.bf16.mxu0 0
  %964 = vmatpush1.bf16.msra.mxu0 0
  %965 = vmatprep.subr.bf16.mxu0 0
  %966 = vmatpush1.bf16.msra.mxu0 0
  %967 = vmatprep.mubr.bf16.mxu0 0
  %968 = vmatmul.mubr.bf16.gmra.mrb[0].mxu0 %v934
  %v969 = vpop.f32.mrb[0].mxu0
  %v970 = vadd.f32 %v38, %v969
  %v971 = vpop.f32.mrb[0].mxu0
  %v972 = vadd.f32 %v42, %v971
  %v973 = vpop.f32.mrb[0].mxu0
  %v974 = vpop.f32.mrb[0].mxu0
  %975 = vdwg.mxu0
  %976 = vmatprep.subr.bf16.mxu0 %v186
  %977 = vmatpush1.bf16.msra.mxu0 %v185
  %978 = vmatprep.subr.bf16.mxu0 %v190
  %979 = vmatpush1.bf16.msra.mxu0 %v189
  %980 = vmatprep.subr.bf16.mxu0 %v194
  %981 = vmatpush1.bf16.msra.mxu0 %v193
  %982 = vmatprep.subr.bf16.mxu0 %v198
  %983 = vmatpush1.bf16.msra.mxu0 %v197
  %984 = vmatprep.subr.bf16.mxu0 %v202
  %985 = vmatpush1.bf16.msra.mxu0 %v201
  %986 = vmatprep.subr.bf16.mxu0 %v206
  %987 = vmatpush1.bf16.msra.mxu0 %v205
  %988 = vmatprep.subr.bf16.mxu0 %v210
  %989 = vmatpush1.bf16.msra.mxu0 %v209
  %990 = vmatprep.subr.bf16.mxu0 %v214
  %991 = vmatpush1.bf16.msra.mxu0 %v213
  %992 = vmatprep.subr.bf16.mxu0 0
  %993 = vmatpush1.bf16.msra.mxu0 0
  %994 = vmatprep.subr.bf16.mxu0 0
  %995 = vmatpush1.bf16.msra.mxu0 0
  %996 = vmatprep.subr.bf16.mxu0 0
  %997 = vmatpush1.bf16.msra.mxu0 0
  %998 = vmatprep.subr.bf16.mxu0 0
  %999 = vmatpush1.bf16.msra.mxu0 0
  %1000 = vmatprep.subr.bf16.mxu0 0
  %1001 = vmatpush1.bf16.msra.mxu0 0
  %1002 = vmatprep.subr.bf16.mxu0 0
  %1003 = vmatpush1.bf16.msra.mxu0 0
  %1004 = vmatprep.subr.bf16.mxu0 0
  %1005 = vmatpush1.bf16.msra.mxu0 0
  %1006 = vmatprep.subr.bf16.mxu0 0
  %1007 = vmatpush1.bf16.msra.mxu0 0
  %1008 = vmatprep.mubr.bf16.mxu0 0
  %1009 = vmatmul.mubr.bf16.gmra.mrb[0].mxu0 %v934
  %v1010 = vpop.f32.mrb[0].mxu0
  %v1011 = vadd.f32 %v46, %v1010
  %v1012 = vpop.f32.mrb[0].mxu0
  %v1013 = vadd.f32 %v50, %v1012
  %v1014 = vpop.f32.mrb[0].mxu0
  %v1015 = vpop.f32.mrb[0].mxu0
  %1016 = vdwg.mxu0
  %s1017 = scalar_lea.vmem %s0, 32
  %v1018 = vld [vmem:[%s1017] sm:$0xff]
  %v1019 = vld [vmem:[%s1017 + $0x8] sm:$0xff]
  %v1020 = vld [vmem:[%s1017 + $0x10] sm:$0xff]
  %v1021 = vld [vmem:[%s1017 + $0x18] sm:$0xff]
  %1022 = vmatprep.subr.bf16.mxu0 %v462
  %1023 = vmatpush1.bf16.msra.mxu0 %v461
  %1024 = vmatprep.subr.bf16.mxu0 %v466
  %1025 = vmatpush1.bf16.msra.mxu0 %v465
  %1026 = vmatprep.subr.bf16.mxu0 %v470
  %1027 = vmatpush1.bf16.msra.mxu0 %v469
  %1028 = vmatprep.subr.bf16.mxu0 %v474
  %1029 = vmatpush1.bf16.msra.mxu0 %v473
  %1030 = vmatprep.subr.bf16.mxu0 %v478
  %1031 = vmatpush1.bf16.msra.mxu0 %v477
  %1032 = vmatprep.subr.bf16.mxu0 %v482
  %1033 = vmatpush1.bf16.msra.mxu0 %v481
  %1034 = vmatprep.subr.bf16.mxu0 %v486
  %1035 = vmatpush1.bf16.msra.mxu0 %v485
  %1036 = vmatprep.subr.bf16.mxu0 %v490
  %1037 = vmatpush1.bf16.msra.mxu0 %v489
  %1038 = vmatprep.subr.bf16.mxu0 0
  %1039 = vmatpush1.bf16.msra.mxu0 0
  %1040 = vmatprep.subr.bf16.mxu0 0
  %1041 = vmatpush1.bf16.msra.mxu0 0
  %1042 = vmatprep.subr.bf16.mxu0 0
  %1043 = vmatpush1.bf16.msra.mxu0 0
  %1044 = vmatprep.subr.bf16.mxu0 0
  %1045 = vmatpush1.bf16.msra.mxu0 0
  %1046 = vmatprep.subr.bf16.mxu0 0
  %1047 = vmatpush1.bf16.msra.mxu0 0
  %1048 = vmatprep.subr.bf16.mxu0 0
  %1049 = vmatpush1.bf16.msra.mxu0 0
  %1050 = vmatprep.subr.bf16.mxu0 0
  %1051 = vmatpush1.bf16.msra.mxu0 0
  %1052 = vmatprep.subr.bf16.mxu0 0
  %1053 = vmatpush1.bf16.msra.mxu0 0
  %1054 = vmatprep.mubr.bf16.mxu0 0
  %1055 = vmatmul.mubr.bf16.gmra.mrb[0].mxu0 %v635
  %v1056 = vpop.f32.mrb[0].mxu0
  %v1057 = vadd.f32 0.0, %v1056
  %v1058 = vpop.f32.mrb[0].mxu0
  %v1059 = vadd.f32 0.0, %v1058
  %v1060 = vpop.f32.mrb[0].mxu0
  %v1061 = vpop.f32.mrb[0].mxu0
  %1062 = vdwg.mxu0
  %1063 = vmatprep.subr.bf16.mxu0 %v464
  %1064 = vmatpush1.bf16.msra.mxu0 %v463
  %1065 = vmatprep.subr.bf16.mxu0 %v468
  %1066 = vmatpush1.bf16.msra.mxu0 %v467
  %1067 = vmatprep.subr.bf16.mxu0 %v472
  %1068 = vmatpush1.bf16.msra.mxu0 %v471
  %1069 = vmatprep.subr.bf16.mxu0 %v476
  %1070 = vmatpush1.bf16.msra.mxu0 %v475
  %1071 = vmatprep.subr.bf16.mxu0 %v480
  %1072 = vmatpush1.bf16.msra.mxu0 %v479
  %1073 = vmatprep.subr.bf16.mxu0 %v484
  %1074 = vmatpush1.bf16.msra.mxu0 %v483
  %1075 = vmatprep.subr.bf16.mxu0 %v488
  %1076 = vmatpush1.bf16.msra.mxu0 %v487
  %1077 = vmatprep.subr.bf16.mxu0 %v492
  %1078 = vmatpush1.bf16.msra.mxu0 %v491
  %1079 = vmatprep.subr.bf16.mxu0 0
  %1080 = vmatpush1.bf16.msra.mxu0 0
  %1081 = vmatprep.subr.bf16.mxu0 0
  %1082 = vmatpush1.bf16.msra.mxu0 0
  %1083 = vmatprep.subr.bf16.mxu0 0
  %1084 = vmatpush1.bf16.msra.mxu0 0
  %1085 = vmatprep.subr.bf16.mxu0 0
  %1086 = vmatpush1.bf16.msra.mxu0 0
  %1087 = vmatprep.subr.bf16.mxu0 0
  %1088 = vmatpush1.bf16.msra.mxu0 0
  %1089 = vmatprep.subr.bf16.mxu0 0
  %1090 = vmatpush1.bf16.msra.mxu0 0
  %1091 = vmatprep.subr.bf16.mxu0 0
  %1092 = vmatpush1.bf16.msra.mxu0 0
  %1093 = vmatprep.subr.bf16.mxu0 0
  %1094 = vmatpush1.bf16.msra.mxu0 0
  %1095 = vmatprep.mubr.bf16.mxu0 0
  %1096 = vmatmul.mubr.bf16.gmra.mrb[0].mxu0 %v635
  %v1097 = vpop.f32.mrb[0].mxu0
  %v1098 = vadd.f32 0.0, %v1097
  %v1099 = vpop.f32.mrb[0].mxu0
  %v1100 = vadd.f32 0.0, %v1099
  %v1101 = vpop.f32.mrb[0].mxu0
  %v1102 = vpop.f32.mrb[0].mxu0
  %1103 = vdwg.mxu0
  %v1104 = vadd.f32 %v1018, %v1057
  %v1105 = vadd.f32 %v1019, %v1059
  %v1106 = vadd.f32 %v1020, %v1098
  %v1107 = vadd.f32 %v1021, %v1100
  %v1108 = vxor.u32 %v1104, 2147483648
  %v1109 = vxor.u32 %v1105, 2147483648
  %v1110 = vxor.u32 %v1106, 2147483648
  %v1111 = vmul.f32 %v1108, 1.442695
  %v1112 = vpow.pop %v1111
  %v1113 = vmul.f32 %v1109, 1.442695
  %v1114 = vpow.pop %v1113
  %v1115 = vmul.f32 %v1110, 1.442695
  %v1116 = vpow.pop %v1115
  %v1117 = vadd.f32 %v1112, 1.0
  %v1118 = vadd.f32 %v1114, 1.0
  %v1119 = vadd.f32 %v1116, 1.0
  %v1120 = vrcp.pop %v1117
  %v1121 = vmul.f32 1.0, %v1120
  %v1122 = vrcp.pop %v1118
  %v1123 = vmul.f32 1.0, %v1122
  %v1124 = vrcp.pop %v1119
  %v1125 = vmul.f32 1.0, %v1124
  %v1126 = vtanh.pop %v1107
  %v1127 = vmul.f32 %v1123, %v632
  %v1128 = vmul.f32 %v1121, %v1126
  %v1129 = vadd.f32 %v1127, %v1128
  %v1130 = vtanh.pop %v1129
  %v1131 = vmul.f32 %v1125, %v1130
  %v1132 = vpack.c.bf16 %v1131, %v1131
  %1133 = vmatprep.subr.bf16.mxu0 %v765
  %1134 = vmatpush1.bf16.msra.mxu0 %v764
  %1135 = vmatprep.subr.bf16.mxu0 %v769
  %1136 = vmatpush1.bf16.msra.mxu0 %v768
  %1137 = vmatprep.subr.bf16.mxu0 %v773
  %1138 = vmatpush1.bf16.msra.mxu0 %v772
  %1139 = vmatprep.subr.bf16.mxu0 %v777
  %1140 = vmatpush1.bf16.msra.mxu0 %v776
  %1141 = vmatprep.subr.bf16.mxu0 %v781
  %1142 = vmatpush1.bf16.msra.mxu0 %v780
  %1143 = vmatprep.subr.bf16.mxu0 %v785
  %1144 = vmatpush1.bf16.msra.mxu0 %v784
  %1145 = vmatprep.subr.bf16.mxu0 %v789
  %1146 = vmatpush1.bf16.msra.mxu0 %v788
  %1147 = vmatprep.subr.bf16.mxu0 %v793
  %1148 = vmatpush1.bf16.msra.mxu0 %v792
  %1149 = vmatprep.subr.bf16.mxu0 0
  %1150 = vmatpush1.bf16.msra.mxu0 0
  %1151 = vmatprep.subr.bf16.mxu0 0
  %1152 = vmatpush1.bf16.msra.mxu0 0
  %1153 = vmatprep.subr.bf16.mxu0 0
  %1154 = vmatpush1.bf16.msra.mxu0 0
  %1155 = vmatprep.subr.bf16.mxu0 0
  %1156 = vmatpush1.bf16.msra.mxu0 0
  %1157 = vmatprep.subr.bf16.mxu0 0
  %1158 = vmatpush1.bf16.msra.mxu0 0
  %1159 = vmatprep.subr.bf16.mxu0 0
  %1160 = vmatpush1.bf16.msra.mxu0 0
  %1161 = vmatprep.subr.bf16.mxu0 0
  %1162 = vmatpush1.bf16.msra.mxu0 0
  %1163 = vmatprep.subr.bf16.mxu0 0
  %1164 = vmatpush1.bf16.msra.mxu0 0
  %1165 = vmatprep.mubr.bf16.mxu0 0
  %1166 = vmatmul.mubr.bf16.gmra.mrb[0].mxu0 %v1132
  %v1167 = vpop.f32.mrb[0].mxu0
  %v1168 = vadd.f32 %v970, %v1167
  %v1169 = vpop.f32.mrb[0].mxu0
  %v1170 = vadd.f32 %v972, %v1169
  %v1171 = vpop.f32.mrb[0].mxu0
  %v1172 = vpop.f32.mrb[0].mxu0
  %1173 = vdwg.mxu0
  %1174 = vmatprep.subr.bf16.mxu0 %v767
  %1175 = vmatpush1.bf16.msra.mxu0 %v766
  %1176 = vmatprep.subr.bf16.mxu0 %v771
  %1177 = vmatpush1.bf16.msra.mxu0 %v770
  %1178 = vmatprep.subr.bf16.mxu0 %v775
  %1179 = vmatpush1.bf16.msra.mxu0 %v774
  %1180 = vmatprep.subr.bf16.mxu0 %v779
  %1181 = vmatpush1.bf16.msra.mxu0 %v778
  %1182 = vmatprep.subr.bf16.mxu0 %v783
  %1183 = vmatpush1.bf16.msra.mxu0 %v782
  %1184 = vmatprep.subr.bf16.mxu0 %v787
  %1185 = vmatpush1.bf16.msra.mxu0 %v786
  %1186 = vmatprep.subr.bf16.mxu0 %v791
  %1187 = vmatpush1.bf16.msra.mxu0 %v790
  %1188 = vmatprep.subr.bf16.mxu0 %v795
  %1189 = vmatpush1.bf16.msra.mxu0 %v794
  %1190 = vmatprep.subr.bf16.mxu0 0
  %1191 = vmatpush1.bf16.msra.mxu0 0
  %1192 = vmatprep.subr.bf16.mxu0 0
  %1193 = vmatpush1.bf16.msra.mxu0 0
  %1194 = vmatprep.subr.bf16.mxu0 0
  %1195 = vmatpush1.bf16.msra.mxu0 0
  %1196 = vmatprep.subr.bf16.mxu0 0
  %1197 = vmatpush1.bf16.msra.mxu0 0
  %1198 = vmatprep.subr.bf16.mxu0 0
  %1199 = vmatpush1.bf16.msra.mxu0 0
  %1200 = vmatprep.subr.bf16.mxu0 0
  %1201 = vmatpush1.bf16.msra.mxu0 0
  %1202 = vmatprep.subr.bf16.mxu0 0
  %1203 = vmatpush1.bf16.msra.mxu0 0
  %1204 = vmatprep.subr.bf16.mxu0 0
  %1205 = vmatpush1.bf16.msra.mxu0 0
  %1206 = vmatprep.mubr.bf16.mxu0 0
  %1207 = vmatmul.mubr.bf16.gmra.mrb[0].mxu0 %v1132
  %v1208 = vpop.f32.mrb[0].mxu0
  %v1209 = vadd.f32 %v1011, %v1208
  %v1210 = vpop.f32.mrb[0].mxu0
  %v1211 = vadd.f32 %v1013, %v1210
  %v1212 = vpop.f32.mrb[0].mxu0
  %v1213 = vpop.f32.mrb[0].mxu0
  %1214 = vdwg.mxu0
  %v1215 = vxor.u32 %v1168, 2147483648
  %v1216 = vxor.u32 %v1170, 2147483648
  %v1217 = vxor.u32 %v1209, 2147483648
  %v1218 = vmul.f32 %v1215, 1.442695
  %v1219 = vpow.pop %v1218
  %v1220 = vmul.f32 %v1216, 1.442695
  %v1221 = vpow.pop %v1220
  %v1222 = vmul.f32 %v1217, 1.442695
  %v1223 = vpow.pop %v1222
  %v1224 = vadd.f32 %v1219, 1.0
  %v1225 = vadd.f32 %v1221, 1.0
  %v1226 = vadd.f32 %v1223, 1.0
  %v1227 = vrcp.pop %v1224
  %v1228 = vmul.f32 1.0, %v1227
  %v1229 = vrcp.pop %v1225
  %v1230 = vmul.f32 1.0, %v1229
  %v1231 = vrcp.pop %v1226
  %v1232 = vmul.f32 1.0, %v1231
  %v1233 = vtanh.pop %v1211
  %v1234 = vmul.f32 %v1230, %v931
  %v1235 = vmul.f32 %v1228, %v1233
  %v1236 = vadd.f32 %v1234, %v1235
  %v1237 = vtanh.pop %v1236
  %v1238 = vmul.f32 %v1232, %v1237
  %v1239 = vpack.c.bf16 %v1238, %v1238
  %1240 = vmatprep.subr.bf16.mxu0 %v184
  %1241 = vmatpush1.bf16.msra.mxu0 %v183
  %1242 = vmatprep.subr.bf16.mxu0 %v188
  %1243 = vmatpush1.bf16.msra.mxu0 %v187
  %1244 = vmatprep.subr.bf16.mxu0 %v192
  %1245 = vmatpush1.bf16.msra.mxu0 %v191
  %1246 = vmatprep.subr.bf16.mxu0 %v196
  %1247 = vmatpush1.bf16.msra.mxu0 %v195
  %1248 = vmatprep.subr.bf16.mxu0 %v200
  %1249 = vmatpush1.bf16.msra.mxu0 %v199
  %1250 = vmatprep.subr.bf16.mxu0 %v204
  %1251 = vmatpush1.bf16.msra.mxu0 %v203
  %1252 = vmatprep.subr.bf16.mxu0 %v208
  %1253 = vmatpush1.bf16.msra.mxu0 %v207
  %1254 = vmatprep.subr.bf16.mxu0 %v212
  %1255 = vmatpush1.bf16.msra.mxu0 %v211
  %1256 = vmatprep.subr.bf16.mxu0 0
  %1257 = vmatpush1.bf16.msra.mxu0 0
  %1258 = vmatprep.subr.bf16.mxu0 0
  %1259 = vmatpush1.bf16.msra.mxu0 0
  %1260 = vmatprep.subr.bf16.mxu0 0
  %1261 = vmatpush1.bf16.msra.mxu0 0
  %1262 = vmatprep.subr.bf16.mxu0 0
  %1263 = vmatpush1.bf16.msra.mxu0 0
  %1264 = vmatprep.subr.bf16.mxu0 0
  %1265 = vmatpush1.bf16.msra.mxu0 0
  %1266 = vmatprep.subr.bf16.mxu0 0
  %1267 = vmatpush1.bf16.msra.mxu0 0
  %1268 = vmatprep.subr.bf16.mxu0 0
  %1269 = vmatpush1.bf16.msra.mxu0 0
  %1270 = vmatprep.subr.bf16.mxu0 0
  %1271 = vmatpush1.bf16.msra.mxu0 0
  %1272 = vmatprep.mubr.bf16.mxu0 0
  %1273 = vmatmul.mubr.bf16.gmra.mrb[0].mxu0 %v1239
  %v1274 = vpop.f32.mrb[0].mxu0
  %v1275 = vadd.f32 %v38, %v1274
  %v1276 = vpop.f32.mrb[0].mxu0
  %v1277 = vadd.f32 %v42, %v1276
  %v1278 = vpop.f32.mrb[0].mxu0
  %v1279 = vpop.f32.mrb[0].mxu0
  %1280 = vdwg.mxu0
  %1281 = vmatprep.subr.bf16.mxu0 %v186
  %1282 = vmatpush1.bf16.msra.mxu0 %v185
  %1283 = vmatprep.subr.bf16.mxu0 %v190
  %1284 = vmatpush1.bf16.msra.mxu0 %v189
  %1285 = vmatprep.subr.bf16.mxu0 %v194
  %1286 = vmatpush1.bf16.msra.mxu0 %v193
  %1287 = vmatprep.subr.bf16.mxu0 %v198
  %1288 = vmatpush1.bf16.msra.mxu0 %v197
  %1289 = vmatprep.subr.bf16.mxu0 %v202
  %1290 = vmatpush1.bf16.msra.mxu0 %v201
  %1291 = vmatprep.subr.bf16.mxu0 %v206
  %1292 = vmatpush1.bf16.msra.mxu0 %v205
  %1293 = vmatprep.subr.bf16.mxu0 %v210
  %1294 = vmatpush1.bf16.msra.mxu0 %v209
  %1295 = vmatprep.subr.bf16.mxu0 %v214
  %1296 = vmatpush1.bf16.msra.mxu0 %v213
  %1297 = vmatprep.subr.bf16.mxu0 0
  %1298 = vmatpush1.bf16.msra.mxu0 0
  %1299 = vmatprep.subr.bf16.mxu0 0
  %1300 = vmatpush1.bf16.msra.mxu0 0
  %1301 = vmatprep.subr.bf16.mxu0 0
  %1302 = vmatpush1.bf16.msra.mxu0 0
  %1303 = vmatprep.subr.bf16.mxu0 0
  %1304 = vmatpush1.bf16.msra.mxu0 0
  %1305 = vmatprep.subr.bf16.mxu0 0
  %1306 = vmatpush1.bf16.msra.mxu0 0
  %1307 = vmatprep.subr.bf16.mxu0 0
  %1308 = vmatpush1.bf16.msra.mxu0 0
  %1309 = vmatprep.subr.bf16.mxu0 0
  %1310 = vmatpush1.bf16.msra.mxu0 0
  %1311 = vmatprep.subr.bf16.mxu0 0
  %1312 = vmatpush1.bf16.msra.mxu0 0
  %1313 = vmatprep.mubr.bf16.mxu0 0
  %1314 = vmatmul.mubr.bf16.gmra.mrb[0].mxu0 %v1239
  %v1315 = vpop.f32.mrb[0].mxu0
  %v1316 = vadd.f32 %v46, %v1315
  %v1317 = vpop.f32.mrb[0].mxu0
  %v1318 = vadd.f32 %v50, %v1317
  %v1319 = vpop.f32.mrb[0].mxu0
  %v1320 = vpop.f32.mrb[0].mxu0
  %1321 = vdwg.mxu0
  %s1322 = scalar_lea.vmem %s0, 64
  %v1323 = vld [vmem:[%s1322] sm:$0xff]
  %v1324 = vld [vmem:[%s1322 + $0x8] sm:$0xff]
  %v1325 = vld [vmem:[%s1322 + $0x10] sm:$0xff]
  %v1326 = vld [vmem:[%s1322 + $0x18] sm:$0xff]
  %1327 = vmatprep.subr.bf16.mxu0 %v462
  %1328 = vmatpush1.bf16.msra.mxu0 %v461
  %1329 = vmatprep.subr.bf16.mxu0 %v466
  %1330 = vmatpush1.bf16.msra.mxu0 %v465
  %1331 = vmatprep.subr.bf16.mxu0 %v470
  %1332 = vmatpush1.bf16.msra.mxu0 %v469
  %1333 = vmatprep.subr.bf16.mxu0 %v474
  %1334 = vmatpush1.bf16.msra.mxu0 %v473
  %1335 = vmatprep.subr.bf16.mxu0 %v478
  %1336 = vmatpush1.bf16.msra.mxu0 %v477
  %1337 = vmatprep.subr.bf16.mxu0 %v482
  %1338 = vmatpush1.bf16.msra.mxu0 %v481
  %1339 = vmatprep.subr.bf16.mxu0 %v486
  %1340 = vmatpush1.bf16.msra.mxu0 %v485
  %1341 = vmatprep.subr.bf16.mxu0 %v490
  %1342 = vmatpush1.bf16.msra.mxu0 %v489
  %1343 = vmatprep.subr.bf16.mxu0 0
  %1344 = vmatpush1.bf16.msra.mxu0 0
  %1345 = vmatprep.subr.bf16.mxu0 0
  %1346 = vmatpush1.bf16.msra.mxu0 0
  %1347 = vmatprep.subr.bf16.mxu0 0
  %1348 = vmatpush1.bf16.msra.mxu0 0
  %1349 = vmatprep.subr.bf16.mxu0 0
  %1350 = vmatpush1.bf16.msra.mxu0 0
  %1351 = vmatprep.subr.bf16.mxu0 0
  %1352 = vmatpush1.bf16.msra.mxu0 0
  %1353 = vmatprep.subr.bf16.mxu0 0
  %1354 = vmatpush1.bf16.msra.mxu0 0
  %1355 = vmatprep.subr.bf16.mxu0 0
  %1356 = vmatpush1.bf16.msra.mxu0 0
  %1357 = vmatprep.subr.bf16.mxu0 0
  %1358 = vmatpush1.bf16.msra.mxu0 0
  %1359 = vmatprep.mubr.bf16.mxu0 0
  %1360 = vmatmul.mubr.bf16.gmra.mrb[0].mxu0 %v1132
  %v1361 = vpop.f32.mrb[0].mxu0
  %v1362 = vadd.f32 0.0, %v1361
  %v1363 = vpop.f32.mrb[0].mxu0
  %v1364 = vadd.f32 0.0, %v1363
  %v1365 = vpop.f32.mrb[0].mxu0
  %v1366 = vpop.f32.mrb[0].mxu0
  %1367 = vdwg.mxu0
  %1368 = vmatprep.subr.bf16.mxu0 %v464
  %1369 = vmatpush1.bf16.msra.mxu0 %v463
  %1370 = vmatprep.subr.bf16.mxu0 %v468
  %1371 = vmatpush1.bf16.msra.mxu0 %v467
  %1372 = vmatprep.subr.bf16.mxu0 %v472
  %1373 = vmatpush1.bf16.msra.mxu0 %v471
  %1374 = vmatprep.subr.bf16.mxu0 %v476
  %1375 = vmatpush1.bf16.msra.mxu0 %v475
  %1376 = vmatprep.subr.bf16.mxu0 %v480
  %1377 = vmatpush1.bf16.msra.mxu0 %v479
  %1378 = vmatprep.subr.bf16.mxu0 %v484
  %1379 = vmatpush1.bf16.msra.mxu0 %v483
  %1380 = vmatprep.subr.bf16.mxu0 %v488
  %1381 = vmatpush1.bf16.msra.mxu0 %v487
  %1382 = vmatprep.subr.bf16.mxu0 %v492
  %1383 = vmatpush1.bf16.msra.mxu0 %v491
  %1384 = vmatprep.subr.bf16.mxu0 0
  %1385 = vmatpush1.bf16.msra.mxu0 0
  %1386 = vmatprep.subr.bf16.mxu0 0
  %1387 = vmatpush1.bf16.msra.mxu0 0
  %1388 = vmatprep.subr.bf16.mxu0 0
  %1389 = vmatpush1.bf16.msra.mxu0 0
  %1390 = vmatprep.subr.bf16.mxu0 0
  %1391 = vmatpush1.bf16.msra.mxu0 0
  %1392 = vmatprep.subr.bf16.mxu0 0
  %1393 = vmatpush1.bf16.msra.mxu0 0
  %1394 = vmatprep.subr.bf16.mxu0 0
  %1395 = vmatpush1.bf16.msra.mxu0 0
  %1396 = vmatprep.subr.bf16.mxu0 0
  %1397 = vmatpush1.bf16.msra.mxu0 0
  %1398 = vmatprep.subr.bf16.mxu0 0
  %1399 = vmatpush1.bf16.msra.mxu0 0
  %1400 = vmatprep.mubr.bf16.mxu0 0
  %1401 = vmatmul.mubr.bf16.gmra.mrb[0].mxu0 %v1132
  %v1402 = vpop.f32.mrb[0].mxu0
  %v1403 = vadd.f32 0.0, %v1402
  %v1404 = vpop.f32.mrb[0].mxu0
  %v1405 = vadd.f32 0.0, %v1404
  %v1406 = vpop.f32.mrb[0].mxu0
  %v1407 = vpop.f32.mrb[0].mxu0
  %1408 = vdwg.mxu0
  %v1409 = vadd.f32 %v1323, %v1362
  %v1410 = vadd.f32 %v1324, %v1364
  %v1411 = vadd.f32 %v1325, %v1403
  %v1412 = vadd.f32 %v1326, %v1405
  %v1413 = vxor.u32 %v1409, 2147483648
  %v1414 = vxor.u32 %v1410, 2147483648
  %v1415 = vxor.u32 %v1411, 2147483648
  %v1416 = vmul.f32 %v1413, 1.442695
  %v1417 = vpow.pop %v1416
  %v1418 = vmul.f32 %v1414, 1.442695
  %v1419 = vpow.pop %v1418
  %v1420 = vmul.f32 %v1415, 1.442695
  %v1421 = vpow.pop %v1420
  %v1422 = vadd.f32 %v1417, 1.0
  %v1423 = vadd.f32 %v1419, 1.0
  %v1424 = vadd.f32 %v1421, 1.0
  %v1425 = vrcp.pop %v1422
  %v1426 = vmul.f32 1.0, %v1425
  %v1427 = vrcp.pop %v1423
  %v1428 = vmul.f32 1.0, %v1427
  %v1429 = vrcp.pop %v1424
  %v1430 = vmul.f32 1.0, %v1429
  %v1431 = vtanh.pop %v1412
  %v1432 = vmul.f32 %v1428, %v1129
  %v1433 = vmul.f32 %v1426, %v1431
  %v1434 = vadd.f32 %v1432, %v1433
  %v1435 = vtanh.pop %v1434
  %v1436 = vmul.f32 %v1430, %v1435
  %v1437 = vpack.c.bf16 %v1436, %v1436
  %1438 = vmatprep.subr.bf16.mxu0 %v765
  %1439 = vmatpush1.bf16.msra.mxu0 %v764
  %1440 = vmatprep.subr.bf16.mxu0 %v769
  %1441 = vmatpush1.bf16.msra.mxu0 %v768
  %1442 = vmatprep.subr.bf16.mxu0 %v773
  %1443 = vmatpush1.bf16.msra.mxu0 %v772
  %1444 = vmatprep.subr.bf16.mxu0 %v777
  %1445 = vmatpush1.bf16.msra.mxu0 %v776
  %1446 = vmatprep.subr.bf16.mxu0 %v781
  %1447 = vmatpush1.bf16.msra.mxu0 %v780
  %1448 = vmatprep.subr.bf16.mxu0 %v785
  %1449 = vmatpush1.bf16.msra.mxu0 %v784
  %1450 = vmatprep.subr.bf16.mxu0 %v789
  %1451 = vmatpush1.bf16.msra.mxu0 %v788
  %1452 = vmatprep.subr.bf16.mxu0 %v793
  %1453 = vmatpush1.bf16.msra.mxu0 %v792
  %1454 = vmatprep.subr.bf16.mxu0 0
  %1455 = vmatpush1.bf16.msra.mxu0 0
  %1456 = vmatprep.subr.bf16.mxu0 0
  %1457 = vmatpush1.bf16.msra.mxu0 0
  %1458 = vmatprep.subr.bf16.mxu0 0
  %1459 = vmatpush1.bf16.msra.mxu0 0
  %1460 = vmatprep.subr.bf16.mxu0 0
  %1461 = vmatpush1.bf16.msra.mxu0 0
  %1462 = vmatprep.subr.bf16.mxu0 0
  %1463 = vmatpush1.bf16.msra.mxu0 0
  %1464 = vmatprep.subr.bf16.mxu0 0
  %1465 = vmatpush1.bf16.msra.mxu0 0
  %1466 = vmatprep.subr.bf16.mxu0 0
  %1467 = vmatpush1.bf16.msra.mxu0 0
  %1468 = vmatprep.subr.bf16.mxu0 0
  %1469 = vmatpush1.bf16.msra.mxu0 0
  %1470 = vmatprep.mubr.bf16.mxu0 0
  %1471 = vmatmul.mubr.bf16.gmra.mrb[0].mxu0 %v1437
  %v1472 = vpop.f32.mrb[0].mxu0
  %v1473 = vadd.f32 %v1275, %v1472
  %v1474 = vpop.f32.mrb[0].mxu0
  %v1475 = vadd.f32 %v1277, %v1474
  %v1476 = vpop.f32.mrb[0].mxu0
  %v1477 = vpop.f32.mrb[0].mxu0
  %1478 = vdwg.mxu0
  %1479 = vmatprep.subr.bf16.mxu0 %v767
  %1480 = vmatpush1.bf16.msra.mxu0 %v766
  %1481 = vmatprep.subr.bf16.mxu0 %v771
  %1482 = vmatpush1.bf16.msra.mxu0 %v770
  %1483 = vmatprep.subr.bf16.mxu0 %v775
  %1484 = vmatpush1.bf16.msra.mxu0 %v774
  %1485 = vmatprep.subr.bf16.mxu0 %v779
  %1486 = vmatpush1.bf16.msra.mxu0 %v778
  %1487 = vmatprep.subr.bf16.mxu0 %v783
  %1488 = vmatpush1.bf16.msra.mxu0 %v782
  %1489 = vmatprep.subr.bf16.mxu0 %v787
  %1490 = vmatpush1.bf16.msra.mxu0 %v786
  %1491 = vmatprep.subr.bf16.mxu0 %v791
  %1492 = vmatpush1.bf16.msra.mxu0 %v790
  %1493 = vmatprep.subr.bf16.mxu0 %v795
  %1494 = vmatpush1.bf16.msra.mxu0 %v794
  %1495 = vmatprep.subr.bf16.mxu0 0
  %1496 = vmatpush1.bf16.msra.mxu0 0
  %1497 = vmatprep.subr.bf16.mxu0 0
  %1498 = vmatpush1.bf16.msra.mxu0 0
  %1499 = vmatprep.subr.bf16.mxu0 0
  %1500 = vmatpush1.bf16.msra.mxu0 0
  %1501 = vmatprep.subr.bf16.mxu0 0
  %1502 = vmatpush1.bf16.msra.mxu0 0
  %1503 = vmatprep.subr.bf16.mxu0 0
  %1504 = vmatpush1.bf16.msra.mxu0 0
  %1505 = vmatprep.subr.bf16.mxu0 0
  %1506 = vmatpush1.bf16.msra.mxu0 0
  %1507 = vmatprep.subr.bf16.mxu0 0
  %1508 = vmatpush1.bf16.msra.mxu0 0
  %1509 = vmatprep.subr.bf16.mxu0 0
  %1510 = vmatpush1.bf16.msra.mxu0 0
  %1511 = vmatprep.mubr.bf16.mxu0 0
  %1512 = vmatmul.mubr.bf16.gmra.mrb[0].mxu0 %v1437
  %v1513 = vpop.f32.mrb[0].mxu0
  %v1514 = vadd.f32 %v1316, %v1513
  %v1515 = vpop.f32.mrb[0].mxu0
  %v1516 = vadd.f32 %v1318, %v1515
  %v1517 = vpop.f32.mrb[0].mxu0
  %v1518 = vpop.f32.mrb[0].mxu0
  %1519 = vdwg.mxu0
  %v1520 = vxor.u32 %v1473, 2147483648
  %v1521 = vxor.u32 %v1475, 2147483648
  %v1522 = vxor.u32 %v1514, 2147483648
  %v1523 = vmul.f32 %v1520, 1.442695
  %v1524 = vpow.pop %v1523
  %v1525 = vmul.f32 %v1521, 1.442695
  %v1526 = vpow.pop %v1525
  %v1527 = vmul.f32 %v1522, 1.442695
  %v1528 = vpow.pop %v1527
  %v1529 = vadd.f32 %v1524, 1.0
  %v1530 = vadd.f32 %v1526, 1.0
  %v1531 = vadd.f32 %v1528, 1.0
  %v1532 = vrcp.pop %v1529
  %v1533 = vmul.f32 1.0, %v1532
  %v1534 = vrcp.pop %v1530
  %v1535 = vmul.f32 1.0, %v1534
  %v1536 = vrcp.pop %v1531
  %v1537 = vmul.f32 1.0, %v1536
  %v1538 = vtanh.pop %v1516
  %v1539 = vmul.f32 %v1535, %v1236
  %v1540 = vmul.f32 %v1533, %v1538
  %v1541 = vadd.f32 %v1539, %v1540
  %v1542 = vtanh.pop %v1541
  %v1543 = vmul.f32 %v1537, %v1542
  %v1544 = vpack.c.bf16 %v1543, %v1543
  %1545 = vmatprep.subr.bf16.mxu0 %v184
  %1546 = vmatpush1.bf16.msra.mxu0 %v183
  %1547 = vmatprep.subr.bf16.mxu0 %v188
  %1548 = vmatpush1.bf16.msra.mxu0 %v187
  %1549 = vmatprep.subr.bf16.mxu0 %v192
  %1550 = vmatpush1.bf16.msra.mxu0 %v191
  %1551 = vmatprep.subr.bf16.mxu0 %v196
  %1552 = vmatpush1.bf16.msra.mxu0 %v195
  %1553 = vmatprep.subr.bf16.mxu0 %v200
  %1554 = vmatpush1.bf16.msra.mxu0 %v199
  %1555 = vmatprep.subr.bf16.mxu0 %v204
  %1556 = vmatpush1.bf16.msra.mxu0 %v203
  %1557 = vmatprep.subr.bf16.mxu0 %v208
  %1558 = vmatpush1.bf16.msra.mxu0 %v207
  %1559 = vmatprep.subr.bf16.mxu0 %v212
  %1560 = vmatpush1.bf16.msra.mxu0 %v211
  %1561 = vmatprep.subr.bf16.mxu0 0
  %1562 = vmatpush1.bf16.msra.mxu0 0
  %1563 = vmatprep.subr.bf16.mxu0 0
  %1564 = vmatpush1.bf16.msra.mxu0 0
  %1565 = vmatprep.subr.bf16.mxu0 0
  %1566 = vmatpush1.bf16.msra.mxu0 0
  %1567 = vmatprep.subr.bf16.mxu0 0
  %1568 = vmatpush1.bf16.msra.mxu0 0
  %1569 = vmatprep.subr.bf16.mxu0 0
  %1570 = vmatpush1.bf16.msra.mxu0 0
  %1571 = vmatprep.subr.bf16.mxu0 0
  %1572 = vmatpush1.bf16.msra.mxu0 0
  %1573 = vmatprep.subr.bf16.mxu0 0
  %1574 = vmatpush1.bf16.msra.mxu0 0
  %1575 = vmatprep.subr.bf16.mxu0 0
  %1576 = vmatpush1.bf16.msra.mxu0 0
  %1577 = vmatprep.mubr.bf16.mxu0 0
  %1578 = vmatmul.mubr.bf16.gmra.mrb[0].mxu0 %v1544
  %v1579 = vpop.f32.mrb[0].mxu0
  %v1580 = vadd.f32 %v38, %v1579
  %v1581 = vpop.f32.mrb[0].mxu0
  %v1582 = vadd.f32 %v42, %v1581
  %v1583 = vpop.f32.mrb[0].mxu0
  %v1584 = vpop.f32.mrb[0].mxu0
  %1585 = vdwg.mxu0
  %1586 = vmatprep.subr.bf16.mxu0 %v186
  %1587 = vmatpush1.bf16.msra.mxu0 %v185
  %1588 = vmatprep.subr.bf16.mxu0 %v190
  %1589 = vmatpush1.bf16.msra.mxu0 %v189
  %1590 = vmatprep.subr.bf16.mxu0 %v194
  %1591 = vmatpush1.bf16.msra.mxu0 %v193
  %1592 = vmatprep.subr.bf16.mxu0 %v198
  %1593 = vmatpush1.bf16.msra.mxu0 %v197
  %1594 = vmatprep.subr.bf16.mxu0 %v202
  %1595 = vmatpush1.bf16.msra.mxu0 %v201
  %1596 = vmatprep.subr.bf16.mxu0 %v206
  %1597 = vmatpush1.bf16.msra.mxu0 %v205
  %1598 = vmatprep.subr.bf16.mxu0 %v210
  %1599 = vmatpush1.bf16.msra.mxu0 %v209
  %1600 = vmatprep.subr.bf16.mxu0 %v214
  %1601 = vmatpush1.bf16.msra.mxu0 %v213
  %1602 = vmatprep.subr.bf16.mxu0 0
  %1603 = vmatpush1.bf16.msra.mxu0 0
  %1604 = vmatprep.subr.bf16.mxu0 0
  %1605 = vmatpush1.bf16.msra.mxu0 0
  %1606 = vmatprep.subr.bf16.mxu0 0
  %1607 = vmatpush1.bf16.msra.mxu0 0
  %1608 = vmatprep.subr.bf16.mxu0 0
  %1609 = vmatpush1.bf16.msra.mxu0 0
  %1610 = vmatprep.subr.bf16.mxu0 0
  %1611 = vmatpush1.bf16.msra.mxu0 0
  %1612 = vmatprep.subr.bf16.mxu0 0
  %1613 = vmatpush1.bf16.msra.mxu0 0
  %1614 = vmatprep.subr.bf16.mxu0 0
  %1615 = vmatpush1.bf16.msra.mxu0 0
  %1616 = vmatprep.subr.bf16.mxu0 0
  %1617 = vmatpush1.bf16.msra.mxu0 0
  %1618 = vmatprep.mubr.bf16.mxu0 0
  %1619 = vmatmul.mubr.bf16.gmra.mrb[0].mxu0 %v1544
  %v1620 = vpop.f32.mrb[0].mxu0
  %v1621 = vadd.f32 %v46, %v1620
  %v1622 = vpop.f32.mrb[0].mxu0
  %v1623 = vadd.f32 %v50, %v1622
  %v1624 = vpop.f32.mrb[0].mxu0
  %v1625 = vpop.f32.mrb[0].mxu0
  %1626 = vdwg.mxu0
  %s1627 = scalar_lea.vmem %s0, 96
  %v1628 = vld [vmem:[%s1627] sm:$0xff]
  %v1629 = vld [vmem:[%s1627 + $0x8] sm:$0xff]
  %v1630 = vld [vmem:[%s1627 + $0x10] sm:$0xff]
  %v1631 = vld [vmem:[%s1627 + $0x18] sm:$0xff]
  %1632 = vmatprep.subr.bf16.mxu0 %v462
  %1633 = vmatpush1.bf16.msra.mxu0 %v461
  %1634 = vmatprep.subr.bf16.mxu0 %v466
  %1635 = vmatpush1.bf16.msra.mxu0 %v465
  %1636 = vmatprep.subr.bf16.mxu0 %v470
  %1637 = vmatpush1.bf16.msra.mxu0 %v469
  %1638 = vmatprep.subr.bf16.mxu0 %v474
  %1639 = vmatpush1.bf16.msra.mxu0 %v473
  %1640 = vmatprep.subr.bf16.mxu0 %v478
  %1641 = vmatpush1.bf16.msra.mxu0 %v477
  %1642 = vmatprep.subr.bf16.mxu0 %v482
  %1643 = vmatpush1.bf16.msra.mxu0 %v481
  %1644 = vmatprep.subr.bf16.mxu0 %v486
  %1645 = vmatpush1.bf16.msra.mxu0 %v485
  %1646 = vmatprep.subr.bf16.mxu0 %v490
  %1647 = vmatpush1.bf16.msra.mxu0 %v489
  %1648 = vmatprep.subr.bf16.mxu0 0
  %1649 = vmatpush1.bf16.msra.mxu0 0
  %1650 = vmatprep.subr.bf16.mxu0 0
  %1651 = vmatpush1.bf16.msra.mxu0 0
  %1652 = vmatprep.subr.bf16.mxu0 0
  %1653 = vmatpush1.bf16.msra.mxu0 0
  %1654 = vmatprep.subr.bf16.mxu0 0
  %1655 = vmatpush1.bf16.msra.mxu0 0
  %1656 = vmatprep.subr.bf16.mxu0 0
  %1657 = vmatpush1.bf16.msra.mxu0 0
  %1658 = vmatprep.subr.bf16.mxu0 0
  %1659 = vmatpush1.bf16.msra.mxu0 0
  %1660 = vmatprep.subr.bf16.mxu0 0
  %1661 = vmatpush1.bf16.msra.mxu0 0
  %1662 = vmatprep.subr.bf16.mxu0 0
  %1663 = vmatpush1.bf16.msra.mxu0 0
  %1664 = vmatprep.mubr.bf16.mxu0 0
  %1665 = vmatmul.mubr.bf16.gmra.mrb[0].mxu0 %v1437
  %v1666 = vpop.f32.mrb[0].mxu0
  %v1667 = vadd.f32 0.0, %v1666
  %v1668 = vpop.f32.mrb[0].mxu0
  %v1669 = vadd.f32 0.0, %v1668
  %v1670 = vpop.f32.mrb[0].mxu0
  %v1671 = vpop.f32.mrb[0].mxu0
  %1672 = vdwg.mxu0
  %1673 = vmatprep.subr.bf16.mxu0 %v464
  %1674 = vmatpush1.bf16.msra.mxu0 %v463
  %1675 = vmatprep.subr.bf16.mxu0 %v468
  %1676 = vmatpush1.bf16.msra.mxu0 %v467
  %1677 = vmatprep.subr.bf16.mxu0 %v472
  %1678 = vmatpush1.bf16.msra.mxu0 %v471
  %1679 = vmatprep.subr.bf16.mxu0 %v476
  %1680 = vmatpush1.bf16.msra.mxu0 %v475
  %1681 = vmatprep.subr.bf16.mxu0 %v480
  %1682 = vmatpush1.bf16.msra.mxu0 %v479
  %1683 = vmatprep.subr.bf16.mxu0 %v484
  %1684 = vmatpush1.bf16.msra.mxu0 %v483
  %1685 = vmatprep.subr.bf16.mxu0 %v488
  %1686 = vmatpush1.bf16.msra.mxu0 %v487
  %1687 = vmatprep.subr.bf16.mxu0 %v492
  %1688 = vmatpush1.bf16.msra.mxu0 %v491
  %1689 = vmatprep.subr.bf16.mxu0 0
  %1690 = vmatpush1.bf16.msra.mxu0 0
  %1691 = vmatprep.subr.bf16.mxu0 0
  %1692 = vmatpush1.bf16.msra.mxu0 0
  %1693 = vmatprep.subr.bf16.mxu0 0
  %1694 = vmatpush1.bf16.msra.mxu0 0
  %1695 = vmatprep.subr.bf16.mxu0 0
  %1696 = vmatpush1.bf16.msra.mxu0 0
  %1697 = vmatprep.subr.bf16.mxu0 0
  %1698 = vmatpush1.bf16.msra.mxu0 0
  %1699 = vmatprep.subr.bf16.mxu0 0
  %1700 = vmatpush1.bf16.msra.mxu0 0
  %1701 = vmatprep.subr.bf16.mxu0 0
  %1702 = vmatpush1.bf16.msra.mxu0 0
  %1703 = vmatprep.subr.bf16.mxu0 0
  %1704 = vmatpush1.bf16.msra.mxu0 0
  %1705 = vmatprep.mubr.bf16.mxu0 0
  %1706 = vmatmul.mubr.bf16.gmra.mrb[0].mxu0 %v1437
  %v1707 = vpop.f32.mrb[0].mxu0
  %v1708 = vadd.f32 0.0, %v1707
  %v1709 = vpop.f32.mrb[0].mxu0
  %v1710 = vadd.f32 0.0, %v1709
  %v1711 = vpop.f32.mrb[0].mxu0
  %v1712 = vpop.f32.mrb[0].mxu0
  %1713 = vdwg.mxu0
  %v1714 = vadd.f32 %v1628, %v1667
  %v1715 = vadd.f32 %v1629, %v1669
  %v1716 = vadd.f32 %v1630, %v1708
  %v1717 = vadd.f32 %v1631, %v1710
  %v1718 = vxor.u32 %v1714, 2147483648
  %v1719 = vxor.u32 %v1715, 2147483648
  %v1720 = vxor.u32 %v1716, 2147483648
  %v1721 = vmul.f32 %v1718, 1.442695
  %v1722 = vpow.pop %v1721
  %v1723 = vmul.f32 %v1719, 1.442695
  %v1724 = vpow.pop %v1723
  %v1725 = vmul.f32 %v1720, 1.442695
  %v1726 = vpow.pop %v1725
  %v1727 = vadd.f32 %v1722, 1.0
  %v1728 = vadd.f32 %v1724, 1.0
  %v1729 = vadd.f32 %v1726, 1.0
  %v1730 = vrcp.pop %v1727
  %v1731 = vmul.f32 1.0, %v1730
  %v1732 = vrcp.pop %v1728
  %v1733 = vmul.f32 1.0, %v1732
  %v1734 = vrcp.pop %v1729
  %v1735 = vmul.f32 1.0, %v1734
  %v1736 = vtanh.pop %v1717
  %v1737 = vmul.f32 %v1733, %v1434
  %v1738 = vmul.f32 %v1731, %v1736
  %v1739 = vadd.f32 %v1737, %v1738
  %v1740 = vtanh.pop %v1739
  %v1741 = vmul.f32 %v1735, %v1740
  %v1742 = vpack.c.bf16 %v1741, %v1741
  %1743 = vmatprep.subr.bf16.mxu0 %v765
  %1744 = vmatpush1.bf16.msra.mxu0 %v764
  %1745 = vmatprep.subr.bf16.mxu0 %v769
  %1746 = vmatpush1.bf16.msra.mxu0 %v768
  %1747 = vmatprep.subr.bf16.mxu0 %v773
  %1748 = vmatpush1.bf16.msra.mxu0 %v772
  %1749 = vmatprep.subr.bf16.mxu0 %v777
  %1750 = vmatpush1.bf16.msra.mxu0 %v776
  %1751 = vmatprep.subr.bf16.mxu0 %v781
  %1752 = vmatpush1.bf16.msra.mxu0 %v780
  %1753 = vmatprep.subr.bf16.mxu0 %v785
  %1754 = vmatpush1.bf16.msra.mxu0 %v784
  %1755 = vmatprep.subr.bf16.mxu0 %v789
  %1756 = vmatpush1.bf16.msra.mxu0 %v788
  %1757 = vmatprep.subr.bf16.mxu0 %v793
  %1758 = vmatpush1.bf16.msra.mxu0 %v792
  %1759 = vmatprep.subr.bf16.mxu0 0
  %1760 = vmatpush1.bf16.msra.mxu0 0
  %1761 = vmatprep.subr.bf16.mxu0 0
  %1762 = vmatpush1.bf16.msra.mxu0 0
  %1763 = vmatprep.subr.bf16.mxu0 0
  %1764 = vmatpush1.bf16.msra.mxu0 0
  %1765 = vmatprep.subr.bf16.mxu0 0
  %1766 = vmatpush1.bf16.msra.mxu0 0
  %1767 = vmatprep.subr.bf16.mxu0 0
  %1768 = vmatpush1.bf16.msra.mxu0 0
  %1769 = vmatprep.subr.bf16.mxu0 0
  %1770 = vmatpush1.bf16.msra.mxu0 0
  %1771 = vmatprep.subr.bf16.mxu0 0
  %1772 = vmatpush1.bf16.msra.mxu0 0
  %1773 = vmatprep.subr.bf16.mxu0 0
  %1774 = vmatpush1.bf16.msra.mxu0 0
  %1775 = vmatprep.mubr.bf16.mxu0 0
  %1776 = vmatmul.mubr.bf16.gmra.mrb[0].mxu0 %v1742
  %v1777 = vpop.f32.mrb[0].mxu0
  %v1778 = vadd.f32 %v1580, %v1777
  %v1779 = vpop.f32.mrb[0].mxu0
  %v1780 = vadd.f32 %v1582, %v1779
  %v1781 = vpop.f32.mrb[0].mxu0
  %v1782 = vpop.f32.mrb[0].mxu0
  %1783 = vdwg.mxu0
  %1784 = vmatprep.subr.bf16.mxu0 %v767
  %1785 = vmatpush1.bf16.msra.mxu0 %v766
  %1786 = vmatprep.subr.bf16.mxu0 %v771
  %1787 = vmatpush1.bf16.msra.mxu0 %v770
  %1788 = vmatprep.subr.bf16.mxu0 %v775
  %1789 = vmatpush1.bf16.msra.mxu0 %v774
  %1790 = vmatprep.subr.bf16.mxu0 %v779
  %1791 = vmatpush1.bf16.msra.mxu0 %v778
  %1792 = vmatprep.subr.bf16.mxu0 %v783
  %1793 = vmatpush1.bf16.msra.mxu0 %v782
  %1794 = vmatprep.subr.bf16.mxu0 %v787
  %1795 = vmatpush1.bf16.msra.mxu0 %v786
  %1796 = vmatprep.subr.bf16.mxu0 %v791
  %1797 = vmatpush1.bf16.msra.mxu0 %v790
  %1798 = vmatprep.subr.bf16.mxu0 %v795
  %1799 = vmatpush1.bf16.msra.mxu0 %v794
  %1800 = vmatprep.subr.bf16.mxu0 0
  %1801 = vmatpush1.bf16.msra.mxu0 0
  %1802 = vmatprep.subr.bf16.mxu0 0
  %1803 = vmatpush1.bf16.msra.mxu0 0
  %1804 = vmatprep.subr.bf16.mxu0 0
  %1805 = vmatpush1.bf16.msra.mxu0 0
  %1806 = vmatprep.subr.bf16.mxu0 0
  %1807 = vmatpush1.bf16.msra.mxu0 0
  %1808 = vmatprep.subr.bf16.mxu0 0
  %1809 = vmatpush1.bf16.msra.mxu0 0
  %1810 = vmatprep.subr.bf16.mxu0 0
  %1811 = vmatpush1.bf16.msra.mxu0 0
  %1812 = vmatprep.subr.bf16.mxu0 0
  %1813 = vmatpush1.bf16.msra.mxu0 0
  %1814 = vmatprep.subr.bf16.mxu0 0
  %1815 = vmatpush1.bf16.msra.mxu0 0
  %1816 = vmatprep.mubr.bf16.mxu0 0
  %1817 = vmatmul.mubr.bf16.gmra.mrb[0].mxu0 %v1742
  %v1818 = vpop.f32.mrb[0].mxu0
  %v1819 = vadd.f32 %v1621, %v1818
  %v1820 = vpop.f32.mrb[0].mxu0
  %v1821 = vadd.f32 %v1623, %v1820
  %v1822 = vpop.f32.mrb[0].mxu0
  %v1823 = vpop.f32.mrb[0].mxu0
  %1824 = vdwg.mxu0
  %v1825 = vxor.u32 %v1778, 2147483648
  %v1826 = vxor.u32 %v1780, 2147483648
  %v1827 = vxor.u32 %v1819, 2147483648
  %v1828 = vmul.f32 %v1825, 1.442695
  %v1829 = vpow.pop %v1828
  %v1830 = vmul.f32 %v1826, 1.442695
  %v1831 = vpow.pop %v1830
  %v1832 = vmul.f32 %v1827, 1.442695
  %v1833 = vpow.pop %v1832
  %v1834 = vadd.f32 %v1829, 1.0
  %v1835 = vadd.f32 %v1831, 1.0
  %v1836 = vadd.f32 %v1833, 1.0
  %v1837 = vrcp.pop %v1834
  %v1838 = vmul.f32 1.0, %v1837
  %v1839 = vrcp.pop %v1835
  %v1840 = vmul.f32 1.0, %v1839
  %v1841 = vrcp.pop %v1836
  %v1842 = vmul.f32 1.0, %v1841
  %v1843 = vtanh.pop %v1821
  %v1844 = vmul.f32 %v1840, %v1541
  %v1845 = vmul.f32 %v1838, %v1843
  %v1846 = vadd.f32 %v1844, %v1845
  %v1847 = vtanh.pop %v1846
  %v1848 = vmul.f32 %v1842, %v1847
  %v1849 = vpack.c.bf16 %v1848, %v1848
  %1850 = vmatprep.subr.bf16.mxu0 %v184
  %1851 = vmatpush1.bf16.msra.mxu0 %v183
  %1852 = vmatprep.subr.bf16.mxu0 %v188
  %1853 = vmatpush1.bf16.msra.mxu0 %v187
  %1854 = vmatprep.subr.bf16.mxu0 %v192
  %1855 = vmatpush1.bf16.msra.mxu0 %v191
  %1856 = vmatprep.subr.bf16.mxu0 %v196
  %1857 = vmatpush1.bf16.msra.mxu0 %v195
  %1858 = vmatprep.subr.bf16.mxu0 %v200
  %1859 = vmatpush1.bf16.msra.mxu0 %v199
  %1860 = vmatprep.subr.bf16.mxu0 %v204
  %1861 = vmatpush1.bf16.msra.mxu0 %v203
  %1862 = vmatprep.subr.bf16.mxu0 %v208
  %1863 = vmatpush1.bf16.msra.mxu0 %v207
  %1864 = vmatprep.subr.bf16.mxu0 %v212
  %1865 = vmatpush1.bf16.msra.mxu0 %v211
  %1866 = vmatprep.subr.bf16.mxu0 0
  %1867 = vmatpush1.bf16.msra.mxu0 0
  %1868 = vmatprep.subr.bf16.mxu0 0
  %1869 = vmatpush1.bf16.msra.mxu0 0
  %1870 = vmatprep.subr.bf16.mxu0 0
  %1871 = vmatpush1.bf16.msra.mxu0 0
  %1872 = vmatprep.subr.bf16.mxu0 0
  %1873 = vmatpush1.bf16.msra.mxu0 0
  %1874 = vmatprep.subr.bf16.mxu0 0
  %1875 = vmatpush1.bf16.msra.mxu0 0
  %1876 = vmatprep.subr.bf16.mxu0 0
  %1877 = vmatpush1.bf16.msra.mxu0 0
  %1878 = vmatprep.subr.bf16.mxu0 0
  %1879 = vmatpush1.bf16.msra.mxu0 0
  %1880 = vmatprep.subr.bf16.mxu0 0
  %1881 = vmatpush1.bf16.msra.mxu0 0
  %1882 = vmatprep.mubr.bf16.mxu0 0
  %1883 = vmatmul.mubr.bf16.gmra.mrb[0].mxu0 %v1849
  %v1884 = vpop.f32.mrb[0].mxu0
  %v1885 = vadd.f32 %v38, %v1884
  %v1886 = vpop.f32.mrb[0].mxu0
  %v1887 = vadd.f32 %v42, %v1886
  %v1888 = vpop.f32.mrb[0].mxu0
  %v1889 = vpop.f32.mrb[0].mxu0
  %1890 = vdwg.mxu0
  %1891 = vmatprep.subr.bf16.mxu0 %v186
  %1892 = vmatpush1.bf16.msra.mxu0 %v185
  %1893 = vmatprep.subr.bf16.mxu0 %v190
  %1894 = vmatpush1.bf16.msra.mxu0 %v189
  %1895 = vmatprep.subr.bf16.mxu0 %v194
  %1896 = vmatpush1.bf16.msra.mxu0 %v193
  %1897 = vmatprep.subr.bf16.mxu0 %v198
  %1898 = vmatpush1.bf16.msra.mxu0 %v197
  %1899 = vmatprep.subr.bf16.mxu0 %v202
  %1900 = vmatpush1.bf16.msra.mxu0 %v201
  %1901 = vmatprep.subr.bf16.mxu0 %v206
  %1902 = vmatpush1.bf16.msra.mxu0 %v205
  %1903 = vmatprep.subr.bf16.mxu0 %v210
  %1904 = vmatpush1.bf16.msra.mxu0 %v209
  %1905 = vmatprep.subr.bf16.mxu0 %v214
  %1906 = vmatpush1.bf16.msra.mxu0 %v213
  %1907 = vmatprep.subr.bf16.mxu0 0
  %1908 = vmatpush1.bf16.msra.mxu0 0
  %1909 = vmatprep.subr.bf16.mxu0 0
  %1910 = vmatpush1.bf16.msra.mxu0 0
  %1911 = vmatprep.subr.bf16.mxu0 0
  %1912 = vmatpush1.bf16.msra.mxu0 0
  %1913 = vmatprep.subr.bf16.mxu0 0
  %1914 = vmatpush1.bf16.msra.mxu0 0
  %1915 = vmatprep.subr.bf16.mxu0 0
  %1916 = vmatpush1.bf16.msra.mxu0 0
  %1917 = vmatprep.subr.bf16.mxu0 0
  %1918 = vmatpush1.bf16.msra.mxu0 0
  %1919 = vmatprep.subr.bf16.mxu0 0
  %1920 = vmatpush1.bf16.msra.mxu0 0
  %1921 = vmatprep.subr.bf16.mxu0 0
  %1922 = vmatpush1.bf16.msra.mxu0 0
  %1923 = vmatprep.mubr.bf16.mxu0 0
  %1924 = vmatmul.mubr.bf16.gmra.mrb[0].mxu0 %v1849
  %v1925 = vpop.f32.mrb[0].mxu0
  %v1926 = vadd.f32 %v46, %v1925
  %v1927 = vpop.f32.mrb[0].mxu0
  %v1928 = vadd.f32 %v50, %v1927
  %v1929 = vpop.f32.mrb[0].mxu0
  %v1930 = vpop.f32.mrb[0].mxu0
  %1931 = vdwg.mxu0
  %s1932 = scalar_lea.vmem %s0, 128
  %v1933 = vld [vmem:[%s1932] sm:$0xff]
  %v1934 = vld [vmem:[%s1932 + $0x8] sm:$0xff]
  %v1935 = vld [vmem:[%s1932 + $0x10] sm:$0xff]
  %v1936 = vld [vmem:[%s1932 + $0x18] sm:$0xff]
  %1937 = vmatprep.subr.bf16.mxu0 %v462
  %1938 = vmatpush1.bf16.msra.mxu0 %v461
  %1939 = vmatprep.subr.bf16.mxu0 %v466
  %1940 = vmatpush1.bf16.msra.mxu0 %v465
  %1941 = vmatprep.subr.bf16.mxu0 %v470
  %1942 = vmatpush1.bf16.msra.mxu0 %v469
  %1943 = vmatprep.subr.bf16.mxu0 %v474
  %1944 = vmatpush1.bf16.msra.mxu0 %v473
  %1945 = vmatprep.subr.bf16.mxu0 %v478
  %1946 = vmatpush1.bf16.msra.mxu0 %v477
  %1947 = vmatprep.subr.bf16.mxu0 %v482
  %1948 = vmatpush1.bf16.msra.mxu0 %v481
  %1949 = vmatprep.subr.bf16.mxu0 %v486
  %1950 = vmatpush1.bf16.msra.mxu0 %v485
  %1951 = vmatprep.subr.bf16.mxu0 %v490
  %1952 = vmatpush1.bf16.msra.mxu0 %v489
  %1953 = vmatprep.subr.bf16.mxu0 0
  %1954 = vmatpush1.bf16.msra.mxu0 0
  %1955 = vmatprep.subr.bf16.mxu0 0
  %1956 = vmatpush1.bf16.msra.mxu0 0
  %1957 = vmatprep.subr.bf16.mxu0 0
  %1958 = vmatpush1.bf16.msra.mxu0 0
  %1959 = vmatprep.subr.bf16.mxu0 0
  %1960 = vmatpush1.bf16.msra.mxu0 0
  %1961 = vmatprep.subr.bf16.mxu0 0
  %1962 = vmatpush1.bf16.msra.mxu0 0
  %1963 = vmatprep.subr.bf16.mxu0 0
  %1964 = vmatpush1.bf16.msra.mxu0 0
  %1965 = vmatprep.subr.bf16.mxu0 0
  %1966 = vmatpush1.bf16.msra.mxu0 0
  %1967 = vmatprep.subr.bf16.mxu0 0
  %1968 = vmatpush1.bf16.msra.mxu0 0
  %1969 = vmatprep.mubr.bf16.mxu0 0
  %1970 = vmatmul.mubr.bf16.gmra.mrb[0].mxu0 %v1742
  %v1971 = vpop.f32.mrb[0].mxu0
  %v1972 = vadd.f32 0.0, %v1971
  %v1973 = vpop.f32.mrb[0].mxu0
  %v1974 = vadd.f32 0.0, %v1973
  %v1975 = vpop.f32.mrb[0].mxu0
  %v1976 = vpop.f32.mrb[0].mxu0
  %1977 = vdwg.mxu0
  %1978 = vmatprep.subr.bf16.mxu0 %v464
  %1979 = vmatpush1.bf16.msra.mxu0 %v463
  %1980 = vmatprep.subr.bf16.mxu0 %v468
  %1981 = vmatpush1.bf16.msra.mxu0 %v467
  %1982 = vmatprep.subr.bf16.mxu0 %v472
  %1983 = vmatpush1.bf16.msra.mxu0 %v471
  %1984 = vmatprep.subr.bf16.mxu0 %v476
  %1985 = vmatpush1.bf16.msra.mxu0 %v475
  %1986 = vmatprep.subr.bf16.mxu0 %v480
  %1987 = vmatpush1.bf16.msra.mxu0 %v479
  %1988 = vmatprep.subr.bf16.mxu0 %v484
  %1989 = vmatpush1.bf16.msra.mxu0 %v483
  %1990 = vmatprep.subr.bf16.mxu0 %v488
  %1991 = vmatpush1.bf16.msra.mxu0 %v487
  %1992 = vmatprep.subr.bf16.mxu0 %v492
  %1993 = vmatpush1.bf16.msra.mxu0 %v491
  %1994 = vmatprep.subr.bf16.mxu0 0
  %1995 = vmatpush1.bf16.msra.mxu0 0
  %1996 = vmatprep.subr.bf16.mxu0 0
  %1997 = vmatpush1.bf16.msra.mxu0 0
  %1998 = vmatprep.subr.bf16.mxu0 0
  %1999 = vmatpush1.bf16.msra.mxu0 0
  %2000 = vmatprep.subr.bf16.mxu0 0
  %2001 = vmatpush1.bf16.msra.mxu0 0
  %2002 = vmatprep.subr.bf16.mxu0 0
  %2003 = vmatpush1.bf16.msra.mxu0 0
  %2004 = vmatprep.subr.bf16.mxu0 0
  %2005 = vmatpush1.bf16.msra.mxu0 0
  %2006 = vmatprep.subr.bf16.mxu0 0
  %2007 = vmatpush1.bf16.msra.mxu0 0
  %2008 = vmatprep.subr.bf16.mxu0 0
  %2009 = vmatpush1.bf16.msra.mxu0 0
  %2010 = vmatprep.mubr.bf16.mxu0 0
  %2011 = vmatmul.mubr.bf16.gmra.mrb[0].mxu0 %v1742
  %v2012 = vpop.f32.mrb[0].mxu0
  %v2013 = vadd.f32 0.0, %v2012
  %v2014 = vpop.f32.mrb[0].mxu0
  %v2015 = vadd.f32 0.0, %v2014
  %v2016 = vpop.f32.mrb[0].mxu0
  %v2017 = vpop.f32.mrb[0].mxu0
  %2018 = vdwg.mxu0
  %v2019 = vadd.f32 %v1933, %v1972
  %v2020 = vadd.f32 %v1934, %v1974
  %v2021 = vadd.f32 %v1935, %v2013
  %v2022 = vadd.f32 %v1936, %v2015
  %v2023 = vxor.u32 %v2019, 2147483648
  %v2024 = vxor.u32 %v2020, 2147483648
  %v2025 = vxor.u32 %v2021, 2147483648
  %v2026 = vmul.f32 %v2023, 1.442695
  %v2027 = vpow.pop %v2026
  %v2028 = vmul.f32 %v2024, 1.442695
  %v2029 = vpow.pop %v2028
  %v2030 = vmul.f32 %v2025, 1.442695
  %v2031 = vpow.pop %v2030
  %v2032 = vadd.f32 %v2027, 1.0
  %v2033 = vadd.f32 %v2029, 1.0
  %v2034 = vadd.f32 %v2031, 1.0
  %v2035 = vrcp.pop %v2032
  %v2036 = vmul.f32 1.0, %v2035
  %v2037 = vrcp.pop %v2033
  %v2038 = vmul.f32 1.0, %v2037
  %v2039 = vrcp.pop %v2034
  %v2040 = vmul.f32 1.0, %v2039
  %v2041 = vtanh.pop %v2022
  %v2042 = vmul.f32 %v2038, %v1739
  %v2043 = vmul.f32 %v2036, %v2041
  %v2044 = vadd.f32 %v2042, %v2043
  %v2045 = vtanh.pop %v2044
  %v2046 = vmul.f32 %v2040, %v2045
  %v2047 = vpack.c.bf16 %v2046, %v2046
  %2048 = vmatprep.subr.bf16.mxu0 %v765
  %2049 = vmatpush1.bf16.msra.mxu0 %v764
  %2050 = vmatprep.subr.bf16.mxu0 %v769
  %2051 = vmatpush1.bf16.msra.mxu0 %v768
  %2052 = vmatprep.subr.bf16.mxu0 %v773
  %2053 = vmatpush1.bf16.msra.mxu0 %v772
  %2054 = vmatprep.subr.bf16.mxu0 %v777
  %2055 = vmatpush1.bf16.msra.mxu0 %v776
  %2056 = vmatprep.subr.bf16.mxu0 %v781
  %2057 = vmatpush1.bf16.msra.mxu0 %v780
  %2058 = vmatprep.subr.bf16.mxu0 %v785
  %2059 = vmatpush1.bf16.msra.mxu0 %v784
  %2060 = vmatprep.subr.bf16.mxu0 %v789
  %2061 = vmatpush1.bf16.msra.mxu0 %v788
  %2062 = vmatprep.subr.bf16.mxu0 %v793
  %2063 = vmatpush1.bf16.msra.mxu0 %v792
  %2064 = vmatprep.subr.bf16.mxu0 0
  %2065 = vmatpush1.bf16.msra.mxu0 0
  %2066 = vmatprep.subr.bf16.mxu0 0
  %2067 = vmatpush1.bf16.msra.mxu0 0
  %2068 = vmatprep.subr.bf16.mxu0 0
  %2069 = vmatpush1.bf16.msra.mxu0 0
  %2070 = vmatprep.subr.bf16.mxu0 0
  %2071 = vmatpush1.bf16.msra.mxu0 0
  %2072 = vmatprep.subr.bf16.mxu0 0
  %2073 = vmatpush1.bf16.msra.mxu0 0
  %2074 = vmatprep.subr.bf16.mxu0 0
  %2075 = vmatpush1.bf16.msra.mxu0 0
  %2076 = vmatprep.subr.bf16.mxu0 0
  %2077 = vmatpush1.bf16.msra.mxu0 0
  %2078 = vmatprep.subr.bf16.mxu0 0
  %2079 = vmatpush1.bf16.msra.mxu0 0
  %2080 = vmatprep.mubr.bf16.mxu0 0
  %2081 = vmatmul.mubr.bf16.gmra.mrb[0].mxu0 %v2047
  %v2082 = vpop.f32.mrb[0].mxu0
  %v2083 = vadd.f32 %v1885, %v2082
  %v2084 = vpop.f32.mrb[0].mxu0
  %v2085 = vadd.f32 %v1887, %v2084
  %v2086 = vpop.f32.mrb[0].mxu0
  %v2087 = vpop.f32.mrb[0].mxu0
  %2088 = vdwg.mxu0
  %2089 = vmatprep.subr.bf16.mxu0 %v767
  %2090 = vmatpush1.bf16.msra.mxu0 %v766
  %2091 = vmatprep.subr.bf16.mxu0 %v771
  %2092 = vmatpush1.bf16.msra.mxu0 %v770
  %2093 = vmatprep.subr.bf16.mxu0 %v775
  %2094 = vmatpush1.bf16.msra.mxu0 %v774
  %2095 = vmatprep.subr.bf16.mxu0 %v779
  %2096 = vmatpush1.bf16.msra.mxu0 %v778
  %2097 = vmatprep.subr.bf16.mxu0 %v783
  %2098 = vmatpush1.bf16.msra.mxu0 %v782
  %2099 = vmatprep.subr.bf16.mxu0 %v787
  %2100 = vmatpush1.bf16.msra.mxu0 %v786
  %2101 = vmatprep.subr.bf16.mxu0 %v791
  %2102 = vmatpush1.bf16.msra.mxu0 %v790
  %2103 = vmatprep.subr.bf16.mxu0 %v795
  %2104 = vmatpush1.bf16.msra.mxu0 %v794
  %2105 = vmatprep.subr.bf16.mxu0 0
  %2106 = vmatpush1.bf16.msra.mxu0 0
  %2107 = vmatprep.subr.bf16.mxu0 0
  %2108 = vmatpush1.bf16.msra.mxu0 0
  %2109 = vmatprep.subr.bf16.mxu0 0
  %2110 = vmatpush1.bf16.msra.mxu0 0
  %2111 = vmatprep.subr.bf16.mxu0 0
  %2112 = vmatpush1.bf16.msra.mxu0 0
  %2113 = vmatprep.subr.bf16.mxu0 0
  %2114 = vmatpush1.bf16.msra.mxu0 0
  %2115 = vmatprep.subr.bf16.mxu0 0
  %2116 = vmatpush1.bf16.msra.mxu0 0
  %2117 = vmatprep.subr.bf16.mxu0 0
  %2118 = vmatpush1.bf16.msra.mxu0 0
  %2119 = vmatprep.subr.bf16.mxu0 0
  %2120 = vmatpush1.bf16.msra.mxu0 0
  %2121 = vmatprep.mubr.bf16.mxu0 0
  %2122 = vmatmul.mubr.bf16.gmra.mrb[0].mxu0 %v2047
  %v2123 = vpop.f32.mrb[0].mxu0
  %v2124 = vadd.f32 %v1926, %v2123
  %v2125 = vpop.f32.mrb[0].mxu0
  %v2126 = vadd.f32 %v1928, %v2125
  %v2127 = vpop.f32.mrb[0].mxu0
  %v2128 = vpop.f32.mrb[0].mxu0
  %2129 = vdwg.mxu0
  %v2130 = vxor.u32 %v2083, 2147483648
  %v2131 = vxor.u32 %v2085, 2147483648
  %v2132 = vxor.u32 %v2124, 2147483648
  %v2133 = vmul.f32 %v2130, 1.442695
  %v2134 = vpow.pop %v2133
  %v2135 = vmul.f32 %v2131, 1.442695
  %v2136 = vpow.pop %v2135
  %v2137 = vmul.f32 %v2132, 1.442695
  %v2138 = vpow.pop %v2137
  %v2139 = vadd.f32 %v2134, 1.0
  %v2140 = vadd.f32 %v2136, 1.0
  %v2141 = vadd.f32 %v2138, 1.0
  %v2142 = vrcp.pop %v2139
  %v2143 = vmul.f32 1.0, %v2142
  %v2144 = vrcp.pop %v2140
  %v2145 = vmul.f32 1.0, %v2144
  %v2146 = vrcp.pop %v2141
  %v2147 = vmul.f32 1.0, %v2146
  %v2148 = vtanh.pop %v2126
  %v2149 = vmul.f32 %v2145, %v1846
  %v2150 = vmul.f32 %v2143, %v2148
  %v2151 = vadd.f32 %v2149, %v2150
  %v2152 = vtanh.pop %v2151
  %v2153 = vmul.f32 %v2147, %v2152
  %v2154 = vpack.c.bf16 %v2153, %v2153
  %2155 = vmatprep.subr.bf16.mxu0 %v184
  %2156 = vmatpush1.bf16.msra.mxu0 %v183
  %2157 = vmatprep.subr.bf16.mxu0 %v188
  %2158 = vmatpush1.bf16.msra.mxu0 %v187
  %2159 = vmatprep.subr.bf16.mxu0 %v192
  %2160 = vmatpush1.bf16.msra.mxu0 %v191
  %2161 = vmatprep.subr.bf16.mxu0 %v196
  %2162 = vmatpush1.bf16.msra.mxu0 %v195
  %2163 = vmatprep.subr.bf16.mxu0 %v200
  %2164 = vmatpush1.bf16.msra.mxu0 %v199
  %2165 = vmatprep.subr.bf16.mxu0 %v204
  %2166 = vmatpush1.bf16.msra.mxu0 %v203
  %2167 = vmatprep.subr.bf16.mxu0 %v208
  %2168 = vmatpush1.bf16.msra.mxu0 %v207
  %2169 = vmatprep.subr.bf16.mxu0 %v212
  %2170 = vmatpush1.bf16.msra.mxu0 %v211
  %2171 = vmatprep.subr.bf16.mxu0 0
  %2172 = vmatpush1.bf16.msra.mxu0 0
  %2173 = vmatprep.subr.bf16.mxu0 0
  %2174 = vmatpush1.bf16.msra.mxu0 0
  %2175 = vmatprep.subr.bf16.mxu0 0
  %2176 = vmatpush1.bf16.msra.mxu0 0
  %2177 = vmatprep.subr.bf16.mxu0 0
  %2178 = vmatpush1.bf16.msra.mxu0 0
  %2179 = vmatprep.subr.bf16.mxu0 0
  %2180 = vmatpush1.bf16.msra.mxu0 0
  %2181 = vmatprep.subr.bf16.mxu0 0
  %2182 = vmatpush1.bf16.msra.mxu0 0
  %2183 = vmatprep.subr.bf16.mxu0 0
  %2184 = vmatpush1.bf16.msra.mxu0 0
  %2185 = vmatprep.subr.bf16.mxu0 0
  %2186 = vmatpush1.bf16.msra.mxu0 0
  %2187 = vmatprep.mubr.bf16.mxu0 0
  %2188 = vmatmul.mubr.bf16.gmra.mrb[0].mxu0 %v2154
  %v2189 = vpop.f32.mrb[0].mxu0
  %v2190 = vadd.f32 %v38, %v2189
  %v2191 = vpop.f32.mrb[0].mxu0
  %v2192 = vadd.f32 %v42, %v2191
  %v2193 = vpop.f32.mrb[0].mxu0
  %v2194 = vpop.f32.mrb[0].mxu0
  %2195 = vdwg.mxu0
  %2196 = vmatprep.subr.bf16.mxu0 %v186
  %2197 = vmatpush1.bf16.msra.mxu0 %v185
  %2198 = vmatprep.subr.bf16.mxu0 %v190
  %2199 = vmatpush1.bf16.msra.mxu0 %v189
  %2200 = vmatprep.subr.bf16.mxu0 %v194
  %2201 = vmatpush1.bf16.msra.mxu0 %v193
  %2202 = vmatprep.subr.bf16.mxu0 %v198
  %2203 = vmatpush1.bf16.msra.mxu0 %v197
  %2204 = vmatprep.subr.bf16.mxu0 %v202
  %2205 = vmatpush1.bf16.msra.mxu0 %v201
  %2206 = vmatprep.subr.bf16.mxu0 %v206
  %2207 = vmatpush1.bf16.msra.mxu0 %v205
  %2208 = vmatprep.subr.bf16.mxu0 %v210
  %2209 = vmatpush1.bf16.msra.mxu0 %v209
  %2210 = vmatprep.subr.bf16.mxu0 %v214
  %2211 = vmatpush1.bf16.msra.mxu0 %v213
  %2212 = vmatprep.subr.bf16.mxu0 0
  %2213 = vmatpush1.bf16.msra.mxu0 0
  %2214 = vmatprep.subr.bf16.mxu0 0
  %2215 = vmatpush1.bf16.msra.mxu0 0
  %2216 = vmatprep.subr.bf16.mxu0 0
  %2217 = vmatpush1.bf16.msra.mxu0 0
  %2218 = vmatprep.subr.bf16.mxu0 0
  %2219 = vmatpush1.bf16.msra.mxu0 0
  %2220 = vmatprep.subr.bf16.mxu0 0
  %2221 = vmatpush1.bf16.msra.mxu0 0
  %2222 = vmatprep.subr.bf16.mxu0 0
  %2223 = vmatpush1.bf16.msra.mxu0 0
  %2224 = vmatprep.subr.bf16.mxu0 0
  %2225 = vmatpush1.bf16.msra.mxu0 0
  %2226 = vmatprep.subr.bf16.mxu0 0
  %2227 = vmatpush1.bf16.msra.mxu0 0
  %2228 = vmatprep.mubr.bf16.mxu0 0
  %2229 = vmatmul.mubr.bf16.gmra.mrb[0].mxu0 %v2154
  %v2230 = vpop.f32.mrb[0].mxu0
  %v2231 = vadd.f32 %v46, %v2230
  %v2232 = vpop.f32.mrb[0].mxu0
  %v2233 = vadd.f32 %v50, %v2232
  %v2234 = vpop.f32.mrb[0].mxu0
  %v2235 = vpop.f32.mrb[0].mxu0
  %2236 = vdwg.mxu0
  %s2237 = scalar_lea.vmem %s0, 160
  %v2238 = vld [vmem:[%s2237] sm:$0xff]
  %v2239 = vld [vmem:[%s2237 + $0x8] sm:$0xff]
  %v2240 = vld [vmem:[%s2237 + $0x10] sm:$0xff]
  %v2241 = vld [vmem:[%s2237 + $0x18] sm:$0xff]
  %2242 = vmatprep.subr.bf16.mxu0 %v462
  %2243 = vmatpush1.bf16.msra.mxu0 %v461
  %2244 = vmatprep.subr.bf16.mxu0 %v466
  %2245 = vmatpush1.bf16.msra.mxu0 %v465
  %2246 = vmatprep.subr.bf16.mxu0 %v470
  %2247 = vmatpush1.bf16.msra.mxu0 %v469
  %2248 = vmatprep.subr.bf16.mxu0 %v474
  %2249 = vmatpush1.bf16.msra.mxu0 %v473
  %2250 = vmatprep.subr.bf16.mxu0 %v478
  %2251 = vmatpush1.bf16.msra.mxu0 %v477
  %2252 = vmatprep.subr.bf16.mxu0 %v482
  %2253 = vmatpush1.bf16.msra.mxu0 %v481
  %2254 = vmatprep.subr.bf16.mxu0 %v486
  %2255 = vmatpush1.bf16.msra.mxu0 %v485
  %2256 = vmatprep.subr.bf16.mxu0 %v490
  %2257 = vmatpush1.bf16.msra.mxu0 %v489
  %2258 = vmatprep.subr.bf16.mxu0 0
  %2259 = vmatpush1.bf16.msra.mxu0 0
  %2260 = vmatprep.subr.bf16.mxu0 0
  %2261 = vmatpush1.bf16.msra.mxu0 0
  %2262 = vmatprep.subr.bf16.mxu0 0
  %2263 = vmatpush1.bf16.msra.mxu0 0
  %2264 = vmatprep.subr.bf16.mxu0 0
  %2265 = vmatpush1.bf16.msra.mxu0 0
  %2266 = vmatprep.subr.bf16.mxu0 0
  %2267 = vmatpush1.bf16.msra.mxu0 0
  %2268 = vmatprep.subr.bf16.mxu0 0
  %2269 = vmatpush1.bf16.msra.mxu0 0
  %2270 = vmatprep.subr.bf16.mxu0 0
  %2271 = vmatpush1.bf16.msra.mxu0 0
  %2272 = vmatprep.subr.bf16.mxu0 0
  %2273 = vmatpush1.bf16.msra.mxu0 0
  %2274 = vmatprep.mubr.bf16.mxu0 0
  %2275 = vmatmul.mubr.bf16.gmra.mrb[0].mxu0 %v2047
  %v2276 = vpop.f32.mrb[0].mxu0
  %v2277 = vadd.f32 0.0, %v2276
  %v2278 = vpop.f32.mrb[0].mxu0
  %v2279 = vadd.f32 0.0, %v2278
  %v2280 = vpop.f32.mrb[0].mxu0
  %v2281 = vpop.f32.mrb[0].mxu0
  %2282 = vdwg.mxu0
  %2283 = vmatprep.subr.bf16.mxu0 %v464
  %2284 = vmatpush1.bf16.msra.mxu0 %v463
  %2285 = vmatprep.subr.bf16.mxu0 %v468
  %2286 = vmatpush1.bf16.msra.mxu0 %v467
  %2287 = vmatprep.subr.bf16.mxu0 %v472
  %2288 = vmatpush1.bf16.msra.mxu0 %v471
  %2289 = vmatprep.subr.bf16.mxu0 %v476
  %2290 = vmatpush1.bf16.msra.mxu0 %v475
  %2291 = vmatprep.subr.bf16.mxu0 %v480
  %2292 = vmatpush1.bf16.msra.mxu0 %v479
  %2293 = vmatprep.subr.bf16.mxu0 %v484
  %2294 = vmatpush1.bf16.msra.mxu0 %v483
  %2295 = vmatprep.subr.bf16.mxu0 %v488
  %2296 = vmatpush1.bf16.msra.mxu0 %v487
  %2297 = vmatprep.subr.bf16.mxu0 %v492
  %2298 = vmatpush1.bf16.msra.mxu0 %v491
  %2299 = vmatprep.subr.bf16.mxu0 0
  %2300 = vmatpush1.bf16.msra.mxu0 0
  %2301 = vmatprep.subr.bf16.mxu0 0
  %2302 = vmatpush1.bf16.msra.mxu0 0
  %2303 = vmatprep.subr.bf16.mxu0 0
  %2304 = vmatpush1.bf16.msra.mxu0 0
  %2305 = vmatprep.subr.bf16.mxu0 0
  %2306 = vmatpush1.bf16.msra.mxu0 0
  %2307 = vmatprep.subr.bf16.mxu0 0
  %2308 = vmatpush1.bf16.msra.mxu0 0
  %2309 = vmatprep.subr.bf16.mxu0 0
  %2310 = vmatpush1.bf16.msra.mxu0 0
  %2311 = vmatprep.subr.bf16.mxu0 0
  %2312 = vmatpush1.bf16.msra.mxu0 0
  %2313 = vmatprep.subr.bf16.mxu0 0
  %2314 = vmatpush1.bf16.msra.mxu0 0
  %2315 = vmatprep.mubr.bf16.mxu0 0
  %2316 = vmatmul.mubr.bf16.gmra.mrb[0].mxu0 %v2047
  %v2317 = vpop.f32.mrb[0].mxu0
  %v2318 = vadd.f32 0.0, %v2317
  %v2319 = vpop.f32.mrb[0].mxu0
  %v2320 = vadd.f32 0.0, %v2319
  %v2321 = vpop.f32.mrb[0].mxu0
  %v2322 = vpop.f32.mrb[0].mxu0
  %2323 = vdwg.mxu0
  %v2324 = vadd.f32 %v2238, %v2277
  %v2325 = vadd.f32 %v2239, %v2279
  %v2326 = vadd.f32 %v2240, %v2318
  %v2327 = vadd.f32 %v2241, %v2320
  %v2328 = vxor.u32 %v2324, 2147483648
  %v2329 = vxor.u32 %v2325, 2147483648
  %v2330 = vxor.u32 %v2326, 2147483648
  %v2331 = vmul.f32 %v2328, 1.442695
  %v2332 = vpow.pop %v2331
  %v2333 = vmul.f32 %v2329, 1.442695
  %v2334 = vpow.pop %v2333
  %v2335 = vmul.f32 %v2330, 1.442695
  %v2336 = vpow.pop %v2335
  %v2337 = vadd.f32 %v2332, 1.0
  %v2338 = vadd.f32 %v2334, 1.0
  %v2339 = vadd.f32 %v2336, 1.0
  %v2340 = vrcp.pop %v2337
  %v2341 = vmul.f32 1.0, %v2340
  %v2342 = vrcp.pop %v2338
  %v2343 = vmul.f32 1.0, %v2342
  %v2344 = vrcp.pop %v2339
  %v2345 = vmul.f32 1.0, %v2344
  %v2346 = vtanh.pop %v2327
  %v2347 = vmul.f32 %v2343, %v2044
  %v2348 = vmul.f32 %v2341, %v2346
  %v2349 = vadd.f32 %v2347, %v2348
  %v2350 = vtanh.pop %v2349
  %v2351 = vmul.f32 %v2345, %v2350
  %v2352 = vpack.c.bf16 %v2351, %v2351
  %2353 = vmatprep.subr.bf16.mxu0 %v765
  %2354 = vmatpush1.bf16.msra.mxu0 %v764
  %2355 = vmatprep.subr.bf16.mxu0 %v769
  %2356 = vmatpush1.bf16.msra.mxu0 %v768
  %2357 = vmatprep.subr.bf16.mxu0 %v773
  %2358 = vmatpush1.bf16.msra.mxu0 %v772
  %2359 = vmatprep.subr.bf16.mxu0 %v777
  %2360 = vmatpush1.bf16.msra.mxu0 %v776
  %2361 = vmatprep.subr.bf16.mxu0 %v781
  %2362 = vmatpush1.bf16.msra.mxu0 %v780
  %2363 = vmatprep.subr.bf16.mxu0 %v785
  %2364 = vmatpush1.bf16.msra.mxu0 %v784
  %2365 = vmatprep.subr.bf16.mxu0 %v789
  %2366 = vmatpush1.bf16.msra.mxu0 %v788
  %2367 = vmatprep.subr.bf16.mxu0 %v793
  %2368 = vmatpush1.bf16.msra.mxu0 %v792
  %2369 = vmatprep.subr.bf16.mxu0 0
  %2370 = vmatpush1.bf16.msra.mxu0 0
  %2371 = vmatprep.subr.bf16.mxu0 0
  %2372 = vmatpush1.bf16.msra.mxu0 0
  %2373 = vmatprep.subr.bf16.mxu0 0
  %2374 = vmatpush1.bf16.msra.mxu0 0
  %2375 = vmatprep.subr.bf16.mxu0 0
  %2376 = vmatpush1.bf16.msra.mxu0 0
  %2377 = vmatprep.subr.bf16.mxu0 0
  %2378 = vmatpush1.bf16.msra.mxu0 0
  %2379 = vmatprep.subr.bf16.mxu0 0
  %2380 = vmatpush1.bf16.msra.mxu0 0
  %2381 = vmatprep.subr.bf16.mxu0 0
  %2382 = vmatpush1.bf16.msra.mxu0 0
  %2383 = vmatprep.subr.bf16.mxu0 0
  %2384 = vmatpush1.bf16.msra.mxu0 0
  %2385 = vmatprep.mubr.bf16.mxu0 0
  %2386 = vmatmul.mubr.bf16.gmra.mrb[0].mxu0 %v2352
  %v2387 = vpop.f32.mrb[0].mxu0
  %v2388 = vadd.f32 %v2190, %v2387
  %v2389 = vpop.f32.mrb[0].mxu0
  %v2390 = vadd.f32 %v2192, %v2389
  %v2391 = vpop.f32.mrb[0].mxu0
  %v2392 = vpop.f32.mrb[0].mxu0
  %2393 = vdwg.mxu0
  %2394 = vmatprep.subr.bf16.mxu0 %v767
  %2395 = vmatpush1.bf16.msra.mxu0 %v766
  %2396 = vmatprep.subr.bf16.mxu0 %v771
  %2397 = vmatpush1.bf16.msra.mxu0 %v770
  %2398 = vmatprep.subr.bf16.mxu0 %v775
  %2399 = vmatpush1.bf16.msra.mxu0 %v774
  %2400 = vmatprep.subr.bf16.mxu0 %v779
  %2401 = vmatpush1.bf16.msra.mxu0 %v778
  %2402 = vmatprep.subr.bf16.mxu0 %v783
  %2403 = vmatpush1.bf16.msra.mxu0 %v782
  %2404 = vmatprep.subr.bf16.mxu0 %v787
  %2405 = vmatpush1.bf16.msra.mxu0 %v786
  %2406 = vmatprep.subr.bf16.mxu0 %v791
  %2407 = vmatpush1.bf16.msra.mxu0 %v790
  %2408 = vmatprep.subr.bf16.mxu0 %v795
  %2409 = vmatpush1.bf16.msra.mxu0 %v794
  %2410 = vmatprep.subr.bf16.mxu0 0
  %2411 = vmatpush1.bf16.msra.mxu0 0
  %2412 = vmatprep.subr.bf16.mxu0 0
  %2413 = vmatpush1.bf16.msra.mxu0 0
  %2414 = vmatprep.subr.bf16.mxu0 0
  %2415 = vmatpush1.bf16.msra.mxu0 0
  %2416 = vmatprep.subr.bf16.mxu0 0
  %2417 = vmatpush1.bf16.msra.mxu0 0
  %2418 = vmatprep.subr.bf16.mxu0 0
  %2419 = vmatpush1.bf16.msra.mxu0 0
  %2420 = vmatprep.subr.bf16.mxu0 0
  %2421 = vmatpush1.bf16.msra.mxu0 0
  %2422 = vmatprep.subr.bf16.mxu0 0
  %2423 = vmatpush1.bf16.msra.mxu0 0
  %2424 = vmatprep.subr.bf16.mxu0 0
  %2425 = vmatpush1.bf16.msra.mxu0 0
  %2426 = vmatprep.mubr.bf16.mxu0 0
  %2427 = vmatmul.mubr.bf16.gmra.mrb[0].mxu0 %v2352
  %v2428 = vpop.f32.mrb[0].mxu0
  %v2429 = vadd.f32 %v2231, %v2428
  %v2430 = vpop.f32.mrb[0].mxu0
  %v2431 = vadd.f32 %v2233, %v2430
  %v2432 = vpop.f32.mrb[0].mxu0
  %v2433 = vpop.f32.mrb[0].mxu0
  %2434 = vdwg.mxu0
  %v2435 = vxor.u32 %v2388, 2147483648
  %v2436 = vxor.u32 %v2390, 2147483648
  %v2437 = vxor.u32 %v2429, 2147483648
  %v2438 = vmul.f32 %v2435, 1.442695
  %v2439 = vpow.pop %v2438
  %v2440 = vmul.f32 %v2436, 1.442695
  %v2441 = vpow.pop %v2440
  %v2442 = vmul.f32 %v2437, 1.442695
  %v2443 = vpow.pop %v2442
  %v2444 = vadd.f32 %v2439, 1.0
  %v2445 = vadd.f32 %v2441, 1.0
  %v2446 = vadd.f32 %v2443, 1.0
  %v2447 = vrcp.pop %v2444
  %v2448 = vmul.f32 1.0, %v2447
  %v2449 = vrcp.pop %v2445
  %v2450 = vmul.f32 1.0, %v2449
  %v2451 = vrcp.pop %v2446
  %v2452 = vmul.f32 1.0, %v2451
  %v2453 = vtanh.pop %v2431
  %v2454 = vmul.f32 %v2450, %v2151
  %v2455 = vmul.f32 %v2448, %v2453
  %v2456 = vadd.f32 %v2454, %v2455
  %v2457 = vtanh.pop %v2456
  %v2458 = vmul.f32 %v2452, %v2457
  %v2459 = vpack.c.bf16 %v2458, %v2458
  %2460 = vmatprep.subr.bf16.mxu0 %v184
  %2461 = vmatpush1.bf16.msra.mxu0 %v183
  %2462 = vmatprep.subr.bf16.mxu0 %v188
  %2463 = vmatpush1.bf16.msra.mxu0 %v187
  %2464 = vmatprep.subr.bf16.mxu0 %v192
  %2465 = vmatpush1.bf16.msra.mxu0 %v191
  %2466 = vmatprep.subr.bf16.mxu0 %v196
  %2467 = vmatpush1.bf16.msra.mxu0 %v195
  %2468 = vmatprep.subr.bf16.mxu0 %v200
  %2469 = vmatpush1.bf16.msra.mxu0 %v199
  %2470 = vmatprep.subr.bf16.mxu0 %v204
  %2471 = vmatpush1.bf16.msra.mxu0 %v203
  %2472 = vmatprep.subr.bf16.mxu0 %v208
  %2473 = vmatpush1.bf16.msra.mxu0 %v207
  %2474 = vmatprep.subr.bf16.mxu0 %v212
  %2475 = vmatpush1.bf16.msra.mxu0 %v211
  %2476 = vmatprep.subr.bf16.mxu0 0
  %2477 = vmatpush1.bf16.msra.mxu0 0
  %2478 = vmatprep.subr.bf16.mxu0 0
  %2479 = vmatpush1.bf16.msra.mxu0 0
  %2480 = vmatprep.subr.bf16.mxu0 0
  %2481 = vmatpush1.bf16.msra.mxu0 0
  %2482 = vmatprep.subr.bf16.mxu0 0
  %2483 = vmatpush1.bf16.msra.mxu0 0
  %2484 = vmatprep.subr.bf16.mxu0 0
  %2485 = vmatpush1.bf16.msra.mxu0 0
  %2486 = vmatprep.subr.bf16.mxu0 0
  %2487 = vmatpush1.bf16.msra.mxu0 0
  %2488 = vmatprep.subr.bf16.mxu0 0
  %2489 = vmatpush1.bf16.msra.mxu0 0
  %2490 = vmatprep.subr.bf16.mxu0 0
  %2491 = vmatpush1.bf16.msra.mxu0 0
  %2492 = vmatprep.mubr.bf16.mxu0 0
  %2493 = vmatmul.mubr.bf16.gmra.mrb[0].mxu0 %v2459
  %v2494 = vpop.f32.mrb[0].mxu0
  %v2495 = vadd.f32 %v38, %v2494
  %v2496 = vpop.f32.mrb[0].mxu0
  %v2497 = vadd.f32 %v42, %v2496
  %v2498 = vpop.f32.mrb[0].mxu0
  %v2499 = vpop.f32.mrb[0].mxu0
  %2500 = vdwg.mxu0
  %2501 = vmatprep.subr.bf16.mxu0 %v186
  %2502 = vmatpush1.bf16.msra.mxu0 %v185
  %2503 = vmatprep.subr.bf16.mxu0 %v190
  %2504 = vmatpush1.bf16.msra.mxu0 %v189
  %2505 = vmatprep.subr.bf16.mxu0 %v194
  %2506 = vmatpush1.bf16.msra.mxu0 %v193
  %2507 = vmatprep.subr.bf16.mxu0 %v198
  %2508 = vmatpush1.bf16.msra.mxu0 %v197
  %2509 = vmatprep.subr.bf16.mxu0 %v202
  %2510 = vmatpush1.bf16.msra.mxu0 %v201
  %2511 = vmatprep.subr.bf16.mxu0 %v206
  %2512 = vmatpush1.bf16.msra.mxu0 %v205
  %2513 = vmatprep.subr.bf16.mxu0 %v210
  %2514 = vmatpush1.bf16.msra.mxu0 %v209
  %2515 = vmatprep.subr.bf16.mxu0 %v214
  %2516 = vmatpush1.bf16.msra.mxu0 %v213
  %2517 = vmatprep.subr.bf16.mxu0 0
  %2518 = vmatpush1.bf16.msra.mxu0 0
  %2519 = vmatprep.subr.bf16.mxu0 0
  %2520 = vmatpush1.bf16.msra.mxu0 0
  %2521 = vmatprep.subr.bf16.mxu0 0
  %2522 = vmatpush1.bf16.msra.mxu0 0
  %2523 = vmatprep.subr.bf16.mxu0 0
  %2524 = vmatpush1.bf16.msra.mxu0 0
  %2525 = vmatprep.subr.bf16.mxu0 0
  %2526 = vmatpush1.bf16.msra.mxu0 0
  %2527 = vmatprep.subr.bf16.mxu0 0
  %2528 = vmatpush1.bf16.msra.mxu0 0
  %2529 = vmatprep.subr.bf16.mxu0 0
  %2530 = vmatpush1.bf16.msra.mxu0 0
  %2531 = vmatprep.subr.bf16.mxu0 0
  %2532 = vmatpush1.bf16.msra.mxu0 0
  %2533 = vmatprep.mubr.bf16.mxu0 0
  %2534 = vmatmul.mubr.bf16.gmra.mrb[0].mxu0 %v2459
  %v2535 = vpop.f32.mrb[0].mxu0
  %v2536 = vadd.f32 %v46, %v2535
  %v2537 = vpop.f32.mrb[0].mxu0
  %v2538 = vadd.f32 %v50, %v2537
  %v2539 = vpop.f32.mrb[0].mxu0
  %v2540 = vpop.f32.mrb[0].mxu0
  %2541 = vdwg.mxu0
  %s2542 = scalar_lea.vmem %s0, 192
  %v2543 = vld [vmem:[%s2542] sm:$0xff]
  %v2544 = vld [vmem:[%s2542 + $0x8] sm:$0xff]
  %v2545 = vld [vmem:[%s2542 + $0x10] sm:$0xff]
  %v2546 = vld [vmem:[%s2542 + $0x18] sm:$0xff]
  %2547 = vmatprep.subr.bf16.mxu0 %v462
  %2548 = vmatpush1.bf16.msra.mxu0 %v461
  %2549 = vmatprep.subr.bf16.mxu0 %v466
  %2550 = vmatpush1.bf16.msra.mxu0 %v465
  %2551 = vmatprep.subr.bf16.mxu0 %v470
  %2552 = vmatpush1.bf16.msra.mxu0 %v469
  %2553 = vmatprep.subr.bf16.mxu0 %v474
  %2554 = vmatpush1.bf16.msra.mxu0 %v473
  %2555 = vmatprep.subr.bf16.mxu0 %v478
  %2556 = vmatpush1.bf16.msra.mxu0 %v477
  %2557 = vmatprep.subr.bf16.mxu0 %v482
  %2558 = vmatpush1.bf16.msra.mxu0 %v481
  %2559 = vmatprep.subr.bf16.mxu0 %v486
  %2560 = vmatpush1.bf16.msra.mxu0 %v485
  %2561 = vmatprep.subr.bf16.mxu0 %v490
  %2562 = vmatpush1.bf16.msra.mxu0 %v489
  %2563 = vmatprep.subr.bf16.mxu0 0
  %2564 = vmatpush1.bf16.msra.mxu0 0
  %2565 = vmatprep.subr.bf16.mxu0 0
  %2566 = vmatpush1.bf16.msra.mxu0 0
  %2567 = vmatprep.subr.bf16.mxu0 0
  %2568 = vmatpush1.bf16.msra.mxu0 0
  %2569 = vmatprep.subr.bf16.mxu0 0
  %2570 = vmatpush1.bf16.msra.mxu0 0
  %2571 = vmatprep.subr.bf16.mxu0 0
  %2572 = vmatpush1.bf16.msra.mxu0 0
  %2573 = vmatprep.subr.bf16.mxu0 0
  %2574 = vmatpush1.bf16.msra.mxu0 0
  %2575 = vmatprep.subr.bf16.mxu0 0
  %2576 = vmatpush1.bf16.msra.mxu0 0
  %2577 = vmatprep.subr.bf16.mxu0 0
  %2578 = vmatpush1.bf16.msra.mxu0 0
  %2579 = vmatprep.mubr.bf16.mxu0 0
  %2580 = vmatmul.mubr.bf16.gmra.mrb[0].mxu0 %v2352
  %v2581 = vpop.f32.mrb[0].mxu0
  %v2582 = vadd.f32 0.0, %v2581
  %v2583 = vpop.f32.mrb[0].mxu0
  %v2584 = vadd.f32 0.0, %v2583
  %v2585 = vpop.f32.mrb[0].mxu0
  %v2586 = vpop.f32.mrb[0].mxu0
  %2587 = vdwg.mxu0
  %2588 = vmatprep.subr.bf16.mxu0 %v464
  %2589 = vmatpush1.bf16.msra.mxu0 %v463
  %2590 = vmatprep.subr.bf16.mxu0 %v468
  %2591 = vmatpush1.bf16.msra.mxu0 %v467
  %2592 = vmatprep.subr.bf16.mxu0 %v472
  %2593 = vmatpush1.bf16.msra.mxu0 %v471
  %2594 = vmatprep.subr.bf16.mxu0 %v476
  %2595 = vmatpush1.bf16.msra.mxu0 %v475
  %2596 = vmatprep.subr.bf16.mxu0 %v480
  %2597 = vmatpush1.bf16.msra.mxu0 %v479
  %2598 = vmatprep.subr.bf16.mxu0 %v484
  %2599 = vmatpush1.bf16.msra.mxu0 %v483
  %2600 = vmatprep.subr.bf16.mxu0 %v488
  %2601 = vmatpush1.bf16.msra.mxu0 %v487
  %2602 = vmatprep.subr.bf16.mxu0 %v492
  %2603 = vmatpush1.bf16.msra.mxu0 %v491
  %2604 = vmatprep.subr.bf16.mxu0 0
  %2605 = vmatpush1.bf16.msra.mxu0 0
  %2606 = vmatprep.subr.bf16.mxu0 0
  %2607 = vmatpush1.bf16.msra.mxu0 0
  %2608 = vmatprep.subr.bf16.mxu0 0
  %2609 = vmatpush1.bf16.msra.mxu0 0
  %2610 = vmatprep.subr.bf16.mxu0 0
  %2611 = vmatpush1.bf16.msra.mxu0 0
  %2612 = vmatprep.subr.bf16.mxu0 0
  %2613 = vmatpush1.bf16.msra.mxu0 0
  %2614 = vmatprep.subr.bf16.mxu0 0
  %2615 = vmatpush1.bf16.msra.mxu0 0
  %2616 = vmatprep.subr.bf16.mxu0 0
  %2617 = vmatpush1.bf16.msra.mxu0 0
  %2618 = vmatprep.subr.bf16.mxu0 0
  %2619 = vmatpush1.bf16.msra.mxu0 0
  %2620 = vmatprep.mubr.bf16.mxu0 0
  %2621 = vmatmul.mubr.bf16.gmra.mrb[0].mxu0 %v2352
  %v2622 = vpop.f32.mrb[0].mxu0
  %v2623 = vadd.f32 0.0, %v2622
  %v2624 = vpop.f32.mrb[0].mxu0
  %v2625 = vadd.f32 0.0, %v2624
  %v2626 = vpop.f32.mrb[0].mxu0
  %v2627 = vpop.f32.mrb[0].mxu0
  %2628 = vdwg.mxu0
  %v2629 = vadd.f32 %v2543, %v2582
  %v2630 = vadd.f32 %v2544, %v2584
  %v2631 = vadd.f32 %v2545, %v2623
  %v2632 = vadd.f32 %v2546, %v2625
  %v2633 = vxor.u32 %v2629, 2147483648
  %v2634 = vxor.u32 %v2630, 2147483648
  %v2635 = vxor.u32 %v2631, 2147483648
  %v2636 = vmul.f32 %v2633, 1.442695
  %v2637 = vpow.pop %v2636
  %v2638 = vmul.f32 %v2634, 1.442695
  %v2639 = vpow.pop %v2638
  %v2640 = vmul.f32 %v2635, 1.442695
  %v2641 = vpow.pop %v2640
  %v2642 = vadd.f32 %v2637, 1.0
  %v2643 = vadd.f32 %v2639, 1.0
  %v2644 = vadd.f32 %v2641, 1.0
  %v2645 = vrcp.pop %v2642
  %v2646 = vmul.f32 1.0, %v2645
  %v2647 = vrcp.pop %v2643
  %v2648 = vmul.f32 1.0, %v2647
  %v2649 = vrcp.pop %v2644
  %v2650 = vmul.f32 1.0, %v2649
  %v2651 = vtanh.pop %v2632
  %v2652 = vmul.f32 %v2648, %v2349
  %v2653 = vmul.f32 %v2646, %v2651
  %v2654 = vadd.f32 %v2652, %v2653
  %v2655 = vtanh.pop %v2654
  %v2656 = vmul.f32 %v2650, %v2655
  %v2657 = vpack.c.bf16 %v2656, %v2656
  %2658 = vmatprep.subr.bf16.mxu0 %v765
  %2659 = vmatpush1.bf16.msra.mxu0 %v764
  %2660 = vmatprep.subr.bf16.mxu0 %v769
  %2661 = vmatpush1.bf16.msra.mxu0 %v768
  %2662 = vmatprep.subr.bf16.mxu0 %v773
  %2663 = vmatpush1.bf16.msra.mxu0 %v772
  %2664 = vmatprep.subr.bf16.mxu0 %v777
  %2665 = vmatpush1.bf16.msra.mxu0 %v776
  %2666 = vmatprep.subr.bf16.mxu0 %v781
  %2667 = vmatpush1.bf16.msra.mxu0 %v780
  %2668 = vmatprep.subr.bf16.mxu0 %v785
  %2669 = vmatpush1.bf16.msra.mxu0 %v784
  %2670 = vmatprep.subr.bf16.mxu0 %v789
  %2671 = vmatpush1.bf16.msra.mxu0 %v788
  %2672 = vmatprep.subr.bf16.mxu0 %v793
  %2673 = vmatpush1.bf16.msra.mxu0 %v792
  %2674 = vmatprep.subr.bf16.mxu0 0
  %2675 = vmatpush1.bf16.msra.mxu0 0
  %2676 = vmatprep.subr.bf16.mxu0 0
  %2677 = vmatpush1.bf16.msra.mxu0 0
  %2678 = vmatprep.subr.bf16.mxu0 0
  %2679 = vmatpush1.bf16.msra.mxu0 0
  %2680 = vmatprep.subr.bf16.mxu0 0
  %2681 = vmatpush1.bf16.msra.mxu0 0
  %2682 = vmatprep.subr.bf16.mxu0 0
  %2683 = vmatpush1.bf16.msra.mxu0 0
  %2684 = vmatprep.subr.bf16.mxu0 0
  %2685 = vmatpush1.bf16.msra.mxu0 0
  %2686 = vmatprep.subr.bf16.mxu0 0
  %2687 = vmatpush1.bf16.msra.mxu0 0
  %2688 = vmatprep.subr.bf16.mxu0 0
  %2689 = vmatpush1.bf16.msra.mxu0 0
  %2690 = vmatprep.mubr.bf16.mxu0 0
  %2691 = vmatmul.mubr.bf16.gmra.mrb[0].mxu0 %v2657
  %v2692 = vpop.f32.mrb[0].mxu0
  %v2693 = vadd.f32 %v2495, %v2692
  %v2694 = vpop.f32.mrb[0].mxu0
  %v2695 = vadd.f32 %v2497, %v2694
  %v2696 = vpop.f32.mrb[0].mxu0
  %v2697 = vpop.f32.mrb[0].mxu0
  %2698 = vdwg.mxu0
  %2699 = vmatprep.subr.bf16.mxu0 %v767
  %2700 = vmatpush1.bf16.msra.mxu0 %v766
  %2701 = vmatprep.subr.bf16.mxu0 %v771
  %2702 = vmatpush1.bf16.msra.mxu0 %v770
  %2703 = vmatprep.subr.bf16.mxu0 %v775
  %2704 = vmatpush1.bf16.msra.mxu0 %v774
  %2705 = vmatprep.subr.bf16.mxu0 %v779
  %2706 = vmatpush1.bf16.msra.mxu0 %v778
  %2707 = vmatprep.subr.bf16.mxu0 %v783
  %2708 = vmatpush1.bf16.msra.mxu0 %v782
  %2709 = vmatprep.subr.bf16.mxu0 %v787
  %2710 = vmatpush1.bf16.msra.mxu0 %v786
  %2711 = vmatprep.subr.bf16.mxu0 %v791
  %2712 = vmatpush1.bf16.msra.mxu0 %v790
  %2713 = vmatprep.subr.bf16.mxu0 %v795
  %2714 = vmatpush1.bf16.msra.mxu0 %v794
  %2715 = vmatprep.subr.bf16.mxu0 0
  %2716 = vmatpush1.bf16.msra.mxu0 0
  %2717 = vmatprep.subr.bf16.mxu0 0
  %2718 = vmatpush1.bf16.msra.mxu0 0
  %2719 = vmatprep.subr.bf16.mxu0 0
  %2720 = vmatpush1.bf16.msra.mxu0 0
  %2721 = vmatprep.subr.bf16.mxu0 0
  %2722 = vmatpush1.bf16.msra.mxu0 0
  %2723 = vmatprep.subr.bf16.mxu0 0
  %2724 = vmatpush1.bf16.msra.mxu0 0
  %2725 = vmatprep.subr.bf16.mxu0 0
  %2726 = vmatpush1.bf16.msra.mxu0 0
  %2727 = vmatprep.subr.bf16.mxu0 0
  %2728 = vmatpush1.bf16.msra.mxu0 0
  %2729 = vmatprep.subr.bf16.mxu0 0
  %2730 = vmatpush1.bf16.msra.mxu0 0
  %2731 = vmatprep.mubr.bf16.mxu0 0
  %2732 = vmatmul.mubr.bf16.gmra.mrb[0].mxu0 %v2657
  %v2733 = vpop.f32.mrb[0].mxu0
  %v2734 = vadd.f32 %v2536, %v2733
  %v2735 = vpop.f32.mrb[0].mxu0
  %v2736 = vadd.f32 %v2538, %v2735
  %v2737 = vpop.f32.mrb[0].mxu0
  %v2738 = vpop.f32.mrb[0].mxu0
  %2739 = vdwg.mxu0
  %v2740 = vxor.u32 %v2693, 2147483648
  %v2741 = vxor.u32 %v2695, 2147483648
  %v2742 = vxor.u32 %v2734, 2147483648
  %v2743 = vmul.f32 %v2740, 1.442695
  %v2744 = vpow.pop %v2743
  %v2745 = vmul.f32 %v2741, 1.442695
  %v2746 = vpow.pop %v2745
  %v2747 = vmul.f32 %v2742, 1.442695
  %v2748 = vpow.pop %v2747
  %v2749 = vadd.f32 %v2744, 1.0
  %v2750 = vadd.f32 %v2746, 1.0
  %v2751 = vadd.f32 %v2748, 1.0
  %v2752 = vrcp.pop %v2749
  %v2753 = vmul.f32 1.0, %v2752
  %v2754 = vrcp.pop %v2750
  %v2755 = vmul.f32 1.0, %v2754
  %v2756 = vrcp.pop %v2751
  %v2757 = vmul.f32 1.0, %v2756
  %v2758 = vtanh.pop %v2736
  %v2759 = vmul.f32 %v2755, %v2456
  %v2760 = vmul.f32 %v2753, %v2758
  %v2761 = vadd.f32 %v2759, %v2760
  %v2762 = vtanh.pop %v2761
  %v2763 = vmul.f32 %v2757, %v2762
  %v2764 = vpack.c.bf16 %v2763, %v2763
  %2765 = vmatprep.subr.bf16.mxu0 %v184
  %2766 = vmatpush1.bf16.msra.mxu0 %v183
  %2767 = vmatprep.subr.bf16.mxu0 %v188
  %2768 = vmatpush1.bf16.msra.mxu0 %v187
  %2769 = vmatprep.subr.bf16.mxu0 %v192
  %2770 = vmatpush1.bf16.msra.mxu0 %v191
  %2771 = vmatprep.subr.bf16.mxu0 %v196
  %2772 = vmatpush1.bf16.msra.mxu0 %v195
  %2773 = vmatprep.subr.bf16.mxu0 %v200
  %2774 = vmatpush1.bf16.msra.mxu0 %v199
  %2775 = vmatprep.subr.bf16.mxu0 %v204
  %2776 = vmatpush1.bf16.msra.mxu0 %v203
  %2777 = vmatprep.subr.bf16.mxu0 %v208
  %2778 = vmatpush1.bf16.msra.mxu0 %v207
  %2779 = vmatprep.subr.bf16.mxu0 %v212
  %2780 = vmatpush1.bf16.msra.mxu0 %v211
  %2781 = vmatprep.subr.bf16.mxu0 0
  %2782 = vmatpush1.bf16.msra.mxu0 0
  %2783 = vmatprep.subr.bf16.mxu0 0
  %2784 = vmatpush1.bf16.msra.mxu0 0
  %2785 = vmatprep.subr.bf16.mxu0 0
  %2786 = vmatpush1.bf16.msra.mxu0 0
  %2787 = vmatprep.subr.bf16.mxu0 0
  %2788 = vmatpush1.bf16.msra.mxu0 0
  %2789 = vmatprep.subr.bf16.mxu0 0
  %2790 = vmatpush1.bf16.msra.mxu0 0
  %2791 = vmatprep.subr.bf16.mxu0 0
  %2792 = vmatpush1.bf16.msra.mxu0 0
  %2793 = vmatprep.subr.bf16.mxu0 0
  %2794 = vmatpush1.bf16.msra.mxu0 0
  %2795 = vmatprep.subr.bf16.mxu0 0
  %2796 = vmatpush1.bf16.msra.mxu0 0
  %2797 = vmatprep.mubr.bf16.mxu0 0
  %2798 = vmatmul.mubr.bf16.gmra.mrb[0].mxu0 %v2764
  %v2799 = vpop.f32.mrb[0].mxu0
  %v2800 = vadd.f32 %v38, %v2799
  %v2801 = vpop.f32.mrb[0].mxu0
  %v2802 = vadd.f32 %v42, %v2801
  %v2803 = vpop.f32.mrb[0].mxu0
  %v2804 = vpop.f32.mrb[0].mxu0
  %2805 = vdwg.mxu0
  %2806 = vmatprep.subr.bf16.mxu0 %v186
  %2807 = vmatpush1.bf16.msra.mxu0 %v185
  %2808 = vmatprep.subr.bf16.mxu0 %v190
  %2809 = vmatpush1.bf16.msra.mxu0 %v189
  %2810 = vmatprep.subr.bf16.mxu0 %v194
  %2811 = vmatpush1.bf16.msra.mxu0 %v193
  %2812 = vmatprep.subr.bf16.mxu0 %v198
  %2813 = vmatpush1.bf16.msra.mxu0 %v197
  %2814 = vmatprep.subr.bf16.mxu0 %v202
  %2815 = vmatpush1.bf16.msra.mxu0 %v201
  %2816 = vmatprep.subr.bf16.mxu0 %v206
  %2817 = vmatpush1.bf16.msra.mxu0 %v205
  %2818 = vmatprep.subr.bf16.mxu0 %v210
  %2819 = vmatpush1.bf16.msra.mxu0 %v209
  %2820 = vmatprep.subr.bf16.mxu0 %v214
  %2821 = vmatpush1.bf16.msra.mxu0 %v213
  %2822 = vmatprep.subr.bf16.mxu0 0
  %2823 = vmatpush1.bf16.msra.mxu0 0
  %2824 = vmatprep.subr.bf16.mxu0 0
  %2825 = vmatpush1.bf16.msra.mxu0 0
  %2826 = vmatprep.subr.bf16.mxu0 0
  %2827 = vmatpush1.bf16.msra.mxu0 0
  %2828 = vmatprep.subr.bf16.mxu0 0
  %2829 = vmatpush1.bf16.msra.mxu0 0
  %2830 = vmatprep.subr.bf16.mxu0 0
  %2831 = vmatpush1.bf16.msra.mxu0 0
  %2832 = vmatprep.subr.bf16.mxu0 0
  %2833 = vmatpush1.bf16.msra.mxu0 0
  %2834 = vmatprep.subr.bf16.mxu0 0
  %2835 = vmatpush1.bf16.msra.mxu0 0
  %2836 = vmatprep.subr.bf16.mxu0 0
  %2837 = vmatpush1.bf16.msra.mxu0 0
  %2838 = vmatprep.mubr.bf16.mxu0 0
  %2839 = vmatmul.mubr.bf16.gmra.mrb[0].mxu0 %v2764
  %v2840 = vpop.f32.mrb[0].mxu0
  %v2841 = vadd.f32 %v46, %v2840
  %v2842 = vpop.f32.mrb[0].mxu0
  %v2843 = vadd.f32 %v50, %v2842
  %v2844 = vpop.f32.mrb[0].mxu0
  %v2845 = vpop.f32.mrb[0].mxu0
  %2846 = vdwg.mxu0
  %s2847 = scalar_lea.vmem %s0, 224
  %v2848 = vld [vmem:[%s2847] sm:$0xff]
  %v2849 = vld [vmem:[%s2847 + $0x8] sm:$0xff]
  %v2850 = vld [vmem:[%s2847 + $0x10] sm:$0xff]
  %v2851 = vld [vmem:[%s2847 + $0x18] sm:$0xff]
  %2852 = vmatprep.subr.bf16.mxu0 %v462
  %2853 = vmatpush1.bf16.msra.mxu0 %v461
  %2854 = vmatprep.subr.bf16.mxu0 %v466
  %2855 = vmatpush1.bf16.msra.mxu0 %v465
  %2856 = vmatprep.subr.bf16.mxu0 %v470
  %2857 = vmatpush1.bf16.msra.mxu0 %v469
  %2858 = vmatprep.subr.bf16.mxu0 %v474
  %2859 = vmatpush1.bf16.msra.mxu0 %v473
  %2860 = vmatprep.subr.bf16.mxu0 %v478
  %2861 = vmatpush1.bf16.msra.mxu0 %v477
  %2862 = vmatprep.subr.bf16.mxu0 %v482
  %2863 = vmatpush1.bf16.msra.mxu0 %v481
  %2864 = vmatprep.subr.bf16.mxu0 %v486
  %2865 = vmatpush1.bf16.msra.mxu0 %v485
  %2866 = vmatprep.subr.bf16.mxu0 %v490
  %2867 = vmatpush1.bf16.msra.mxu0 %v489
  %2868 = vmatprep.subr.bf16.mxu0 0
  %2869 = vmatpush1.bf16.msra.mxu0 0
  %2870 = vmatprep.subr.bf16.mxu0 0
  %2871 = vmatpush1.bf16.msra.mxu0 0
  %2872 = vmatprep.subr.bf16.mxu0 0
  %2873 = vmatpush1.bf16.msra.mxu0 0
  %2874 = vmatprep.subr.bf16.mxu0 0
  %2875 = vmatpush1.bf16.msra.mxu0 0
  %2876 = vmatprep.subr.bf16.mxu0 0
  %2877 = vmatpush1.bf16.msra.mxu0 0
  %2878 = vmatprep.subr.bf16.mxu0 0
  %2879 = vmatpush1.bf16.msra.mxu0 0
  %2880 = vmatprep.subr.bf16.mxu0 0
  %2881 = vmatpush1.bf16.msra.mxu0 0
  %2882 = vmatprep.subr.bf16.mxu0 0
  %2883 = vmatpush1.bf16.msra.mxu0 0
  %2884 = vmatprep.mubr.bf16.mxu0 0
  %2885 = vmatmul.mubr.bf16.gmra.mrb[0].mxu0 %v2657
  %v2886 = vpop.f32.mrb[0].mxu0
  %v2887 = vadd.f32 0.0, %v2886
  %v2888 = vpop.f32.mrb[0].mxu0
  %v2889 = vadd.f32 0.0, %v2888
  %v2890 = vpop.f32.mrb[0].mxu0
  %v2891 = vpop.f32.mrb[0].mxu0
  %2892 = vdwg.mxu0
  %2893 = vmatprep.subr.bf16.mxu0 %v464
  %2894 = vmatpush1.bf16.msra.mxu0 %v463
  %2895 = vmatprep.subr.bf16.mxu0 %v468
  %2896 = vmatpush1.bf16.msra.mxu0 %v467
  %2897 = vmatprep.subr.bf16.mxu0 %v472
  %2898 = vmatpush1.bf16.msra.mxu0 %v471
  %2899 = vmatprep.subr.bf16.mxu0 %v476
  %2900 = vmatpush1.bf16.msra.mxu0 %v475
  %2901 = vmatprep.subr.bf16.mxu0 %v480
  %2902 = vmatpush1.bf16.msra.mxu0 %v479
  %2903 = vmatprep.subr.bf16.mxu0 %v484
  %2904 = vmatpush1.bf16.msra.mxu0 %v483
  %2905 = vmatprep.subr.bf16.mxu0 %v488
  %2906 = vmatpush1.bf16.msra.mxu0 %v487
  %2907 = vmatprep.subr.bf16.mxu0 %v492
  %2908 = vmatpush1.bf16.msra.mxu0 %v491
  %2909 = vmatprep.subr.bf16.mxu0 0
  %2910 = vmatpush1.bf16.msra.mxu0 0
  %2911 = vmatprep.subr.bf16.mxu0 0
  %2912 = vmatpush1.bf16.msra.mxu0 0
  %2913 = vmatprep.subr.bf16.mxu0 0
  %2914 = vmatpush1.bf16.msra.mxu0 0
  %2915 = vmatprep.subr.bf16.mxu0 0
  %2916 = vmatpush1.bf16.msra.mxu0 0
  %2917 = vmatprep.subr.bf16.mxu0 0
  %2918 = vmatpush1.bf16.msra.mxu0 0
  %2919 = vmatprep.subr.bf16.mxu0 0
  %2920 = vmatpush1.bf16.msra.mxu0 0
  %2921 = vmatprep.subr.bf16.mxu0 0
  %2922 = vmatpush1.bf16.msra.mxu0 0
  %2923 = vmatprep.subr.bf16.mxu0 0
  %2924 = vmatpush1.bf16.msra.mxu0 0
  %2925 = vmatprep.mubr.bf16.mxu0 0
  %2926 = vmatmul.mubr.bf16.gmra.mrb[0].mxu0 %v2657
  %v2927 = vpop.f32.mrb[0].mxu0
  %v2928 = vadd.f32 0.0, %v2927
  %v2929 = vpop.f32.mrb[0].mxu0
  %v2930 = vadd.f32 0.0, %v2929
  %v2931 = vpop.f32.mrb[0].mxu0
  %v2932 = vpop.f32.mrb[0].mxu0
  %2933 = vdwg.mxu0
  %v2934 = vadd.f32 %v2848, %v2887
  %v2935 = vadd.f32 %v2849, %v2889
  %v2936 = vadd.f32 %v2850, %v2928
  %v2937 = vadd.f32 %v2851, %v2930
  %v2938 = vxor.u32 %v2934, 2147483648
  %v2939 = vxor.u32 %v2935, 2147483648
  %v2940 = vxor.u32 %v2936, 2147483648
  %v2941 = vmul.f32 %v2938, 1.442695
  %v2942 = vpow.pop %v2941
  %v2943 = vmul.f32 %v2939, 1.442695
  %v2944 = vpow.pop %v2943
  %v2945 = vmul.f32 %v2940, 1.442695
  %v2946 = vpow.pop %v2945
  %v2947 = vadd.f32 %v2942, 1.0
  %v2948 = vadd.f32 %v2944, 1.0
  %v2949 = vadd.f32 %v2946, 1.0
  %v2950 = vrcp.pop %v2947
  %v2951 = vmul.f32 1.0, %v2950
  %v2952 = vrcp.pop %v2948
  %v2953 = vmul.f32 1.0, %v2952
  %v2954 = vrcp.pop %v2949
  %v2955 = vmul.f32 1.0, %v2954
  %v2956 = vtanh.pop %v2937
  %v2957 = vmul.f32 %v2953, %v2654
  %v2958 = vmul.f32 %v2951, %v2956
  %v2959 = vadd.f32 %v2957, %v2958
  %v2960 = vtanh.pop %v2959
  %v2961 = vmul.f32 %v2955, %v2960
  %v2962 = vpack.c.bf16 %v2961, %v2961
  %2963 = vmatprep.subr.bf16.mxu0 %v765
  %2964 = vmatpush1.bf16.msra.mxu0 %v764
  %2965 = vmatprep.subr.bf16.mxu0 %v769
  %2966 = vmatpush1.bf16.msra.mxu0 %v768
  %2967 = vmatprep.subr.bf16.mxu0 %v773
  %2968 = vmatpush1.bf16.msra.mxu0 %v772
  %2969 = vmatprep.subr.bf16.mxu0 %v777
  %2970 = vmatpush1.bf16.msra.mxu0 %v776
  %2971 = vmatprep.subr.bf16.mxu0 %v781
  %2972 = vmatpush1.bf16.msra.mxu0 %v780
  %2973 = vmatprep.subr.bf16.mxu0 %v785
  %2974 = vmatpush1.bf16.msra.mxu0 %v784
  %2975 = vmatprep.subr.bf16.mxu0 %v789
  %2976 = vmatpush1.bf16.msra.mxu0 %v788
  %2977 = vmatprep.subr.bf16.mxu0 %v793
  %2978 = vmatpush1.bf16.msra.mxu0 %v792
  %2979 = vmatprep.subr.bf16.mxu0 0
  %2980 = vmatpush1.bf16.msra.mxu0 0
  %2981 = vmatprep.subr.bf16.mxu0 0
  %2982 = vmatpush1.bf16.msra.mxu0 0
  %2983 = vmatprep.subr.bf16.mxu0 0
  %2984 = vmatpush1.bf16.msra.mxu0 0
  %2985 = vmatprep.subr.bf16.mxu0 0
  %2986 = vmatpush1.bf16.msra.mxu0 0
  %2987 = vmatprep.subr.bf16.mxu0 0
  %2988 = vmatpush1.bf16.msra.mxu0 0
  %2989 = vmatprep.subr.bf16.mxu0 0
  %2990 = vmatpush1.bf16.msra.mxu0 0
  %2991 = vmatprep.subr.bf16.mxu0 0
  %2992 = vmatpush1.bf16.msra.mxu0 0
  %2993 = vmatprep.subr.bf16.mxu0 0
  %2994 = vmatpush1.bf16.msra.mxu0 0
  %2995 = vmatprep.mubr.bf16.mxu0 0
  %2996 = vmatmul.mubr.bf16.gmra.mrb[0].mxu0 %v2962
  %v2997 = vpop.f32.mrb[0].mxu0
  %v2998 = vadd.f32 %v2800, %v2997
  %v2999 = vpop.f32.mrb[0].mxu0
  %v3000 = vadd.f32 %v2802, %v2999
  %v3001 = vpop.f32.mrb[0].mxu0
  %v3002 = vpop.f32.mrb[0].mxu0
  %3003 = vdwg.mxu0
  %3004 = vmatprep.subr.bf16.mxu0 %v767
  %3005 = vmatpush1.bf16.msra.mxu0 %v766
  %3006 = vmatprep.subr.bf16.mxu0 %v771
  %3007 = vmatpush1.bf16.msra.mxu0 %v770
  %3008 = vmatprep.subr.bf16.mxu0 %v775
  %3009 = vmatpush1.bf16.msra.mxu0 %v774
  %3010 = vmatprep.subr.bf16.mxu0 %v779
  %3011 = vmatpush1.bf16.msra.mxu0 %v778
  %3012 = vmatprep.subr.bf16.mxu0 %v783
  %3013 = vmatpush1.bf16.msra.mxu0 %v782
  %3014 = vmatprep.subr.bf16.mxu0 %v787
  %3015 = vmatpush1.bf16.msra.mxu0 %v786
  %3016 = vmatprep.subr.bf16.mxu0 %v791
  %3017 = vmatpush1.bf16.msra.mxu0 %v790
  %3018 = vmatprep.subr.bf16.mxu0 %v795
  %3019 = vmatpush1.bf16.msra.mxu0 %v794
  %3020 = vmatprep.subr.bf16.mxu0 0
  %3021 = vmatpush1.bf16.msra.mxu0 0
  %3022 = vmatprep.subr.bf16.mxu0 0
  %3023 = vmatpush1.bf16.msra.mxu0 0
  %3024 = vmatprep.subr.bf16.mxu0 0
  %3025 = vmatpush1.bf16.msra.mxu0 0
  %3026 = vmatprep.subr.bf16.mxu0 0
  %3027 = vmatpush1.bf16.msra.mxu0 0
  %3028 = vmatprep.subr.bf16.mxu0 0
  %3029 = vmatpush1.bf16.msra.mxu0 0
  %3030 = vmatprep.subr.bf16.mxu0 0
  %3031 = vmatpush1.bf16.msra.mxu0 0
  %3032 = vmatprep.subr.bf16.mxu0 0
  %3033 = vmatpush1.bf16.msra.mxu0 0
  %3034 = vmatprep.subr.bf16.mxu0 0
  %3035 = vmatpush1.bf16.msra.mxu0 0
  %3036 = vmatprep.mubr.bf16.mxu0 0
  %3037 = vmatmul.mubr.bf16.gmra.mrb[0].mxu0 %v2962
  %v3038 = vpop.f32.mrb[0].mxu0
  %v3039 = vadd.f32 %v2841, %v3038
  %v3040 = vpop.f32.mrb[0].mxu0
  %v3041 = vadd.f32 %v2843, %v3040
  %v3042 = vpop.f32.mrb[0].mxu0
  %v3043 = vpop.f32.mrb[0].mxu0
  %3044 = vdwg.mxu0
  %v3045 = vxor.u32 %v2998, 2147483648
  %v3046 = vxor.u32 %v3000, 2147483648
  %v3047 = vxor.u32 %v3039, 2147483648
  %v3048 = vmul.f32 %v3045, 1.442695
  %v3049 = vpow.pop %v3048
  %v3050 = vmul.f32 %v3046, 1.442695
  %v3051 = vpow.pop %v3050
  %v3052 = vmul.f32 %v3047, 1.442695
  %v3053 = vpow.pop %v3052
  %v3054 = vadd.f32 %v3049, 1.0
  %v3055 = vadd.f32 %v3051, 1.0
  %v3056 = vadd.f32 %v3053, 1.0
  %v3057 = vrcp.pop %v3054
  %v3058 = vmul.f32 1.0, %v3057
  %v3059 = vrcp.pop %v3055
  %v3060 = vmul.f32 1.0, %v3059
  %v3061 = vrcp.pop %v3056
  %v3062 = vmul.f32 1.0, %v3061
  %v3063 = vtanh.pop %v3041
  %v3064 = vmul.f32 %v3060, %v2761
  %v3065 = vmul.f32 %v3058, %v3063
  %v3066 = vadd.f32 %v3064, %v3065
  %v3067 = vtanh.pop %v3066
  %v3068 = vmul.f32 %v3062, %v3067
  %v3069 = vlaneseq
  %v3070 = vand.u32 %v3069, 127
  %vm3071 = vcmp.lt.s32.totalorder %v3070, 64
  %v3072 = vsel %vm3071, 1, 0
  %v3073 = vcvt.s32.f32 %v3072
  %3074 = vadd.xlane.f32.xlu0 %v3068
  %v3075 = vpop.xlane.xlu0 %3074
  %v3076 = vmul.f32 %v3075, 0.015625
  %v3077 = vsub.f32 %v3068, %v3076
  %v3078 = vmul.f32 %v3077, %v3073
  %v3079 = vmul.f32 %v3078, %v3078
  %3080 = vadd.xlane.f32.xlu0 %v3079
  %v3081 = vpop.xlane.xlu0 %3080
  %v3082 = vmul.f32 %v3081, 0.015625
  %v3083 = vadd.f32 %v3082, 1e-05
  %v3084 = vrsqrt.pop %v3083
  %v3085 = vmul.f32 %v3078, %v3084
  %v3086 = vld [vmem:[%s5] sm:$0x1]
  %v3088 = vlaneseq
  %v3089 = vshrl.u32 %v3088, 7
  %v3090 = vsub.s32 0, %v3089
  %v3091 = vrot.slane %v3086, %v3090
  %v3093 = vmul.f32 %v3085, %v3091
  %v3094 = vld [vmem:[%s6] sm:$0x1]
  %v3096 = vlaneseq
  %v3097 = vshrl.u32 %v3096, 7
  %v3098 = vsub.s32 0, %v3097
  %v3099 = vrot.slane %v3094, %v3098
  %v3101 = vadd.f32 %v3093, %v3099
  %v3102 = vmax.f32 %v3101, 0.0
  %v3103 = vld [vmem:[%s7] sm:$0xff]
  %v3104 = vld [vmem:[%s7 + $0x8] sm:$0xff]
  %v3105 = vld [vmem:[%s7 + $0x10] sm:$0xff]
  %v3106 = vld [vmem:[%s7 + $0x18] sm:$0xff]
  %v3107 = vld [vmem:[%s7 + $0x20] sm:$0xff]
  %v3108 = vld [vmem:[%s7 + $0x28] sm:$0xff]
  %v3109 = vld [vmem:[%s7 + $0x30] sm:$0xff]
  %v3110 = vld [vmem:[%s7 + $0x38] sm:$0xff]
  %v3111 = vld [vmem:[%s7 + $0x40] sm:$0xff]
  %v3112 = vld [vmem:[%s7 + $0x48] sm:$0xff]
  %v3113 = vld [vmem:[%s7 + $0x50] sm:$0xff]
  %v3114 = vld [vmem:[%s7 + $0x58] sm:$0xff]
  %v3115 = vld [vmem:[%s7 + $0x60] sm:$0xff]
  %v3116 = vld [vmem:[%s7 + $0x68] sm:$0xff]
  %v3117 = vld [vmem:[%s7 + $0x70] sm:$0xff]
  %v3118 = vld [vmem:[%s7 + $0x78] sm:$0xff]
  %v3119 = vld [vmem:[%s8] sm:$0x1]
  %v3121 = vlaneseq
  %v3122 = vshrl.u32 %v3121, 7
  %v3123 = vsub.s32 0, %v3122
  %v3124 = vrot.slane %v3119, %v3123
  %3126 = vmatprep.subr.mxu0 0.0
  %3127 = vmatpush1.msra.mxu0 %v3103
  %3128 = vmatprep.subr.mxu0 0.0
  %3129 = vmatpush1.msra.mxu0 %v3104
  %3130 = vmatprep.subr.mxu0 0.0
  %3131 = vmatpush1.msra.mxu0 %v3105
  %3132 = vmatprep.subr.mxu0 0.0
  %3133 = vmatpush1.msra.mxu0 %v3106
  %3134 = vmatprep.subr.mxu0 0.0
  %3135 = vmatpush1.msra.mxu0 %v3107
  %3136 = vmatprep.subr.mxu0 0.0
  %3137 = vmatpush1.msra.mxu0 %v3108
  %3138 = vmatprep.subr.mxu0 0.0
  %3139 = vmatpush1.msra.mxu0 %v3109
  %3140 = vmatprep.subr.mxu0 0.0
  %3141 = vmatpush1.msra.mxu0 %v3110
  %3142 = vmatprep.subr.mxu0 0.0
  %3143 = vmatpush1.msra.mxu0 %v3111
  %3144 = vmatprep.subr.mxu0 0.0
  %3145 = vmatpush1.msra.mxu0 %v3112
  %3146 = vmatprep.subr.mxu0 0.0
  %3147 = vmatpush1.msra.mxu0 %v3113
  %3148 = vmatprep.subr.mxu0 0.0
  %3149 = vmatpush1.msra.mxu0 %v3114
  %3150 = vmatprep.subr.mxu0 0.0
  %3151 = vmatpush1.msra.mxu0 %v3115
  %3152 = vmatprep.subr.mxu0 0.0
  %3153 = vmatpush1.msra.mxu0 %v3116
  %3154 = vmatprep.subr.mxu0 0.0
  %3155 = vmatpush1.msra.mxu0 %v3117
  %3156 = vmatprep.subr.mxu0 0.0
  %3157 = vmatpush1.msra.mxu0 %v3118
  %3158 = vmatprep.subr.mxu0 0.0
  %3159 = vmatpush1.msra.mxu0 0.0
  %3160 = vmatprep.subr.mxu0 0.0
  %3161 = vmatpush1.msra.mxu0 0.0
  %3162 = vmatprep.subr.mxu0 0.0
  %3163 = vmatpush1.msra.mxu0 0.0
  %3164 = vmatprep.subr.mxu0 0.0
  %3165 = vmatpush1.msra.mxu0 0.0
  %3166 = vmatprep.subr.mxu0 0.0
  %3167 = vmatpush1.msra.mxu0 0.0
  %3168 = vmatprep.subr.mxu0 0.0
  %3169 = vmatpush1.msra.mxu0 0.0
  %3170 = vmatprep.subr.mxu0 0.0
  %3171 = vmatpush1.msra.mxu0 0.0
  %3172 = vmatprep.subr.mxu0 0.0
  %3173 = vmatpush1.msra.mxu0 0.0
  %3174 = vmatprep.subr.mxu0 0.0
  %3175 = vmatpush1.msra.mxu0 0.0
  %3176 = vmatprep.subr.mxu0 0.0
  %3177 = vmatpush1.msra.mxu0 0.0
  %3178 = vmatprep.subr.mxu0 0.0
  %3179 = vmatpush1.msra.mxu0 0.0
  %3180 = vmatprep.subr.mxu0 0.0
  %3181 = vmatpush1.msra.mxu0 0.0
  %3182 = vmatprep.subr.mxu0 0.0
  %3183 = vmatpush1.msra.mxu0 0.0
  %3184 = vmatprep.subr.mxu0 0.0
  %3185 = vmatpush1.msra.mxu0 0.0
  %3186 = vmatprep.subr.mxu0 0.0
  %3187 = vmatpush1.msra.mxu0 0.0
  %3188 = vmatprep.subr.mxu0 0.0
  %3189 = vmatpush1.msra.mxu0 0.0
  %3190 = vmatprep.mubr.f32.mxu0 0.0
  %3191 = vmatmul.mubr.f32.gmra.mrb[0].mxu0 %v3102
  %v3192 = vpop.f32.mrb[0].mxu0
  %v3193 = vadd.f32 %v3124, %v3192
  %v3194 = vpop.f32.mrb[0].mxu0
  %3195 = vdwg.mxu0
  %3196 = vst [vmem:[%s9] sm:$0xff] %v3193
  // Predicated region
  $region38: #{eye_state_double_lstm_150.1} parent=0 // pred_check
    _
  $region39: #{eye_state_double_lstm_150.1} parent=0 // pred_check_branch
    %3198 = sbr.rel (0) target = $region41
  $region40: #{eye_state_double_lstm_150.1} parent=0 // pred_region
    _
  $region41: #{eye_state_double_lstm_150.1} parent=0 // pred_fallthru
    _
  // Predicated region
  $region42: #{eye_state_double_lstm_150.1} parent=0 // pred_check
    _
  $region43: #{eye_state_double_lstm_150.1} parent=0 // pred_check_branch
    %3200 = sbr.rel (0) target = $region45
  $region44: #{eye_state_double_lstm_150.1} parent=0 // pred_region
    _
  $region45: #{eye_state_double_lstm_150.1} parent=0 // pred_fallthru
    _

</llo_original>
